<compile_context>
chip_gen: v5e
topology: v5e:2x2
jax: 0.10.0
libtpu: 0.0.40
codegen_flags: <defaults>
</compile_context>

<pallas_src>
import functools
import math

import jax
import jax.numpy as jnp
from jax import lax
from jax.experimental import pallas as pl
from jax.experimental.pallas import tpu as pltpu


# Default tile sizes (conservative: fit every TPU generation's scoped VMEM).
TM = 256      # rows (tokens) per matmul tile
TN = 256      # output features per matmul tile
TK = 256      # contraction chunk per matmul tile
TF = 512      # d_ff chunk for the fused FFN kernel
TQ_ATTN = 128  # query tile for flash attention
TK_ATTN = 128  # key/value tile for flash attention

_LN_EPS = 1e-5


def _tile(dim, pref):
    """Largest usable tile: `pref` if it divides `dim`, else the full dim."""
    return pref if dim % pref == 0 else dim


# ----------------------------------------------------------------------------
# Kernels
# ----------------------------------------------------------------------------
def _matmul_bias_kernel(x_ref, w_ref, b_ref, o_ref, acc_ref, *, activation):
    """o = act(x @ W + b), tiled over (M, N, K); f32 accumulator scratch."""
    k = pl.program_id(2)

    @pl.when(k == 0)
    def _():
        acc_ref[...] = jnp.zeros(acc_ref.shape, jnp.float32)

    acc_ref[...] += jnp.dot(
        x_ref[...].astype(jnp.bfloat16), w_ref[...],
        preferred_element_type=jnp.float32)

    @pl.when(k == pl.num_programs(2) - 1)
    def _():
        y = acc_ref[...] + b_ref[...]
        if activation == "relu":
            y = jnp.maximum(y, 0.0)
        o_ref[...] = y.astype(o_ref.dtype)


def _matmul_residual_ln_kernel(x_ref, w_ref, b_ref, r_ref, g_ref, bt_ref,
                               o_ref, acc_ref):
    """o = LayerNorm(x @ W + b + residual); K tiled, N kept full for LN."""
    k = pl.program_id(1)

    @pl.when(k == 0)
    def _():
        acc_ref[...] = jnp.zeros(acc_ref.shape, jnp.float32)

    acc_ref[...] += jnp.dot(
        x_ref[...].astype(jnp.bfloat16), w_ref[...],
        preferred_element_type=jnp.float32)

    @pl.when(k == pl.num_programs(1) - 1)
    def _():
        y = acc_ref[...] + b_ref[...] + r_ref[...]
        mean = jnp.mean(y, axis=-1, keepdims=True)
        var = jnp.mean(jnp.square(y - mean), axis=-1, keepdims=True)
        norm = (y - mean) * lax.rsqrt(var + _LN_EPS)
        o_ref[...] = (norm * g_ref[...] + bt_ref[...]).astype(o_ref.dtype)


def _ffn_ln_kernel(x_ref, w1_ref, b1_ref, w2_ref, b2_ref, g_ref, bt_ref,
                   o_ref, acc_ref):
    """o = LayerNorm(x + relu(x @ W1 + b1) @ W2 + b2), d_ff chunked."""
    f = pl.program_id(1)

    @pl.when(f == 0)
    def _():
        acc_ref[...] = jnp.zeros(acc_ref.shape, jnp.float32)

    h = jnp.dot(x_ref[...].astype(jnp.bfloat16), w1_ref[...],
                preferred_element_type=jnp.float32) + b1_ref[...]
    h = jnp.maximum(h, 0.0)
    acc_ref[...] += jnp.dot(h.astype(jnp.bfloat16), w2_ref[...],
                            preferred_element_type=jnp.float32)

    @pl.when(f == pl.num_programs(1) - 1)
    def _():
        y = acc_ref[...] + b2_ref[...] + x_ref[...]      # x_ref is the residual
        mean = jnp.mean(y, axis=-1, keepdims=True)
        var = jnp.mean(jnp.square(y - mean), axis=-1, keepdims=True)
        norm = (y - mean) * lax.rsqrt(var + _LN_EPS)
        o_ref[...] = (norm * g_ref[...] + bt_ref[...]).astype(o_ref.dtype)


def _flash_mha_kernel(q_ref, k_ref, v_ref, o_ref, m_ref, l_ref, acc_ref, *,
                      num_heads, d_head, scale, causal, tq, tk):
    """Flash-attention over one (batch, q-tile, k-tile); all heads per step."""
    qi = pl.program_id(1)
    ki = pl.program_id(2)

    @pl.when(ki == 0)
    def _():
        m_ref[...] = jnp.full(m_ref.shape, -jnp.inf, jnp.float32)
        l_ref[...] = jnp.zeros(l_ref.shape, jnp.float32)
        acc_ref[...] = jnp.zeros(acc_ref.shape, jnp.float32)

    def _compute():
        for h in range(num_heads):
            hd = pl.ds(h * d_head, d_head)
            q = q_ref[0, :, hd] * scale                       # (tq, dh) f32
            k = k_ref[0, :, hd]
            v = v_ref[0, :, hd]
            s = lax.dot_general(
                q.astype(jnp.bfloat16), k.astype(jnp.bfloat16),
                (((1,), (1,)), ((), ())),
                preferred_element_type=jnp.float32)           # (tq, tk)
            if causal:
                row = qi * tq + lax.broadcasted_iota(jnp.int32, (tq, tk), 0)
                col = ki * tk + lax.broadcasted_iota(jnp.int32, (tq, tk), 1)
                s = jnp.where(col <= row, s, -1e30)
            m_prev = m_ref[h]                                 # (tq, 1)
            m_new = jnp.maximum(m_prev, jnp.max(s, axis=-1, keepdims=True))
            alpha = jnp.exp(m_prev - m_new)
            p = jnp.exp(s - m_new)
            l_ref[h] = alpha * l_ref[h] + jnp.sum(p, axis=-1, keepdims=True)
            pv = lax.dot_general(
                p.astype(jnp.bfloat16), v.astype(jnp.bfloat16),
                (((1,), (0,)), ((), ())),
                preferred_element_type=jnp.float32)           # (tq, dh)
            acc_ref[h] = alpha * acc_ref[h] + pv
            m_ref[h] = m_new

    if causal:
        # Skip k-tiles that lie entirely above the diagonal.
        pl.when(ki * tk <= qi * tq + (tq - 1))(_compute)
    else:
        _compute()

    @pl.when(ki == pl.num_programs(2) - 1)
    def _():
        for h in range(num_heads):
            inv_l = pl.reciprocal(l_ref[h], approx=True)
            o_ref[0, :, pl.ds(h * d_head, d_head)] = (
                acc_ref[h] * inv_l).astype(o_ref.dtype)


# ----------------------------------------------------------------------------
# pallas_call wrappers
# ----------------------------------------------------------------------------
def matmul_bias(x, w, b, activation=None, tm=TM, tn=TN, tk=TK):
    """x:[M,K] f32 @ w:[K,N] bf16 + b:[N] f32 -> [M,N] f32."""
    m, kdim = x.shape
    n = w.shape[1]
    tm, tn, tk = _tile(m, tm), _tile(n, tn), _tile(kdim, tk)
    grid = (m // tm, n // tn, kdim // tk)
    return pl.pallas_call(
        functools.partial(_matmul_bias_kernel, activation=activation),
        out_shape=jax.ShapeDtypeStruct((m, n), jnp.float32),
        grid=grid,
        in_specs=[
            pl.BlockSpec((tm, tk), lambda i, j, k: (i, k)),
            pl.BlockSpec((tk, tn), lambda i, j, k: (k, j)),
            pl.BlockSpec((1, tn), lambda i, j, k: (0, j)),
        ],
        out_specs=pl.BlockSpec((tm, tn), lambda i, j, k: (i, j)),
        scratch_shapes=[pltpu.VMEM((tm, tn), jnp.float32)],
        compiler_params=pltpu.CompilerParams(
            dimension_semantics=("parallel", "parallel", "arbitrary")),
    )(x, w, b.reshape(1, n))


def matmul_residual_ln(x, w, b, residual, gamma, beta, tm=TM, tk=TK):
    """LayerNorm(x @ w + b + residual); full output width per tile (for LN)."""
    m, kdim = x.shape
    n = w.shape[1]
    tm, tk = _tile(m, tm), _tile(kdim, tk)
    grid = (m // tm, kdim // tk)
    return pl.pallas_call(
        _matmul_residual_ln_kernel,
        out_shape=jax.ShapeDtypeStruct((m, n), jnp.float32),
        grid=grid,
        in_specs=[
            pl.BlockSpec((tm, tk), lambda i, k: (i, k)),
            pl.BlockSpec((tk, n), lambda i, k: (k, 0)),
            pl.BlockSpec((1, n), lambda i, k: (0, 0)),
            pl.BlockSpec((tm, n), lambda i, k: (i, 0)),
            pl.BlockSpec((1, n), lambda i, k: (0, 0)),
            pl.BlockSpec((1, n), lambda i, k: (0, 0)),
        ],
        out_specs=pl.BlockSpec((tm, n), lambda i, k: (i, 0)),
        scratch_shapes=[pltpu.VMEM((tm, n), jnp.float32)],
        compiler_params=pltpu.CompilerParams(
            dimension_semantics=("parallel", "arbitrary")),
    )(x, w, b.reshape(1, n), residual, gamma.reshape(1, n), beta.reshape(1, n))


def ffn_add_ln(x, w1, b1, w2, b2, gamma, beta, tm=TM, tf=TF):
    """LayerNorm(x + relu(x@w1+b1)@w2 + b2) without the [M,d_ff] HBM trip."""
    m, d = x.shape
    f = w1.shape[1]
    tm, tf = _tile(m, tm), _tile(f, tf)
    grid = (m // tm, f // tf)
    return pl.pallas_call(
        _ffn_ln_kernel,
        out_shape=jax.ShapeDtypeStruct((m, d), jnp.float32),
        grid=grid,
        in_specs=[
            pl.BlockSpec((tm, d), lambda i, fi: (i, 0)),    # x (also residual)
            pl.BlockSpec((d, tf), lambda i, fi: (0, fi)),   # w1
            pl.BlockSpec((1, tf), lambda i, fi: (0, fi)),   # b1
            pl.BlockSpec((tf, d), lambda i, fi: (fi, 0)),   # w2
            pl.BlockSpec((1, d), lambda i, fi: (0, 0)),     # b2
            pl.BlockSpec((1, d), lambda i, fi: (0, 0)),     # gamma
            pl.BlockSpec((1, d), lambda i, fi: (0, 0)),     # beta
        ],
        out_specs=pl.BlockSpec((tm, d), lambda i, fi: (i, 0)),
        scratch_shapes=[pltpu.VMEM((tm, d), jnp.float32)],
        compiler_params=pltpu.CompilerParams(
            dimension_semantics=("parallel", "arbitrary")),
    )(x, w1, b1.reshape(1, f), w2, b2.reshape(1, d),
      gamma.reshape(1, d), beta.reshape(1, d))


def flash_mha(q, k, v, *, num_heads, causal, tq=TQ_ATTN, tk=TK_ATTN):
    """q:[B,Sq,D], k/v:[B,Skv,D] -> [B,Sq,D]; online-softmax flash attention."""
    b, sq, d = q.shape
    skv = k.shape[1]
    dh = d // num_heads
    tq, tk = _tile(sq, tq), _tile(skv, tk)
    grid = (b, sq // tq, skv // tk)
    scale = 1.0 / math.sqrt(dh)
    kernel = functools.partial(
        _flash_mha_kernel, num_heads=num_heads, d_head=dh, scale=scale,
        causal=causal, tq=tq, tk=tk)
    q_spec = pl.BlockSpec((1, tq, d), lambda bi, qi, ki: (bi, qi, 0))
    kv_spec = pl.BlockSpec((1, tk, d), lambda bi, qi, ki: (bi, ki, 0))
    return pl.pallas_call(
        kernel,
        out_shape=jax.ShapeDtypeStruct((b, sq, d), jnp.float32),
        grid=grid,
        in_specs=[q_spec, kv_spec, kv_spec],
        out_specs=q_spec,
        scratch_shapes=[
            pltpu.VMEM((num_heads, tq, 1), jnp.float32),   # running max
            pltpu.VMEM((num_heads, tq, 1), jnp.float32),   # running denom
            pltpu.VMEM((num_heads, tq, dh), jnp.float32),  # output accumulator
        ],
        compiler_params=pltpu.CompilerParams(
            dimension_semantics=("parallel", "parallel", "arbitrary")),
    )(q, k, v)


# ----------------------------------------------------------------------------
# Transformer layers (glue in XLA, compute in Pallas)
# ----------------------------------------------------------------------------
def encoder_layer(p, x2d, batch, seq, num_heads):
    d = x2d.shape[-1]
    qkv = matmul_bias(x2d, p["attn"]["w_qkv"], p["attn"]["b_qkv"])
    q, k, v = jnp.split(qkv.reshape(batch, seq, 3 * d), 3, axis=-1)
    attn = flash_mha(q, k, v, num_heads=num_heads, causal=False)
    x2d = matmul_residual_ln(attn.reshape(batch * seq, d),
                             p["attn"]["wo"], p["attn"]["bo"],
                             x2d, p["ln1_g"], p["ln1_b"])
    x2d = ffn_add_ln(x2d, p["ffn"]["w1"], p["ffn"]["b1"],
                     p["ffn"]["w2"], p["ffn"]["b2"], p["ln2_g"], p["ln2_b"])
    return x2d


def decoder_layer(p, x2d, enc2d, batch, seq_dec, seq_enc, num_heads):
    d = x2d.shape[-1]
    # Causal self-attention.
    qkv = matmul_bias(x2d, p["self_attn"]["w_qkv"], p["self_attn"]["b_qkv"])
    q, k, v = jnp.split(qkv.reshape(batch, seq_dec, 3 * d), 3, axis=-1)
    sa = flash_mha(q, k, v, num_heads=num_heads, causal=True)
    x2d = matmul_residual_ln(sa.reshape(batch * seq_dec, d),
                             p["self_attn"]["wo"], p["self_attn"]["bo"],
                             x2d, p["ln1_g"], p["ln1_b"])
    # Cross-attention (supports seq_enc != seq_dec).
    qc = matmul_bias(x2d, p["cross_attn"]["wq"], p["cross_attn"]["bq"])
    kvc = matmul_bias(enc2d, p["cross_attn"]["w_kv"], p["cross_attn"]["b_kv"])
    kc, vc = jnp.split(kvc.reshape(batch, seq_enc, 2 * d), 2, axis=-1)
    ca = flash_mha(qc.reshape(batch, seq_dec, d), kc, vc,
                   num_heads=num_heads, causal=False)
    x2d = matmul_residual_ln(ca.reshape(batch * seq_dec, d),
                             p["cross_attn"]["wo"], p["cross_attn"]["bo"],
                             x2d, p["ln2_g"], p["ln2_b"])
    # Feed-forward.
    x2d = ffn_add_ln(x2d, p["ffn"]["w1"], p["ffn"]["b1"],
                     p["ffn"]["w2"], p["ffn"]["b2"], p["ln3_g"], p["ln3_b"])
    return x2d


def sinusoidal_positional_encoding(max_length, d_model):
    pos = jnp.arange(max_length, dtype=jnp.float32)[:, None]
    i = jnp.arange(d_model // 2, dtype=jnp.float32)[None, :]
    angle = pos / jnp.power(10000.0, (2.0 * i) / d_model)
    pe = jnp.zeros((max_length, d_model), dtype=jnp.float32)
    pe = pe.at[:, 0::2].set(jnp.sin(angle))
    pe = pe.at[:, 1::2].set(jnp.cos(angle))
    return pe[None, :, :]  # [1, S, D]


def transformer_forward(params, input_embedding, output_embedding,
                        num_layers, num_heads):
    b, s_enc, d = input_embedding.shape
    s_dec = output_embedding.shape[1]
    pe = params["pe"]

    # Positional encoding: plain broadcast add in XLA (cheaper than a kernel).
    src = (input_embedding + pe[:, :s_enc, :]).reshape(b * s_enc, d)
    tgt = (output_embedding + pe[:, :s_dec, :]).reshape(b * s_dec, d)

    enc = src
    for l in range(num_layers):
        enc = encoder_layer(params["encoder"][l], enc, b, s_enc, num_heads)

    dec = tgt
    for l in range(num_layers):
        dec = decoder_layer(params["decoder"][l], dec, enc,
                            b, s_dec, s_enc, num_heads)

    return dec.reshape(b, s_dec, d)


# ----------------------------------------------------------------------------
# Deterministic parameter initialization (weights bf16 for the MXU path)
# ----------------------------------------------------------------------------
def _w(key, din, dout):
    return (jax.random.normal(key, (din, dout), jnp.float32) * 0.02
            ).astype(jnp.bfloat16)


def _init_self_attn(key, d):
    k1, k2 = jax.random.split(key)
    return {
        "w_qkv": _w(k1, d, 3 * d), "b_qkv": jnp.zeros((3 * d,), jnp.float32),
        "wo": _w(k2, d, d), "bo": jnp.zeros((d,), jnp.float32),
    }


def _init_cross_attn(key, d):
    k1, k2, k3 = jax.random.split(key, 3)
    return {
        "wq": _w(k1, d, d), "bq": jnp.zeros((d,), jnp.float32),
        "w_kv": _w(k2, d, 2 * d), "b_kv": jnp.zeros((2 * d,), jnp.float32),
        "wo": _w(k3, d, d), "bo": jnp.zeros((d,), jnp.float32),
    }


def _init_ffn(key, d, d_ff):
    k1, k2 = jax.random.split(key)
    return {
        "w1": _w(k1, d, d_ff), "b1": jnp.zeros((d_ff,), jnp.float32),
        "w2": _w(k2, d_ff, d), "b2": jnp.zeros((d,), jnp.float32),
    }


def init_transformer_params(key, d_model, num_layers, d_ff, max_length):
    params = {"encoder": [], "decoder": [],
              "pe": sinusoidal_positional_encoding(max_length, d_model)}
    ones = jnp.ones((d_model,), jnp.float32)
    zeros = jnp.zeros((d_model,), jnp.float32)
    for _ in range(num_layers):
        key, k1, k2 = jax.random.split(key, 3)
        params["encoder"].append({
            "attn": _init_self_attn(k1, d_model),
            "ffn": _init_ffn(k2, d_model, d_ff),
            "ln1_g": ones, "ln1_b": zeros, "ln2_g": ones, "ln2_b": zeros,
        })
    for _ in range(num_layers):
        key, k1, k2, k3 = jax.random.split(key, 4)
        params["decoder"].append({
            "self_attn": _init_self_attn(k1, d_model),
            "cross_attn": _init_cross_attn(k2, d_model),
            "ffn": _init_ffn(k3, d_model, d_ff),
            "ln1_g": ones, "ln1_b": zeros,
            "ln2_g": ones, "ln2_b": zeros,
            "ln3_g": ones, "ln3_b": zeros,
        })
    return params


# ----------------------------------------------------------------------------
# Demo
# ----------------------------------------------------------------------------
if __name__ == "__main__":
    batch = 2
    max_length = 8
    d_model = 32
    num_layers = 2
    num_heads = 4
    d_ff = 64

    key = jax.random.PRNGKey(0)
    kp, ki, ko = jax.random.split(key, 3)

    params = init_transformer_params(kp, d_model, num_layers, d_ff, max_length)
    input_embedding = jax.random.normal(ki, (batch, max_length, d_model), jnp.float32)
    output_embedding = jax.random.normal(ko, (batch, max_length, d_model), jnp.float32)

    fwd = jax.jit(functools.partial(transformer_forward,
                                    num_layers=num_layers, num_heads=num_heads))
    out = fwd(params, input_embedding, output_embedding)
    out = jax.block_until_ready(out)

    assert out.shape == (batch, max_length, d_model)
    assert bool(jnp.all(jnp.isfinite(out)))
    print("KERNEL_OK")
</pallas_src>

<mosaic_0001>
module attributes {stable_mosaic.version = 11 : i64} {
  func.func @_matmul_bias_kernel(%arg0: i32, %arg1: i32, %arg2: i32, %arg3: memref<16x32xf32, #tpu.memory_space<vmem>>, %arg4: memref<32x96xbf16, #tpu.memory_space<vmem>>, %arg5: memref<1x96xf32, #tpu.memory_space<vmem>>, %arg6: memref<16x96xf32, #tpu.memory_space<vmem>>, %arg7: memref<16x96xf32, #tpu.memory_space<vmem>>) attributes {dimension_semantics = [#tpu.dimension_semantics<parallel>, #tpu.dimension_semantics<parallel>, #tpu.dimension_semantics<arbitrary>], iteration_bounds = array<i64: 1, 1, 1>, scalar_prefetch = 0 : i64, scratch_operands = 1 : i64, tpu.core_type = #tpu.core_type<tc>, window_params = [{transform_indices = @transform_0, window_bounds = array<i64: 16, 32>}, {transform_indices = @transform_1, window_bounds = array<i64: 32, 96>}, {transform_indices = @transform_2, window_bounds = array<i64: 1, 96>}, {transform_indices = @transform_3, window_bounds = array<i64: 16, 96>}]} {
    %c0_i32 = arith.constant 0 : i32
    %0 = arith.cmpi eq, %arg2, %c0_i32 : i32
    %1 = arith.extui %0 : i1 to i32
    %c0_i32_0 = arith.constant 0 : i32
    %2 = arith.cmpi ne, %1, %c0_i32_0 : i32
    scf.if %2 {
      %cst_10 = arith.constant 0.000000e+00 : f32
      %13 = vector.broadcast %cst_10 : f32 to vector<16x96xf32>
      %c0_11 = arith.constant 0 : index
      %c0_12 = arith.constant 0 : index
      %14 = vector.load %arg7[%c0_11, %c0_12] : memref<16x96xf32, #tpu.memory_space<vmem>>, vector<16x96xf32>
      tpu.vector_store %arg7[%c0_11, %c0_12], %13 {strides = array<i32>} : memref<16x96xf32, #tpu.memory_space<vmem>>, vector<16x96xf32>,
    } else {
    }
    %c0 = arith.constant 0 : index
    %c0_1 = arith.constant 0 : index
    %3 = vector.load %arg7[%c0, %c0_1] : memref<16x96xf32, #tpu.memory_space<vmem>>, vector<16x96xf32>
    %c0_2 = arith.constant 0 : index
    %c0_3 = arith.constant 0 : index
    %4 = vector.load %arg3[%c0_2, %c0_3] : memref<16x32xf32, #tpu.memory_space<vmem>>, vector<16x32xf32>
    %5 = arith.truncf %4 : vector<16x32xf32> to vector<16x32xbf16>
    %c0_4 = arith.constant 0 : index
    %c0_5 = arith.constant 0 : index
    %6 = vector.load %arg4[%c0_4, %c0_5] : memref<32x96xbf16, #tpu.memory_space<vmem>>, vector<32x96xbf16>
    %cst = arith.constant dense<0.000000e+00> : vector<16x96xf32>
    %7 = tpu.matmul %5, %6, %cst {dimension_numbers = #tpu.dot_dimension_numbers<[1], [0], [0], [1], [0, 0, 1, 1], [], []>} : vector<16x32xbf16>, vector<32x96xbf16>, vector<16x96xf32> -> vector<16x96xf32>
    %8 = arith.addf %3, %7 : vector<16x96xf32>
    %c0_6 = arith.constant 0 : index
    %c0_7 = arith.constant 0 : index
    %9 = vector.load %arg7[%c0_6, %c0_7] : memref<16x96xf32, #tpu.memory_space<vmem>>, vector<16x96xf32>
    tpu.vector_store %arg7[%c0_6, %c0_7], %8 {strides = array<i32>} : memref<16x96xf32, #tpu.memory_space<vmem>>, vector<16x96xf32>,
    %c0_i32_8 = arith.constant 0 : i32
    %10 = arith.cmpi eq, %arg2, %c0_i32_8 : i32
    %11 = arith.extui %10 : i1 to i32
    %c0_i32_9 = arith.constant 0 : i32
    %12 = arith.cmpi ne, %11, %c0_i32_9 : i32
    scf.if %12 {
      %c0_10 = arith.constant 0 : index
      %c0_11 = arith.constant 0 : index
      %13 = vector.load %arg7[%c0_10, %c0_11] : memref<16x96xf32, #tpu.memory_space<vmem>>, vector<16x96xf32>
      %c0_12 = arith.constant 0 : index
      %c0_13 = arith.constant 0 : index
      %14 = vector.load %arg5[%c0_12, %c0_13] : memref<1x96xf32, #tpu.memory_space<vmem>>, vector<1x96xf32>
      %15 = vector.broadcast %14 : vector<1x96xf32> to vector<16x96xf32>
      %16 = arith.addf %13, %15 : vector<16x96xf32>
      %c0_14 = arith.constant 0 : index
      %c0_15 = arith.constant 0 : index
      %17 = vector.load %arg6[%c0_14, %c0_15] : memref<16x96xf32, #tpu.memory_space<vmem>>, vector<16x96xf32>
      tpu.vector_store %arg6[%c0_14, %c0_15], %16 {strides = array<i32>} : memref<16x96xf32, #tpu.memory_space<vmem>>, vector<16x96xf32>,
    } else {
    }
    return
  }
  func.func @transform_0(%arg0: i32, %arg1: i32, %arg2: i32) -> (i32, i32) {
    %c0_i32 = arith.constant 0 : i32
    return %arg0, %arg2 : i32, i32
  }
  func.func @transform_1(%arg0: i32, %arg1: i32, %arg2: i32) -> (i32, i32) {
    %c0_i32 = arith.constant 0 : i32
    return %arg2, %arg1 : i32, i32
  }
  func.func @transform_2(%arg0: i32, %arg1: i32, %arg2: i32) -> (i32, i32) {
    %c0_i32 = arith.constant 0 : i32
    %c0_i32_0 = arith.constant 0 : i32
    return %c0_i32, %arg1 : i32, i32
  }
  func.func @transform_3(%arg0: i32, %arg1: i32, %arg2: i32) -> (i32, i32) {
    %c0_i32 = arith.constant 0 : i32
    return %arg0, %arg1 : i32, i32
  }
}

module attributes {stable_mosaic.version = 11 : i64} {
  func.func @_matmul_bias_kernel(%arg0: i32, %arg1: i32, %arg2: i32, %arg3: memref<16x32xf32, #tpu.memory_space<vmem>>, %arg4: memref<32x32xbf16, #tpu.memory_space<vmem>>, %arg5: memref<1x32xf32, #tpu.memory_space<vmem>>, %arg6: memref<16x32xf32, #tpu.memory_space<vmem>>, %arg7: memref<16x32xf32, #tpu.memory_space<vmem>>) attributes {dimension_semantics = [#tpu.dimension_semantics<parallel>, #tpu.dimension_semantics<parallel>, #tpu.dimension_semantics<arbitrary>], iteration_bounds = array<i64: 1, 1, 1>, scalar_prefetch = 0 : i64, scratch_operands = 1 : i64, tpu.core_type = #tpu.core_type<tc>, window_params = [{transform_indices = @transform_0, window_bounds = array<i64: 16, 32>}, {transform_indices = @transform_1, window_bounds = array<i64: 32, 32>}, {transform_indices = @transform_2, window_bounds = array<i64: 1, 32>}, {transform_indices = @transform_3, window_bounds = array<i64: 16, 32>}]} {
    %c0_i32 = arith.constant 0 : i32
    %0 = arith.cmpi eq, %arg2, %c0_i32 : i32
    %1 = arith.extui %0 : i1 to i32
    %c0_i32_0 = arith.constant 0 : i32
    %2 = arith.cmpi ne, %1, %c0_i32_0 : i32
    scf.if %2 {
      %cst_10 = arith.constant 0.000000e+00 : f32
      %13 = vector.broadcast %cst_10 : f32 to vector<16x32xf32>
      %c0_11 = arith.constant 0 : index
      %c0_12 = arith.constant 0 : index
      %14 = vector.load %arg7[%c0_11, %c0_12] : memref<16x32xf32, #tpu.memory_space<vmem>>, vector<16x32xf32>
      tpu.vector_store %arg7[%c0_11, %c0_12], %13 {strides = array<i32>} : memref<16x32xf32, #tpu.memory_space<vmem>>, vector<16x32xf32>,
    } else {
    }
    %c0 = arith.constant 0 : index
    %c0_1 = arith.constant 0 : index
    %3 = vector.load %arg7[%c0, %c0_1] : memref<16x32xf32, #tpu.memory_space<vmem>>, vector<16x32xf32>
    %c0_2 = arith.constant 0 : index
    %c0_3 = arith.constant 0 : index
    %4 = vector.load %arg3[%c0_2, %c0_3] : memref<16x32xf32, #tpu.memory_space<vmem>>, vector<16x32xf32>
    %5 = arith.truncf %4 : vector<16x32xf32> to vector<16x32xbf16>
    %c0_4 = arith.constant 0 : index
    %c0_5 = arith.constant 0 : index
    %6 = vector.load %arg4[%c0_4, %c0_5] : memref<32x32xbf16, #tpu.memory_space<vmem>>, vector<32x32xbf16>
    %cst = arith.constant dense<0.000000e+00> : vector<16x32xf32>
    %7 = tpu.matmul %5, %6, %cst {dimension_numbers = #tpu.dot_dimension_numbers<[1], [0], [0], [1], [0, 0, 1, 1], [], []>} : vector<16x32xbf16>, vector<32x32xbf16>, vector<16x32xf32> -> vector<16x32xf32>
    %8 = arith.addf %3, %7 : vector<16x32xf32>
    %c0_6 = arith.constant 0 : index
    %c0_7 = arith.constant 0 : index
    %9 = vector.load %arg7[%c0_6, %c0_7] : memref<16x32xf32, #tpu.memory_space<vmem>>, vector<16x32xf32>
    tpu.vector_store %arg7[%c0_6, %c0_7], %8 {strides = array<i32>} : memref<16x32xf32, #tpu.memory_space<vmem>>, vector<16x32xf32>,
    %c0_i32_8 = arith.constant 0 : i32
    %10 = arith.cmpi eq, %arg2, %c0_i32_8 : i32
    %11 = arith.extui %10 : i1 to i32
    %c0_i32_9 = arith.constant 0 : i32
    %12 = arith.cmpi ne, %11, %c0_i32_9 : i32
    scf.if %12 {
      %c0_10 = arith.constant 0 : index
      %c0_11 = arith.constant 0 : index
      %13 = vector.load %arg7[%c0_10, %c0_11] : memref<16x32xf32, #tpu.memory_space<vmem>>, vector<16x32xf32>
      %c0_12 = arith.constant 0 : index
      %c0_13 = arith.constant 0 : index
      %14 = vector.load %arg5[%c0_12, %c0_13] : memref<1x32xf32, #tpu.memory_space<vmem>>, vector<1x32xf32>
      %15 = vector.broadcast %14 : vector<1x32xf32> to vector<16x32xf32>
      %16 = arith.addf %13, %15 : vector<16x32xf32>
      %c0_14 = arith.constant 0 : index
      %c0_15 = arith.constant 0 : index
      %17 = vector.load %arg6[%c0_14, %c0_15] : memref<16x32xf32, #tpu.memory_space<vmem>>, vector<16x32xf32>
      tpu.vector_store %arg6[%c0_14, %c0_15], %16 {strides = array<i32>} : memref<16x32xf32, #tpu.memory_space<vmem>>, vector<16x32xf32>,
    } else {
    }
    return
  }
  func.func @transform_0(%arg0: i32, %arg1: i32, %arg2: i32) -> (i32, i32) {
    %c0_i32 = arith.constant 0 : i32
    return %arg0, %arg2 : i32, i32
  }
  func.func @transform_1(%arg0: i32, %arg1: i32, %arg2: i32) -> (i32, i32) {
    %c0_i32 = arith.constant 0 : i32
    return %arg2, %arg1 : i32, i32
  }
  func.func @transform_2(%arg0: i32, %arg1: i32, %arg2: i32) -> (i32, i32) {
    %c0_i32 = arith.constant 0 : i32
    %c0_i32_0 = arith.constant 0 : i32
    return %c0_i32, %arg1 : i32, i32
  }
  func.func @transform_3(%arg0: i32, %arg1: i32, %arg2: i32) -> (i32, i32) {
    %c0_i32 = arith.constant 0 : i32
    return %arg0, %arg1 : i32, i32
  }
}

module attributes {stable_mosaic.version = 11 : i64} {
  func.func @_flash_mha_kernel(%arg0: i32, %arg1: i32, %arg2: i32, %arg3: memref<1x8x32xf32, #tpu.memory_space<vmem>>, %arg4: memref<1x8x32xf32, #tpu.memory_space<vmem>>, %arg5: memref<1x8x32xf32, #tpu.memory_space<vmem>>, %arg6: memref<1x8x32xf32, #tpu.memory_space<vmem>>, %arg7: memref<4x8x1xf32, #tpu.memory_space<vmem>>, %arg8: memref<4x8x1xf32, #tpu.memory_space<vmem>>, %arg9: memref<4x8x8xf32, #tpu.memory_space<vmem>>) attributes {dimension_semantics = [#tpu.dimension_semantics<parallel>, #tpu.dimension_semantics<parallel>, #tpu.dimension_semantics<arbitrary>], iteration_bounds = array<i64: 2, 1, 1>, scalar_prefetch = 0 : i64, scratch_operands = 3 : i64, tpu.core_type = #tpu.core_type<tc>, window_params = [{transform_indices = @transform_0, window_bounds = array<i64: 1, 8, 32>}, {transform_indices = @transform_1, window_bounds = array<i64: 1, 8, 32>}, {transform_indices = @transform_2, window_bounds = array<i64: 1, 8, 32>}, {transform_indices = @transform_3, window_bounds = array<i64: 1, 8, 32>}]} {
    %c0_i32 = arith.constant 0 : i32
    %0 = arith.cmpi eq, %arg2, %c0_i32 : i32
    %1 = arith.extui %0 : i1 to i32
    %c0_i32_0 = arith.constant 0 : i32
    %2 = arith.cmpi ne, %1, %c0_i32_0 : i32
    scf.if %2 {
      %cst = arith.constant 0xFF800000 : f32
      %12 = vector.broadcast %cst : f32 to vector<4x8x1xf32>
      %c0 = arith.constant 0 : index
      %c0_5 = arith.constant 0 : index
      %c0_6 = arith.constant 0 : index
      %13 = vector.load %arg7[%c0, %c0_5, %c0_6] : memref<4x8x1xf32, #tpu.memory_space<vmem>>, vector<4x8x1xf32>
      tpu.vector_store %arg7[%c0, %c0_5, %c0_6], %12 {strides = array<i32>} : memref<4x8x1xf32, #tpu.memory_space<vmem>>, vector<4x8x1xf32>,
      %cst_7 = arith.constant 0.000000e+00 : f32
      %14 = vector.broadcast %cst_7 : f32 to vector<4x8x1xf32>
      %c0_8 = arith.constant 0 : index
      %c0_9 = arith.constant 0 : index
      %c0_10 = arith.constant 0 : index
      %15 = vector.load %arg8[%c0_8, %c0_9, %c0_10] : memref<4x8x1xf32, #tpu.memory_space<vmem>>, vector<4x8x1xf32>
      tpu.vector_store %arg8[%c0_8, %c0_9, %c0_10], %14 {strides = array<i32>} : memref<4x8x1xf32, #tpu.memory_space<vmem>>, vector<4x8x1xf32>,
      %cst_11 = arith.constant 0.000000e+00 : f32
      %16 = vector.broadcast %cst_11 : f32 to vector<4x8x8xf32>
      %c0_12 = arith.constant 0 : index
      %c0_13 = arith.constant 0 : index
      %c0_14 = arith.constant 0 : index
      %17 = vector.load %arg9[%c0_12, %c0_13, %c0_14] : memref<4x8x8xf32, #tpu.memory_space<vmem>>, vector<4x8x8xf32>
      tpu.vector_store %arg9[%c0_12, %c0_13, %c0_14], %16 {strides = array<i32>} : memref<4x8x8xf32, #tpu.memory_space<vmem>>, vector<4x8x8xf32>,
    } else {
    }
    %c8_i32 = arith.constant 8 : i32
    %3 = arith.muli %arg2, %c8_i32 : i32
    %c8_i32_1 = arith.constant 8 : i32
    %4 = arith.muli %arg1, %c8_i32_1 : i32
    %c7_i32 = arith.constant 7 : i32
    %5 = arith.addi %4, %c7_i32 : i32
    %6 = arith.cmpi sle, %3, %5 : i32
    %7 = arith.extui %6 : i1 to i32
    %c0_i32_2 = arith.constant 0 : i32
    %8 = arith.cmpi ne, %7, %c0_i32_2 : i32
    scf.if %8 {
      %c0 = arith.constant 0 : index
      %c0_5 = arith.constant 0 : index
      %c0_6 = arith.constant 0 : index
      %12 = vector.load %arg3[%c0, %c0_5, %c0_6] : memref<1x8x32xf32, #tpu.memory_space<vmem>>, vector<1x8x8xf32>
      %13 = vector.shape_cast %12 : vector<1x8x8xf32> to vector<8x8xf32>
      %cst = arith.constant 0.353553385 : f32
      %14 = vector.broadcast %cst : f32 to vector<8x8xf32>
      %15 = arith.mulf %13, %14 : vector<8x8xf32>
      %c0_7 = arith.constant 0 : index
      %c0_8 = arith.constant 0 : index
      %c0_9 = arith.constant 0 : index
      %16 = vector.load %arg4[%c0_7, %c0_8, %c0_9] : memref<1x8x32xf32, #tpu.memory_space<vmem>>, vector<1x8x8xf32>
      %17 = vector.shape_cast %16 : vector<1x8x8xf32> to vector<8x8xf32>
      %c0_10 = arith.constant 0 : index
      %c0_11 = arith.constant 0 : index
      %c0_12 = arith.constant 0 : index
      %18 = vector.load %arg5[%c0_10, %c0_11, %c0_12] : memref<1x8x32xf32, #tpu.memory_space<vmem>>, vector<1x8x8xf32>
      %19 = vector.shape_cast %18 : vector<1x8x8xf32> to vector<8x8xf32>
      %20 = arith.truncf %15 : vector<8x8xf32> to vector<8x8xbf16>
      %21 = arith.truncf %17 : vector<8x8xf32> to vector<8x8xbf16>
      %cst_13 = arith.constant dense<0.000000e+00> : vector<8x8xf32>
      %22 = tpu.matmul %20, %21, %cst_13 {dimension_numbers = #tpu.dot_dimension_numbers<[1], [1], [0], [0], [0, 0, 1, 0], [], []>} : vector<8x8xbf16>, vector<8x8xbf16>, vector<8x8xf32> -> vector<8x8xf32>
      %c8_i32_14 = arith.constant 8 : i32
      %23 = arith.muli %arg1, %c8_i32_14 : i32
      %24 = tpu.iota {dimensions = array<i32: 0>} : vector<8x8xi32>
      %25 = vector.broadcast %23 : i32 to vector<8x8xi32>
      %26 = arith.addi %25, %24 : vector<8x8xi32>
      %c8_i32_15 = arith.constant 8 : i32
      %27 = arith.muli %arg2, %c8_i32_15 : i32
      %28 = tpu.iota {dimensions = array<i32: 1>} : vector<8x8xi32>
      %29 = vector.broadcast %27 : i32 to vector<8x8xi32>
      %30 = arith.addi %29, %28 : vector<8x8xi32>
      %31 = arith.cmpi sle, %30, %26 : vector<8x8xi32>
      %cst_16 = arith.constant -1.000000e+30 : f32
      %32 = vector.broadcast %cst_16 : f32 to vector<8x8xf32>
      %33 = arith.select %31, %22, %32 : vector<8x8xi1>, vector<8x8xf32>
      %c0_17 = arith.constant 0 : index
      %c0_18 = arith.constant 0 : index
      %c0_19 = arith.constant 0 : index
      %34 = vector.load %arg7[%c0_17, %c0_18, %c0_19] : memref<4x8x1xf32, #tpu.memory_space<vmem>>, vector<1x8x1xf32>
      %35 = vector.shape_cast %34 : vector<1x8x1xf32> to vector<8x1xf32>
      %cst_20 = arith.constant dense<0xFF800000> : vector<8xf32>
      %36 = vector.multi_reduction <maximumf>, %33, %cst_20 [1] : vector<8x8xf32> to vector<8xf32>
      %37 = vector.shape_cast %36 : vector<8xf32> to vector<8x1xf32>
      %38 = arith.maximumf %35, %37 : vector<8x1xf32>
      %39 = arith.subf %35, %38 : vector<8x1xf32>
      %40 = math.exp %39 : vector<8x1xf32>
      %41 = vector.broadcast %38 : vector<8x1xf32> to vector<8x8xf32>
      %42 = arith.subf %33, %41 : vector<8x8xf32>
      %43 = math.exp %42 : vector<8x8xf32>
      %c0_21 = arith.constant 0 : index
      %c0_22 = arith.constant 0 : index
      %c0_23 = arith.constant 0 : index
      %44 = vector.load %arg8[%c0_21, %c0_22, %c0_23] : memref<4x8x1xf32, #tpu.memory_space<vmem>>, vector<1x8x1xf32>
      %45 = vector.shape_cast %44 : vector<1x8x1xf32> to vector<8x1xf32>
      %46 = arith.mulf %40, %45 : vector<8x1xf32>
      %cst_24 = arith.constant dense<0.000000e+00> : vector<8xf32>
      %47 = vector.multi_reduction <add>, %43, %cst_24 [1] : vector<8x8xf32> to vector<8xf32>
      %48 = vector.shape_cast %47 : vector<8xf32> to vector<8x1xf32>
      %49 = arith.addf %46, %48 : vector<8x1xf32>
      %c0_25 = arith.constant 0 : index
      %c0_26 = arith.constant 0 : index
      %c0_27 = arith.constant 0 : index
      %50 = vector.load %arg8[%c0_25, %c0_26, %c0_27] : memref<4x8x1xf32, #tpu.memory_space<vmem>>, vector<1x8x1xf32>
      %51 = vector.shape_cast %50 : vector<1x8x1xf32> to vector<8x1xf32>
      %52 = vector.shape_cast %49 : vector<8x1xf32> to vector<1x8x1xf32>
      tpu.vector_store %arg8[%c0_25, %c0_26, %c0_27], %52 {strides = array<i32>} : memref<4x8x1xf32, #tpu.memory_space<vmem>>, vector<1x8x1xf32>,
      %53 = arith.truncf %43 : vector<8x8xf32> to vector<8x8xbf16>
      %54 = arith.truncf %19 : vector<8x8xf32> to vector<8x8xbf16>
      %cst_28 = arith.constant dense<0.000000e+00> : vector<8x8xf32>
      %55 = tpu.matmul %53, %54, %cst_28 {dimension_numbers = #tpu.dot_dimension_numbers<[1], [0], [0], [1], [0, 0, 1, 1], [], []>} : vector<8x8xbf16>, vector<8x8xbf16>, vector<8x8xf32> -> vector<8x8xf32>
      %c0_29 = arith.constant 0 : index
      %c0_30 = arith.constant 0 : index
      %c0_31 = arith.constant 0 : index
      %56 = vector.load %arg9[%c0_29, %c0_30, %c0_31] : memref<4x8x8xf32, #tpu.memory_space<vmem>>, vector<1x8x8xf32>
      %57 = vector.shape_cast %56 : vector<1x8x8xf32> to vector<8x8xf32>
      %58 = vector.broadcast %40 : vector<8x1xf32> to vector<8x8xf32>
      %59 = arith.mulf %58, %57 : vector<8x8xf32>
      %60 = arith.addf %59, %55 : vector<8x8xf32>
      %c0_32 = arith.constant 0 : index
      %c0_33 = arith.constant 0 : index
      %c0_34 = arith.constant 0 : index
      %61 = vector.load %arg9[%c0_32, %c0_33, %c0_34] : memref<4x8x8xf32, #tpu.memory_space<vmem>>, vector<1x8x8xf32>
      %62 = vector.shape_cast %61 : vector<1x8x8xf32> to vector<8x8xf32>
      %63 = vector.shape_cast %60 : vector<8x8xf32> to vector<1x8x8xf32>
      tpu.vector_store %arg9[%c0_32, %c0_33, %c0_34], %63 {strides = array<i32>} : memref<4x8x8xf32, #tpu.memory_space<vmem>>, vector<1x8x8xf32>,
      %c0_35 = arith.constant 0 : index
      %c0_36 = arith.constant 0 : index
      %c0_37 = arith.constant 0 : index
      %64 = vector.load %arg7[%c0_35, %c0_36, %c0_37] : memref<4x8x1xf32, #tpu.memory_space<vmem>>, vector<1x8x1xf32>
      %65 = vector.shape_cast %64 : vector<1x8x1xf32> to vector<8x1xf32>
      %66 = vector.shape_cast %38 : vector<8x1xf32> to vector<1x8x1xf32>
      tpu.vector_store %arg7[%c0_35, %c0_36, %c0_37], %66 {strides = array<i32>} : memref<4x8x1xf32, #tpu.memory_space<vmem>>, vector<1x8x1xf32>,
      %c0_38 = arith.constant 0 : index
      %c0_39 = arith.constant 0 : index
      %c8 = arith.constant 8 : index
      %67 = vector.load %arg3[%c0_38, %c0_39, %c8] : memref<1x8x32xf32, #tpu.memory_space<vmem>>, vector<1x8x8xf32>
      %68 = vector.shape_cast %67 : vector<1x8x8xf32> to vector<8x8xf32>
      %cst_40 = arith.constant 0.353553385 : f32
      %69 = vector.broadcast %cst_40 : f32 to vector<8x8xf32>
      %70 = arith.mulf %68, %69 : vector<8x8xf32>
      %c0_41 = arith.constant 0 : index
      %c0_42 = arith.constant 0 : index
      %c8_43 = arith.constant 8 : index
      %71 = vector.load %arg4[%c0_41, %c0_42, %c8_43] : memref<1x8x32xf32, #tpu.memory_space<vmem>>, vector<1x8x8xf32>
      %72 = vector.shape_cast %71 : vector<1x8x8xf32> to vector<8x8xf32>
      %c0_44 = arith.constant 0 : index
      %c0_45 = arith.constant 0 : index
      %c8_46 = arith.constant 8 : index
      %73 = vector.load %arg5[%c0_44, %c0_45, %c8_46] : memref<1x8x32xf32, #tpu.memory_space<vmem>>, vector<1x8x8xf32>
      %74 = vector.shape_cast %73 : vector<1x8x8xf32> to vector<8x8xf32>
      %75 = arith.truncf %70 : vector<8x8xf32> to vector<8x8xbf16>
      %76 = arith.truncf %72 : vector<8x8xf32> to vector<8x8xbf16>
      %cst_47 = arith.constant dense<0.000000e+00> : vector<8x8xf32>
      %77 = tpu.matmul %75, %76, %cst_47 {dimension_numbers = #tpu.dot_dimension_numbers<[1], [1], [0], [0], [0, 0, 1, 0], [], []>} : vector<8x8xbf16>, vector<8x8xbf16>, vector<8x8xf32> -> vector<8x8xf32>
      %c8_i32_48 = arith.constant 8 : i32
      %78 = arith.muli %arg1, %c8_i32_48 : i32
      %79 = tpu.iota {dimensions = array<i32: 0>} : vector<8x8xi32>
      %80 = vector.broadcast %78 : i32 to vector<8x8xi32>
      %81 = arith.addi %80, %79 : vector<8x8xi32>
      %c8_i32_49 = arith.constant 8 : i32
      %82 = arith.muli %arg2, %c8_i32_49 : i32
      %83 = tpu.iota {dimensions = array<i32: 1>} : vector<8x8xi32>
      %84 = vector.broadcast %82 : i32 to vector<8x8xi32>
      %85 = arith.addi %84, %83 : vector<8x8xi32>
      %86 = arith.cmpi sle, %85, %81 : vector<8x8xi32>
      %cst_50 = arith.constant -1.000000e+30 : f32
      %87 = vector.broadcast %cst_50 : f32 to vector<8x8xf32>
      %88 = arith.select %86, %77, %87 : vector<8x8xi1>, vector<8x8xf32>
      %c1 = arith.constant 1 : index
      %c0_51 = arith.constant 0 : index
      %c0_52 = arith.constant 0 : index
      %89 = vector.load %arg7[%c1, %c0_51, %c0_52] : memref<4x8x1xf32, #tpu.memory_space<vmem>>, vector<1x8x1xf32>
      %90 = vector.shape_cast %89 : vector<1x8x1xf32> to vector<8x1xf32>
      %cst_53 = arith.constant dense<0xFF800000> : vector<8xf32>
      %91 = vector.multi_reduction <maximumf>, %88, %cst_53 [1] : vector<8x8xf32> to vector<8xf32>
      %92 = vector.shape_cast %91 : vector<8xf32> to vector<8x1xf32>
      %93 = arith.maximumf %90, %92 : vector<8x1xf32>
      %94 = arith.subf %90, %93 : vector<8x1xf32>
      %95 = math.exp %94 : vector<8x1xf32>
      %96 = vector.broadcast %93 : vector<8x1xf32> to vector<8x8xf32>
      %97 = arith.subf %88, %96 : vector<8x8xf32>
      %98 = math.exp %97 : vector<8x8xf32>
      %c1_54 = arith.constant 1 : index
      %c0_55 = arith.constant 0 : index
      %c0_56 = arith.constant 0 : index
      %99 = vector.load %arg8[%c1_54, %c0_55, %c0_56] : memref<4x8x1xf32, #tpu.memory_space<vmem>>, vector<1x8x1xf32>
      %100 = vector.shape_cast %99 : vector<1x8x1xf32> to vector<8x1xf32>
      %101 = arith.mulf %95, %100 : vector<8x1xf32>
      %cst_57 = arith.constant dense<0.000000e+00> : vector<8xf32>
      %102 = vector.multi_reduction <add>, %98, %cst_57 [1] : vector<8x8xf32> to vector<8xf32>
      %103 = vector.shape_cast %102 : vector<8xf32> to vector<8x1xf32>
      %104 = arith.addf %101, %103 : vector<8x1xf32>
      %c1_58 = arith.constant 1 : index
      %c0_59 = arith.constant 0 : index
      %c0_60 = arith.constant 0 : index
      %105 = vector.load %arg8[%c1_58, %c0_59, %c0_60] : memref<4x8x1xf32, #tpu.memory_space<vmem>>, vector<1x8x1xf32>
      %106 = vector.shape_cast %105 : vector<1x8x1xf32> to vector<8x1xf32>
      %107 = vector.shape_cast %104 : vector<8x1xf32> to vector<1x8x1xf32>
      tpu.vector_store %arg8[%c1_58, %c0_59, %c0_60], %107 {strides = array<i32>} : memref<4x8x1xf32, #tpu.memory_space<vmem>>, vector<1x8x1xf32>,
      %108 = arith.truncf %98 : vector<8x8xf32> to vector<8x8xbf16>
      %109 = arith.truncf %74 : vector<8x8xf32> to vector<8x8xbf16>
      %cst_61 = arith.constant dense<0.000000e+00> : vector<8x8xf32>
      %110 = tpu.matmul %108, %109, %cst_61 {dimension_numbers = #tpu.dot_dimension_numbers<[1], [0], [0], [1], [0, 0, 1, 1], [], []>} : vector<8x8xbf16>, vector<8x8xbf16>, vector<8x8xf32> -> vector<8x8xf32>
      %c1_62 = arith.constant 1 : index
      %c0_63 = arith.constant 0 : index
      %c0_64 = arith.constant 0 : index
      %111 = vector.load %arg9[%c1_62, %c0_63, %c0_64] : memref<4x8x8xf32, #tpu.memory_space<vmem>>, vector<1x8x8xf32>
      %112 = vector.shape_cast %111 : vector<1x8x8xf32> to vector<8x8xf32>
      %113 = vector.broadcast %95 : vector<8x1xf32> to vector<8x8xf32>
      %114 = arith.mulf %113, %112 : vector<8x8xf32>
      %115 = arith.addf %114, %110 : vector<8x8xf32>
      %c1_65 = arith.constant 1 : index
      %c0_66 = arith.constant 0 : index
      %c0_67 = arith.constant 0 : index
      %116 = vector.load %arg9[%c1_65, %c0_66, %c0_67] : memref<4x8x8xf32, #tpu.memory_space<vmem>>, vector<1x8x8xf32>
      %117 = vector.shape_cast %116 : vector<1x8x8xf32> to vector<8x8xf32>
      %118 = vector.shape_cast %115 : vector<8x8xf32> to vector<1x8x8xf32>
      tpu.vector_store %arg9[%c1_65, %c0_66, %c0_67], %118 {strides = array<i32>} : memref<4x8x8xf32, #tpu.memory_space<vmem>>, vector<1x8x8xf32>,
      %c1_68 = arith.constant 1 : index
      %c0_69 = arith.constant 0 : index
      %c0_70 = arith.constant 0 : index
      %119 = vector.load %arg7[%c1_68, %c0_69, %c0_70] : memref<4x8x1xf32, #tpu.memory_space<vmem>>, vector<1x8x1xf32>
      %120 = vector.shape_cast %119 : vector<1x8x1xf32> to vector<8x1xf32>
      %121 = vector.shape_cast %93 : vector<8x1xf32> to vector<1x8x1xf32>
      tpu.vector_store %arg7[%c1_68, %c0_69, %c0_70], %121 {strides = array<i32>} : memref<4x8x1xf32, #tpu.memory_space<vmem>>, vector<1x8x1xf32>,
      %c0_71 = arith.constant 0 : index
      %c0_72 = arith.constant 0 : index
      %c16 = arith.constant 16 : index
      %122 = vector.load %arg3[%c0_71, %c0_72, %c16] : memref<1x8x32xf32, #tpu.memory_space<vmem>>, vector<1x8x8xf32>
      %123 = vector.shape_cast %122 : vector<1x8x8xf32> to vector<8x8xf32>
      %cst_73 = arith.constant 0.353553385 : f32
      %124 = vector.broadcast %cst_73 : f32 to vector<8x8xf32>
      %125 = arith.mulf %123, %124 : vector<8x8xf32>
      %c0_74 = arith.constant 0 : index
      %c0_75 = arith.constant 0 : index
      %c16_76 = arith.constant 16 : index
      %126 = vector.load %arg4[%c0_74, %c0_75, %c16_76] : memref<1x8x32xf32, #tpu.memory_space<vmem>>, vector<1x8x8xf32>
      %127 = vector.shape_cast %126 : vector<1x8x8xf32> to vector<8x8xf32>
      %c0_77 = arith.constant 0 : index
      %c0_78 = arith.constant 0 : index
      %c16_79 = arith.constant 16 : index
      %128 = vector.load %arg5[%c0_77, %c0_78, %c16_79] : memref<1x8x32xf32, #tpu.memory_space<vmem>>, vector<1x8x8xf32>
      %129 = vector.shape_cast %128 : vector<1x8x8xf32> to vector<8x8xf32>
      %130 = arith.truncf %125 : vector<8x8xf32> to vector<8x8xbf16>
      %131 = arith.truncf %127 : vector<8x8xf32> to vector<8x8xbf16>
      %cst_80 = arith.constant dense<0.000000e+00> : vector<8x8xf32>
      %132 = tpu.matmul %130, %131, %cst_80 {dimension_numbers = #tpu.dot_dimension_numbers<[1], [1], [0], [0], [0, 0, 1, 0], [], []>} : vector<8x8xbf16>, vector<8x8xbf16>, vector<8x8xf32> -> vector<8x8xf32>
      %c8_i32_81 = arith.constant 8 : i32
      %133 = arith.muli %arg1, %c8_i32_81 : i32
      %134 = tpu.iota {dimensions = array<i32: 0>} : vector<8x8xi32>
      %135 = vector.broadcast %133 : i32 to vector<8x8xi32>
      %136 = arith.addi %135, %134 : vector<8x8xi32>
      %c8_i32_82 = arith.constant 8 : i32
      %137 = arith.muli %arg2, %c8_i32_82 : i32
      %138 = tpu.iota {dimensions = array<i32: 1>} : vector<8x8xi32>
      %139 = vector.broadcast %137 : i32 to vector<8x8xi32>
      %140 = arith.addi %139, %138 : vector<8x8xi32>
      %141 = arith.cmpi sle, %140, %136 : vector<8x8xi32>
      %cst_83 = arith.constant -1.000000e+30 : f32
      %142 = vector.broadcast %cst_83 : f32 to vector<8x8xf32>
      %143 = arith.select %141, %132, %142 : vector<8x8xi1>, vector<8x8xf32>
      %c2 = arith.constant 2 : index
      %c0_84 = arith.constant 0 : index
      %c0_85 = arith.constant 0 : index
      %144 = vector.load %arg7[%c2, %c0_84, %c0_85] : memref<4x8x1xf32, #tpu.memory_space<vmem>>, vector<1x8x1xf32>
      %145 = vector.shape_cast %144 : vector<1x8x1xf32> to vector<8x1xf32>
      %cst_86 = arith.constant dense<0xFF800000> : vector<8xf32>
      %146 = vector.multi_reduction <maximumf>, %143, %cst_86 [1] : vector<8x8xf32> to vector<8xf32>
      %147 = vector.shape_cast %146 : vector<8xf32> to vector<8x1xf32>
      %148 = arith.maximumf %145, %147 : vector<8x1xf32>
      %149 = arith.subf %145, %148 : vector<8x1xf32>
      %150 = math.exp %149 : vector<8x1xf32>
      %151 = vector.broadcast %148 : vector<8x1xf32> to vector<8x8xf32>
      %152 = arith.subf %143, %151 : vector<8x8xf32>
      %153 = math.exp %152 : vector<8x8xf32>
      %c2_87 = arith.constant 2 : index
      %c0_88 = arith.constant 0 : index
      %c0_89 = arith.constant 0 : index
      %154 = vector.load %arg8[%c2_87, %c0_88, %c0_89] : memref<4x8x1xf32, #tpu.memory_space<vmem>>, vector<1x8x1xf32>
      %155 = vector.shape_cast %154 : vector<1x8x1xf32> to vector<8x1xf32>
      %156 = arith.mulf %150, %155 : vector<8x1xf32>
      %cst_90 = arith.constant dense<0.000000e+00> : vector<8xf32>
      %157 = vector.multi_reduction <add>, %153, %cst_90 [1] : vector<8x8xf32> to vector<8xf32>
      %158 = vector.shape_cast %157 : vector<8xf32> to vector<8x1xf32>
      %159 = arith.addf %156, %158 : vector<8x1xf32>
      %c2_91 = arith.constant 2 : index
      %c0_92 = arith.constant 0 : index
      %c0_93 = arith.constant 0 : index
      %160 = vector.load %arg8[%c2_91, %c0_92, %c0_93] : memref<4x8x1xf32, #tpu.memory_space<vmem>>, vector<1x8x1xf32>
      %161 = vector.shape_cast %160 : vector<1x8x1xf32> to vector<8x1xf32>
      %162 = vector.shape_cast %159 : vector<8x1xf32> to vector<1x8x1xf32>
      tpu.vector_store %arg8[%c2_91, %c0_92, %c0_93], %162 {strides = array<i32>} : memref<4x8x1xf32, #tpu.memory_space<vmem>>, vector<1x8x1xf32>,
      %163 = arith.truncf %153 : vector<8x8xf32> to vector<8x8xbf16>
      %164 = arith.truncf %129 : vector<8x8xf32> to vector<8x8xbf16>
      %cst_94 = arith.constant dense<0.000000e+00> : vector<8x8xf32>
      %165 = tpu.matmul %163, %164, %cst_94 {dimension_numbers = #tpu.dot_dimension_numbers<[1], [0], [0], [1], [0, 0, 1, 1], [], []>} : vector<8x8xbf16>, vector<8x8xbf16>, vector<8x8xf32> -> vector<8x8xf32>
      %c2_95 = arith.constant 2 : index
      %c0_96 = arith.constant 0 : index
      %c0_97 = arith.constant 0 : index
      %166 = vector.load %arg9[%c2_95, %c0_96, %c0_97] : memref<4x8x8xf32, #tpu.memory_space<vmem>>, vector<1x8x8xf32>
      %167 = vector.shape_cast %166 : vector<1x8x8xf32> to vector<8x8xf32>
      %168 = vector.broadcast %150 : vector<8x1xf32> to vector<8x8xf32>
      %169 = arith.mulf %168, %167 : vector<8x8xf32>
      %170 = arith.addf %169, %165 : vector<8x8xf32>
      %c2_98 = arith.constant 2 : index
      %c0_99 = arith.constant 0 : index
      %c0_100 = arith.constant 0 : index
      %171 = vector.load %arg9[%c2_98, %c0_99, %c0_100] : memref<4x8x8xf32, #tpu.memory_space<vmem>>, vector<1x8x8xf32>
      %172 = vector.shape_cast %171 : vector<1x8x8xf32> to vector<8x8xf32>
      %173 = vector.shape_cast %170 : vector<8x8xf32> to vector<1x8x8xf32>
      tpu.vector_store %arg9[%c2_98, %c0_99, %c0_100], %173 {strides = array<i32>} : memref<4x8x8xf32, #tpu.memory_space<vmem>>, vector<1x8x8xf32>,
      %c2_101 = arith.constant 2 : index
      %c0_102 = arith.constant 0 : index
      %c0_103 = arith.constant 0 : index
      %174 = vector.load %arg7[%c2_101, %c0_102, %c0_103] : memref<4x8x1xf32, #tpu.memory_space<vmem>>, vector<1x8x1xf32>
      %175 = vector.shape_cast %174 : vector<1x8x1xf32> to vector<8x1xf32>
      %176 = vector.shape_cast %148 : vector<8x1xf32> to vector<1x8x1xf32>
      tpu.vector_store %arg7[%c2_101, %c0_102, %c0_103], %176 {strides = array<i32>} : memref<4x8x1xf32, #tpu.memory_space<vmem>>, vector<1x8x1xf32>,
      %c0_104 = arith.constant 0 : index
      %c0_105 = arith.constant 0 : index
      %c24 = arith.constant 24 : index
      %177 = vector.load %arg3[%c0_104, %c0_105, %c24] : memref<1x8x32xf32, #tpu.memory_space<vmem>>, vector<1x8x8xf32>
      %178 = vector.shape_cast %177 : vector<1x8x8xf32> to vector<8x8xf32>
      %cst_106 = arith.constant 0.353553385 : f32
      %179 = vector.broadcast %cst_106 : f32 to vector<8x8xf32>
      %180 = arith.mulf %178, %179 : vector<8x8xf32>
      %c0_107 = arith.constant 0 : index
      %c0_108 = arith.constant 0 : index
      %c24_109 = arith.constant 24 : index
      %181 = vector.load %arg4[%c0_107, %c0_108, %c24_109] : memref<1x8x32xf32, #tpu.memory_space<vmem>>, vector<1x8x8xf32>
      %182 = vector.shape_cast %181 : vector<1x8x8xf32> to vector<8x8xf32>
      %c0_110 = arith.constant 0 : index
      %c0_111 = arith.constant 0 : index
      %c24_112 = arith.constant 24 : index
      %183 = vector.load %arg5[%c0_110, %c0_111, %c24_112] : memref<1x8x32xf32, #tpu.memory_space<vmem>>, vector<1x8x8xf32>
      %184 = vector.shape_cast %183 : vector<1x8x8xf32> to vector<8x8xf32>
      %185 = arith.truncf %180 : vector<8x8xf32> to vector<8x8xbf16>
      %186 = arith.truncf %182 : vector<8x8xf32> to vector<8x8xbf16>
      %cst_113 = arith.constant dense<0.000000e+00> : vector<8x8xf32>
      %187 = tpu.matmul %185, %186, %cst_113 {dimension_numbers = #tpu.dot_dimension_numbers<[1], [1], [0], [0], [0, 0, 1, 0], [], []>} : vector<8x8xbf16>, vector<8x8xbf16>, vector<8x8xf32> -> vector<8x8xf32>
      %c8_i32_114 = arith.constant 8 : i32
      %188 = arith.muli %arg1, %c8_i32_114 : i32
      %189 = tpu.iota {dimensions = array<i32: 0>} : vector<8x8xi32>
      %190 = vector.broadcast %188 : i32 to vector<8x8xi32>
      %191 = arith.addi %190, %189 : vector<8x8xi32>
      %c8_i32_115 = arith.constant 8 : i32
      %192 = arith.muli %arg2, %c8_i32_115 : i32
      %193 = tpu.iota {dimensions = array<i32: 1>} : vector<8x8xi32>
      %194 = vector.broadcast %192 : i32 to vector<8x8xi32>
      %195 = arith.addi %194, %193 : vector<8x8xi32>
      %196 = arith.cmpi sle, %195, %191 : vector<8x8xi32>
      %cst_116 = arith.constant -1.000000e+30 : f32
      %197 = vector.broadcast %cst_116 : f32 to vector<8x8xf32>
      %198 = arith.select %196, %187, %197 : vector<8x8xi1>, vector<8x8xf32>
      %c3 = arith.constant 3 : index
      %c0_117 = arith.constant 0 : index
      %c0_118 = arith.constant 0 : index
      %199 = vector.load %arg7[%c3, %c0_117, %c0_118] : memref<4x8x1xf32, #tpu.memory_space<vmem>>, vector<1x8x1xf32>
      %200 = vector.shape_cast %199 : vector<1x8x1xf32> to vector<8x1xf32>
      %cst_119 = arith.constant dense<0xFF800000> : vector<8xf32>
      %201 = vector.multi_reduction <maximumf>, %198, %cst_119 [1] : vector<8x8xf32> to vector<8xf32>
      %202 = vector.shape_cast %201 : vector<8xf32> to vector<8x1xf32>
      %203 = arith.maximumf %200, %202 : vector<8x1xf32>
      %204 = arith.subf %200, %203 : vector<8x1xf32>
      %205 = math.exp %204 : vector<8x1xf32>
      %206 = vector.broadcast %203 : vector<8x1xf32> to vector<8x8xf32>
      %207 = arith.subf %198, %206 : vector<8x8xf32>
      %208 = math.exp %207 : vector<8x8xf32>
      %c3_120 = arith.constant 3 : index
      %c0_121 = arith.constant 0 : index
      %c0_122 = arith.constant 0 : index
      %209 = vector.load %arg8[%c3_120, %c0_121, %c0_122] : memref<4x8x1xf32, #tpu.memory_space<vmem>>, vector<1x8x1xf32>
      %210 = vector.shape_cast %209 : vector<1x8x1xf32> to vector<8x1xf32>
      %211 = arith.mulf %205, %210 : vector<8x1xf32>
      %cst_123 = arith.constant dense<0.000000e+00> : vector<8xf32>
      %212 = vector.multi_reduction <add>, %208, %cst_123 [1] : vector<8x8xf32> to vector<8xf32>
      %213 = vector.shape_cast %212 : vector<8xf32> to vector<8x1xf32>
      %214 = arith.addf %211, %213 : vector<8x1xf32>
      %c3_124 = arith.constant 3 : index
      %c0_125 = arith.constant 0 : index
      %c0_126 = arith.constant 0 : index
      %215 = vector.load %arg8[%c3_124, %c0_125, %c0_126] : memref<4x8x1xf32, #tpu.memory_space<vmem>>, vector<1x8x1xf32>
      %216 = vector.shape_cast %215 : vector<1x8x1xf32> to vector<8x1xf32>
      %217 = vector.shape_cast %214 : vector<8x1xf32> to vector<1x8x1xf32>
      tpu.vector_store %arg8[%c3_124, %c0_125, %c0_126], %217 {strides = array<i32>} : memref<4x8x1xf32, #tpu.memory_space<vmem>>, vector<1x8x1xf32>,
      %218 = arith.truncf %208 : vector<8x8xf32> to vector<8x8xbf16>
      %219 = arith.truncf %184 : vector<8x8xf32> to vector<8x8xbf16>
      %cst_127 = arith.constant dense<0.000000e+00> : vector<8x8xf32>
      %220 = tpu.matmul %218, %219, %cst_127 {dimension_numbers = #tpu.dot_dimension_numbers<[1], [0], [0], [1], [0, 0, 1, 1], [], []>} : vector<8x8xbf16>, vector<8x8xbf16>, vector<8x8xf32> -> vector<8x8xf32>
      %c3_128 = arith.constant 3 : index
      %c0_129 = arith.constant 0 : index
      %c0_130 = arith.constant 0 : index
      %221 = vector.load %arg9[%c3_128, %c0_129, %c0_130] : memref<4x8x8xf32, #tpu.memory_space<vmem>>, vector<1x8x8xf32>
      %222 = vector.shape_cast %221 : vector<1x8x8xf32> to vector<8x8xf32>
      %223 = vector.broadcast %205 : vector<8x1xf32> to vector<8x8xf32>
      %224 = arith.mulf %223, %222 : vector<8x8xf32>
      %225 = arith.addf %224, %220 : vector<8x8xf32>
      %c3_131 = arith.constant 3 : index
      %c0_132 = arith.constant 0 : index
      %c0_133 = arith.constant 0 : index
      %226 = vector.load %arg9[%c3_131, %c0_132, %c0_133] : memref<4x8x8xf32, #tpu.memory_space<vmem>>, vector<1x8x8xf32>
      %227 = vector.shape_cast %226 : vector<1x8x8xf32> to vector<8x8xf32>
      %228 = vector.shape_cast %225 : vector<8x8xf32> to vector<1x8x8xf32>
      tpu.vector_store %arg9[%c3_131, %c0_132, %c0_133], %228 {strides = array<i32>} : memref<4x8x8xf32, #tpu.memory_space<vmem>>, vector<1x8x8xf32>,
      %c3_134 = arith.constant 3 : index
      %c0_135 = arith.constant 0 : index
      %c0_136 = arith.constant 0 : index
      %229 = vector.load %arg7[%c3_134, %c0_135, %c0_136] : memref<4x8x1xf32, #tpu.memory_space<vmem>>, vector<1x8x1xf32>
      %230 = vector.shape_cast %229 : vector<1x8x1xf32> to vector<8x1xf32>
      %231 = vector.shape_cast %203 : vector<8x1xf32> to vector<1x8x1xf32>
      tpu.vector_store %arg7[%c3_134, %c0_135, %c0_136], %231 {strides = array<i32>} : memref<4x8x1xf32, #tpu.memory_space<vmem>>, vector<1x8x1xf32>,
    } else {
    }
    %c0_i32_3 = arith.constant 0 : i32
    %9 = arith.cmpi eq, %arg2, %c0_i32_3 : i32
    %10 = arith.extui %9 : i1 to i32
    %c0_i32_4 = arith.constant 0 : i32
    %11 = arith.cmpi ne, %10, %c0_i32_4 : i32
    scf.if %11 {
      %c0 = arith.constant 0 : index
      %c0_5 = arith.constant 0 : index
      %c0_6 = arith.constant 0 : index
      %12 = vector.load %arg8[%c0, %c0_5, %c0_6] : memref<4x8x1xf32, #tpu.memory_space<vmem>>, vector<1x8x1xf32>
      %13 = vector.shape_cast %12 : vector<1x8x1xf32> to vector<8x1xf32>
      %14 = tpu.reciprocal %13 {approx = true} : vector<8x1xf32> -> vector<8x1xf32>
      %c0_7 = arith.constant 0 : index
      %c0_8 = arith.constant 0 : index
      %c0_9 = arith.constant 0 : index
      %15 = vector.load %arg9[%c0_7, %c0_8, %c0_9] : memref<4x8x8xf32, #tpu.memory_space<vmem>>, vector<1x8x8xf32>
      %16 = vector.shape_cast %15 : vector<1x8x8xf32> to vector<8x8xf32>
      %17 = vector.broadcast %14 : vector<8x1xf32> to vector<8x8xf32>
      %18 = arith.mulf %16, %17 : vector<8x8xf32>
      %c0_10 = arith.constant 0 : index
      %c0_11 = arith.constant 0 : index
      %c0_12 = arith.constant 0 : index
      %19 = vector.load %arg6[%c0_10, %c0_11, %c0_12] : memref<1x8x32xf32, #tpu.memory_space<vmem>>, vector<1x8x8xf32>
      %20 = vector.shape_cast %19 : vector<1x8x8xf32> to vector<8x8xf32>
      %21 = vector.shape_cast %18 : vector<8x8xf32> to vector<1x8x8xf32>
      tpu.vector_store %arg6[%c0_10, %c0_11, %c0_12], %21 {strides = array<i32>} : memref<1x8x32xf32, #tpu.memory_space<vmem>>, vector<1x8x8xf32>,
      %c1 = arith.constant 1 : index
      %c0_13 = arith.constant 0 : index
      %c0_14 = arith.constant 0 : index
      %22 = vector.load %arg8[%c1, %c0_13, %c0_14] : memref<4x8x1xf32, #tpu.memory_space<vmem>>, vector<1x8x1xf32>
      %23 = vector.shape_cast %22 : vector<1x8x1xf32> to vector<8x1xf32>
      %24 = tpu.reciprocal %23 {approx = true} : vector<8x1xf32> -> vector<8x1xf32>
      %c1_15 = arith.constant 1 : index
      %c0_16 = arith.constant 0 : index
      %c0_17 = arith.constant 0 : index
      %25 = vector.load %arg9[%c1_15, %c0_16, %c0_17] : memref<4x8x8xf32, #tpu.memory_space<vmem>>, vector<1x8x8xf32>
      %26 = vector.shape_cast %25 : vector<1x8x8xf32> to vector<8x8xf32>
      %27 = vector.broadcast %24 : vector<8x1xf32> to vector<8x8xf32>
      %28 = arith.mulf %26, %27 : vector<8x8xf32>
      %c0_18 = arith.constant 0 : index
      %c0_19 = arith.constant 0 : index
      %c8 = arith.constant 8 : index
      %29 = vector.load %arg6[%c0_18, %c0_19, %c8] : memref<1x8x32xf32, #tpu.memory_space<vmem>>, vector<1x8x8xf32>
      %30 = vector.shape_cast %29 : vector<1x8x8xf32> to vector<8x8xf32>
      %31 = vector.shape_cast %28 : vector<8x8xf32> to vector<1x8x8xf32>
      tpu.vector_store %arg6[%c0_18, %c0_19, %c8], %31 {strides = array<i32>} : memref<1x8x32xf32, #tpu.memory_space<vmem>>, vector<1x8x8xf32>,
      %c2 = arith.constant 2 : index
      %c0_20 = arith.constant 0 : index
      %c0_21 = arith.constant 0 : index
      %32 = vector.load %arg8[%c2, %c0_20, %c0_21] : memref<4x8x1xf32, #tpu.memory_space<vmem>>, vector<1x8x1xf32>
      %33 = vector.shape_cast %32 : vector<1x8x1xf32> to vector<8x1xf32>
      %34 = tpu.reciprocal %33 {approx = true} : vector<8x1xf32> -> vector<8x1xf32>
      %c2_22 = arith.constant 2 : index
      %c0_23 = arith.constant 0 : index
      %c0_24 = arith.constant 0 : index
      %35 = vector.load %arg9[%c2_22, %c0_23, %c0_24] : memref<4x8x8xf32, #tpu.memory_space<vmem>>, vector<1x8x8xf32>
      %36 = vector.shape_cast %35 : vector<1x8x8xf32> to vector<8x8xf32>
      %37 = vector.broadcast %34 : vector<8x1xf32> to vector<8x8xf32>
      %38 = arith.mulf %36, %37 : vector<8x8xf32>
      %c0_25 = arith.constant 0 : index
      %c0_26 = arith.constant 0 : index
      %c16 = arith.constant 16 : index
      %39 = vector.load %arg6[%c0_25, %c0_26, %c16] : memref<1x8x32xf32, #tpu.memory_space<vmem>>, vector<1x8x8xf32>
      %40 = vector.shape_cast %39 : vector<1x8x8xf32> to vector<8x8xf32>
      %41 = vector.shape_cast %38 : vector<8x8xf32> to vector<1x8x8xf32>
      tpu.vector_store %arg6[%c0_25, %c0_26, %c16], %41 {strides = array<i32>} : memref<1x8x32xf32, #tpu.memory_space<vmem>>, vector<1x8x8xf32>,
      %c3 = arith.constant 3 : index
      %c0_27 = arith.constant 0 : index
      %c0_28 = arith.constant 0 : index
      %42 = vector.load %arg8[%c3, %c0_27, %c0_28] : memref<4x8x1xf32, #tpu.memory_space<vmem>>, vector<1x8x1xf32>
      %43 = vector.shape_cast %42 : vector<1x8x1xf32> to vector<8x1xf32>
      %44 = tpu.reciprocal %43 {approx = true} : vector<8x1xf32> -> vector<8x1xf32>
      %c3_29 = arith.constant 3 : index
      %c0_30 = arith.constant 0 : index
      %c0_31 = arith.constant 0 : index
      %45 = vector.load %arg9[%c3_29, %c0_30, %c0_31] : memref<4x8x8xf32, #tpu.memory_space<vmem>>, vector<1x8x8xf32>
      %46 = vector.shape_cast %45 : vector<1x8x8xf32> to vector<8x8xf32>
      %47 = vector.broadcast %44 : vector<8x1xf32> to vector<8x8xf32>
      %48 = arith.mulf %46, %47 : vector<8x8xf32>
      %c0_32 = arith.constant 0 : index
      %c0_33 = arith.constant 0 : index
      %c24 = arith.constant 24 : index
      %49 = vector.load %arg6[%c0_32, %c0_33, %c24] : memref<1x8x32xf32, #tpu.memory_space<vmem>>, vector<1x8x8xf32>
      %50 = vector.shape_cast %49 : vector<1x8x8xf32> to vector<8x8xf32>
      %51 = vector.shape_cast %48 : vector<8x8xf32> to vector<1x8x8xf32>
      tpu.vector_store %arg6[%c0_32, %c0_33, %c24], %51 {strides = array<i32>} : memref<1x8x32xf32, #tpu.memory_space<vmem>>, vector<1x8x8xf32>,
    } else {
    }
    return
  }
  func.func @transform_0(%arg0: i32, %arg1: i32, %arg2: i32) -> (i32, i32, i32) {
    %c0_i32 = arith.constant 0 : i32
    %c0_i32_0 = arith.constant 0 : i32
    return %arg0, %arg1, %c0_i32 : i32, i32, i32
  }
  func.func @transform_1(%arg0: i32, %arg1: i32, %arg2: i32) -> (i32, i32, i32) {
    %c0_i32 = arith.constant 0 : i32
    %c0_i32_0 = arith.constant 0 : i32
    return %arg0, %arg2, %c0_i32 : i32, i32, i32
  }
  func.func @transform_2(%arg0: i32, %arg1: i32, %arg2: i32) -> (i32, i32, i32) {
    %c0_i32 = arith.constant 0 : i32
    %c0_i32_0 = arith.constant 0 : i32
    return %arg0, %arg2, %c0_i32 : i32, i32, i32
  }
  func.func @transform_3(%arg0: i32, %arg1: i32, %arg2: i32) -> (i32, i32, i32) {
    %c0_i32 = arith.constant 0 : i32
    %c0_i32_0 = arith.constant 0 : i32
    return %arg0, %arg1, %c0_i32 : i32, i32, i32
  }
}

module attributes {stable_mosaic.version = 11 : i64} {
  func.func @_matmul_residual_ln_kernel(%arg0: i32, %arg1: i32, %arg2: memref<16x32xf32, #tpu.memory_space<vmem>>, %arg3: memref<32x32xbf16, #tpu.memory_space<vmem>>, %arg4: memref<1x32xf32, #tpu.memory_space<vmem>>, %arg5: memref<16x32xf32, #tpu.memory_space<vmem>>, %arg6: memref<1x32xf32, #tpu.memory_space<vmem>>, %arg7: memref<1x32xf32, #tpu.memory_space<vmem>>, %arg8: memref<16x32xf32, #tpu.memory_space<vmem>>, %arg9: memref<16x32xf32, #tpu.memory_space<vmem>>) attributes {dimension_semantics = [#tpu.dimension_semantics<parallel>, #tpu.dimension_semantics<arbitrary>], iteration_bounds = array<i64: 1, 1>, scalar_prefetch = 0 : i64, scratch_operands = 1 : i64, tpu.core_type = #tpu.core_type<tc>, window_params = [{transform_indices = @transform_0, window_bounds = array<i64: 16, 32>}, {transform_indices = @transform_1, window_bounds = array<i64: 32, 32>}, {pipeline_mode = #tpu.pipeline_mode<synchronous>, transform_indices = @transform_2, window_bounds = array<i64: 1, 32>}, {transform_indices = @transform_3, window_bounds = array<i64: 16, 32>}, {pipeline_mode = #tpu.pipeline_mode<synchronous>, transform_indices = @transform_4, window_bounds = array<i64: 1, 32>}, {pipeline_mode = #tpu.pipeline_mode<synchronous>, transform_indices = @transform_5, window_bounds = array<i64: 1, 32>}, {transform_indices = @transform_6, window_bounds = array<i64: 16, 32>}]} {
    %c0_i32 = arith.constant 0 : i32
    %0 = arith.cmpi eq, %arg1, %c0_i32 : i32
    %1 = arith.extui %0 : i1 to i32
    %c0_i32_0 = arith.constant 0 : i32
    %2 = arith.cmpi ne, %1, %c0_i32_0 : i32
    scf.if %2 {
      %cst_10 = arith.constant 0.000000e+00 : f32
      %13 = vector.broadcast %cst_10 : f32 to vector<16x32xf32>
      %c0_11 = arith.constant 0 : index
      %c0_12 = arith.constant 0 : index
      %14 = vector.load %arg9[%c0_11, %c0_12] : memref<16x32xf32, #tpu.memory_space<vmem>>, vector<16x32xf32>
      tpu.vector_store %arg9[%c0_11, %c0_12], %13 {strides = array<i32>} : memref<16x32xf32, #tpu.memory_space<vmem>>, vector<16x32xf32>,
    } else {
    }
    %c0 = arith.constant 0 : index
    %c0_1 = arith.constant 0 : index
    %3 = vector.load %arg9[%c0, %c0_1] : memref<16x32xf32, #tpu.memory_space<vmem>>, vector<16x32xf32>
    %c0_2 = arith.constant 0 : index
    %c0_3 = arith.constant 0 : index
    %4 = vector.load %arg2[%c0_2, %c0_3] : memref<16x32xf32, #tpu.memory_space<vmem>>, vector<16x32xf32>
    %5 = arith.truncf %4 : vector<16x32xf32> to vector<16x32xbf16>
    %c0_4 = arith.constant 0 : index
    %c0_5 = arith.constant 0 : index
    %6 = vector.load %arg3[%c0_4, %c0_5] : memref<32x32xbf16, #tpu.memory_space<vmem>>, vector<32x32xbf16>
    %cst = arith.constant dense<0.000000e+00> : vector<16x32xf32>
    %7 = tpu.matmul %5, %6, %cst {dimension_numbers = #tpu.dot_dimension_numbers<[1], [0], [0], [1], [0, 0, 1, 1], [], []>} : vector<16x32xbf16>, vector<32x32xbf16>, vector<16x32xf32> -> vector<16x32xf32>
    %8 = arith.addf %3, %7 : vector<16x32xf32>
    %c0_6 = arith.constant 0 : index
    %c0_7 = arith.constant 0 : index
    %9 = vector.load %arg9[%c0_6, %c0_7] : memref<16x32xf32, #tpu.memory_space<vmem>>, vector<16x32xf32>
    tpu.vector_store %arg9[%c0_6, %c0_7], %8 {strides = array<i32>} : memref<16x32xf32, #tpu.memory_space<vmem>>, vector<16x32xf32>,
    %c0_i32_8 = arith.constant 0 : i32
    %10 = arith.cmpi eq, %arg1, %c0_i32_8 : i32
    %11 = arith.extui %10 : i1 to i32
    %c0_i32_9 = arith.constant 0 : i32
    %12 = arith.cmpi ne, %11, %c0_i32_9 : i32
    scf.if %12 {
      %c0_10 = arith.constant 0 : index
      %c0_11 = arith.constant 0 : index
      %13 = vector.load %arg9[%c0_10, %c0_11] : memref<16x32xf32, #tpu.memory_space<vmem>>, vector<16x32xf32>
      %c0_12 = arith.constant 0 : index
      %c0_13 = arith.constant 0 : index
      %14 = vector.load %arg4[%c0_12, %c0_13] : memref<1x32xf32, #tpu.memory_space<vmem>>, vector<1x32xf32>
      %15 = vector.broadcast %14 : vector<1x32xf32> to vector<16x32xf32>
      %16 = arith.addf %13, %15 : vector<16x32xf32>
      %c0_14 = arith.constant 0 : index
      %c0_15 = arith.constant 0 : index
      %17 = vector.load %arg5[%c0_14, %c0_15] : memref<16x32xf32, #tpu.memory_space<vmem>>, vector<16x32xf32>
      %18 = arith.addf %16, %17 : vector<16x32xf32>
      %cst_16 = arith.constant dense<0.000000e+00> : vector<16xf32>
      %19 = vector.multi_reduction <add>, %18, %cst_16 [1] : vector<16x32xf32> to vector<16xf32>
      %20 = vector.shape_cast %19 : vector<16xf32> to vector<16x1xf32>
      %cst_17 = arith.constant 3.200000e+01 : f32
      %21 = vector.broadcast %cst_17 : f32 to vector<16x1xf32>
      %22 = arith.divf %20, %21 : vector<16x1xf32>
      %23 = vector.broadcast %22 : vector<16x1xf32> to vector<16x32xf32>
      %24 = arith.subf %18, %23 : vector<16x32xf32>
      %25 = arith.mulf %24, %24 : vector<16x32xf32>
      %cst_18 = arith.constant dense<0.000000e+00> : vector<16xf32>
      %26 = vector.multi_reduction <add>, %25, %cst_18 [1] : vector<16x32xf32> to vector<16xf32>
      %27 = vector.shape_cast %26 : vector<16xf32> to vector<16x1xf32>
      %cst_19 = arith.constant 3.200000e+01 : f32
      %28 = vector.broadcast %cst_19 : f32 to vector<16x1xf32>
      %29 = arith.divf %27, %28 : vector<16x1xf32>
      %30 = vector.broadcast %22 : vector<16x1xf32> to vector<16x32xf32>
      %31 = arith.subf %18, %30 : vector<16x32xf32>
      %cst_20 = arith.constant 9.99999974E-6 : f32
      %32 = vector.broadcast %cst_20 : f32 to vector<16x1xf32>
      %33 = arith.addf %29, %32 : vector<16x1xf32>
      %34 = math.rsqrt %33 : vector<16x1xf32>
      %35 = vector.broadcast %34 : vector<16x1xf32> to vector<16x32xf32>
      %36 = arith.mulf %31, %35 : vector<16x32xf32>
      %c0_21 = arith.constant 0 : index
      %c0_22 = arith.constant 0 : index
      %37 = vector.load %arg6[%c0_21, %c0_22] : memref<1x32xf32, #tpu.memory_space<vmem>>, vector<1x32xf32>
      %38 = vector.broadcast %37 : vector<1x32xf32> to vector<16x32xf32>
      %39 = arith.mulf %36, %38 : vector<16x32xf32>
      %c0_23 = arith.constant 0 : index
      %c0_24 = arith.constant 0 : index
      %40 = vector.load %arg7[%c0_23, %c0_24] : memref<1x32xf32, #tpu.memory_space<vmem>>, vector<1x32xf32>
      %41 = vector.broadcast %40 : vector<1x32xf32> to vector<16x32xf32>
      %42 = arith.addf %39, %41 : vector<16x32xf32>
      %c0_25 = arith.constant 0 : index
      %c0_26 = arith.constant 0 : index
      %43 = vector.load %arg8[%c0_25, %c0_26] : memref<16x32xf32, #tpu.memory_space<vmem>>, vector<16x32xf32>
      tpu.vector_store %arg8[%c0_25, %c0_26], %42 {strides = array<i32>} : memref<16x32xf32, #tpu.memory_space<vmem>>, vector<16x32xf32>,
    } else {
    }
    return
  }
  func.func @transform_0(%arg0: i32, %arg1: i32) -> (i32, i32) {
    %c0_i32 = arith.constant 0 : i32
    return %arg0, %arg1 : i32, i32
  }
  func.func @transform_1(%arg0: i32, %arg1: i32) -> (i32, i32) {
    %c0_i32 = arith.constant 0 : i32
    %c0_i32_0 = arith.constant 0 : i32
    return %arg1, %c0_i32 : i32, i32
  }
  func.func @transform_2(%arg0: i32, %arg1: i32) -> (i32, i32) {
    %c0_i32 = arith.constant 0 : i32
    %c0_i32_0 = arith.constant 0 : i32
    %c0_i32_1 = arith.constant 0 : i32
    return %c0_i32, %c0_i32_0 : i32, i32
  }
  func.func @transform_3(%arg0: i32, %arg1: i32) -> (i32, i32) {
    %c0_i32 = arith.constant 0 : i32
    %c0_i32_0 = arith.constant 0 : i32
    return %arg0, %c0_i32 : i32, i32
  }
  func.func @transform_4(%arg0: i32, %arg1: i32) -> (i32, i32) {
    %c0_i32 = arith.constant 0 : i32
    %c0_i32_0 = arith.constant 0 : i32
    %c0_i32_1 = arith.constant 0 : i32
    return %c0_i32, %c0_i32_0 : i32, i32
  }
  func.func @transform_5(%arg0: i32, %arg1: i32) -> (i32, i32) {
    %c0_i32 = arith.constant 0 : i32
    %c0_i32_0 = arith.constant 0 : i32
    %c0_i32_1 = arith.constant 0 : i32
    return %c0_i32, %c0_i32_0 : i32, i32
  }
  func.func @transform_6(%arg0: i32, %arg1: i32) -> (i32, i32) {
    %c0_i32 = arith.constant 0 : i32
    %c0_i32_0 = arith.constant 0 : i32
    return %arg0, %c0_i32 : i32, i32
  }
}

module attributes {stable_mosaic.version = 11 : i64} {
  func.func @_matmul_bias_kernel(%arg0: i32, %arg1: i32, %arg2: i32, %arg3: memref<16x32xf32, #tpu.memory_space<vmem>>, %arg4: memref<32x64xbf16, #tpu.memory_space<vmem>>, %arg5: memref<1x64xf32, #tpu.memory_space<vmem>>, %arg6: memref<16x64xf32, #tpu.memory_space<vmem>>, %arg7: memref<16x64xf32, #tpu.memory_space<vmem>>) attributes {dimension_semantics = [#tpu.dimension_semantics<parallel>, #tpu.dimension_semantics<parallel>, #tpu.dimension_semantics<arbitrary>], iteration_bounds = array<i64: 1, 1, 1>, scalar_prefetch = 0 : i64, scratch_operands = 1 : i64, tpu.core_type = #tpu.core_type<tc>, window_params = [{transform_indices = @transform_0, window_bounds = array<i64: 16, 32>}, {transform_indices = @transform_1, window_bounds = array<i64: 32, 64>}, {transform_indices = @transform_2, window_bounds = array<i64: 1, 64>}, {transform_indices = @transform_3, window_bounds = array<i64: 16, 64>}]} {
    %c0_i32 = arith.constant 0 : i32
    %0 = arith.cmpi eq, %arg2, %c0_i32 : i32
    %1 = arith.extui %0 : i1 to i32
    %c0_i32_0 = arith.constant 0 : i32
    %2 = arith.cmpi ne, %1, %c0_i32_0 : i32
    scf.if %2 {
      %cst_10 = arith.constant 0.000000e+00 : f32
      %13 = vector.broadcast %cst_10 : f32 to vector<16x64xf32>
      %c0_11 = arith.constant 0 : index
      %c0_12 = arith.constant 0 : index
      %14 = vector.load %arg7[%c0_11, %c0_12] : memref<16x64xf32, #tpu.memory_space<vmem>>, vector<16x64xf32>
      tpu.vector_store %arg7[%c0_11, %c0_12], %13 {strides = array<i32>} : memref<16x64xf32, #tpu.memory_space<vmem>>, vector<16x64xf32>,
    } else {
    }
    %c0 = arith.constant 0 : index
    %c0_1 = arith.constant 0 : index
    %3 = vector.load %arg7[%c0, %c0_1] : memref<16x64xf32, #tpu.memory_space<vmem>>, vector<16x64xf32>
    %c0_2 = arith.constant 0 : index
    %c0_3 = arith.constant 0 : index
    %4 = vector.load %arg3[%c0_2, %c0_3] : memref<16x32xf32, #tpu.memory_space<vmem>>, vector<16x32xf32>
    %5 = arith.truncf %4 : vector<16x32xf32> to vector<16x32xbf16>
    %c0_4 = arith.constant 0 : index
    %c0_5 = arith.constant 0 : index
    %6 = vector.load %arg4[%c0_4, %c0_5] : memref<32x64xbf16, #tpu.memory_space<vmem>>, vector<32x64xbf16>
    %cst = arith.constant dense<0.000000e+00> : vector<16x64xf32>
    %7 = tpu.matmul %5, %6, %cst {dimension_numbers = #tpu.dot_dimension_numbers<[1], [0], [0], [1], [0, 0, 1, 1], [], []>} : vector<16x32xbf16>, vector<32x64xbf16>, vector<16x64xf32> -> vector<16x64xf32>
    %8 = arith.addf %3, %7 : vector<16x64xf32>
    %c0_6 = arith.constant 0 : index
    %c0_7 = arith.constant 0 : index
    %9 = vector.load %arg7[%c0_6, %c0_7] : memref<16x64xf32, #tpu.memory_space<vmem>>, vector<16x64xf32>
    tpu.vector_store %arg7[%c0_6, %c0_7], %8 {strides = array<i32>} : memref<16x64xf32, #tpu.memory_space<vmem>>, vector<16x64xf32>,
    %c0_i32_8 = arith.constant 0 : i32
    %10 = arith.cmpi eq, %arg2, %c0_i32_8 : i32
    %11 = arith.extui %10 : i1 to i32
    %c0_i32_9 = arith.constant 0 : i32
    %12 = arith.cmpi ne, %11, %c0_i32_9 : i32
    scf.if %12 {
      %c0_10 = arith.constant 0 : index
      %c0_11 = arith.constant 0 : index
      %13 = vector.load %arg7[%c0_10, %c0_11] : memref<16x64xf32, #tpu.memory_space<vmem>>, vector<16x64xf32>
      %c0_12 = arith.constant 0 : index
      %c0_13 = arith.constant 0 : index
      %14 = vector.load %arg5[%c0_12, %c0_13] : memref<1x64xf32, #tpu.memory_space<vmem>>, vector<1x64xf32>
      %15 = vector.broadcast %14 : vector<1x64xf32> to vector<16x64xf32>
      %16 = arith.addf %13, %15 : vector<16x64xf32>
      %c0_14 = arith.constant 0 : index
      %c0_15 = arith.constant 0 : index
      %17 = vector.load %arg6[%c0_14, %c0_15] : memref<16x64xf32, #tpu.memory_space<vmem>>, vector<16x64xf32>
      tpu.vector_store %arg6[%c0_14, %c0_15], %16 {strides = array<i32>} : memref<16x64xf32, #tpu.memory_space<vmem>>, vector<16x64xf32>,
    } else {
    }
    return
  }
  func.func @transform_0(%arg0: i32, %arg1: i32, %arg2: i32) -> (i32, i32) {
    %c0_i32 = arith.constant 0 : i32
    return %arg0, %arg2 : i32, i32
  }
  func.func @transform_1(%arg0: i32, %arg1: i32, %arg2: i32) -> (i32, i32) {
    %c0_i32 = arith.constant 0 : i32
    return %arg2, %arg1 : i32, i32
  }
  func.func @transform_2(%arg0: i32, %arg1: i32, %arg2: i32) -> (i32, i32) {
    %c0_i32 = arith.constant 0 : i32
    %c0_i32_0 = arith.constant 0 : i32
    return %c0_i32, %arg1 : i32, i32
  }
  func.func @transform_3(%arg0: i32, %arg1: i32, %arg2: i32) -> (i32, i32) {
    %c0_i32 = arith.constant 0 : i32
    return %arg0, %arg1 : i32, i32
  }
}

module attributes {stable_mosaic.version = 11 : i64} {
  func.func @_ffn_ln_kernel(%arg0: i32, %arg1: i32, %arg2: memref<16x32xf32, #tpu.memory_space<vmem>>, %arg3: memref<32x64xbf16, #tpu.memory_space<vmem>>, %arg4: memref<1x64xf32, #tpu.memory_space<vmem>>, %arg5: memref<64x32xbf16, #tpu.memory_space<vmem>>, %arg6: memref<1x32xf32, #tpu.memory_space<vmem>>, %arg7: memref<1x32xf32, #tpu.memory_space<vmem>>, %arg8: memref<1x32xf32, #tpu.memory_space<vmem>>, %arg9: memref<16x32xf32, #tpu.memory_space<vmem>>, %arg10: memref<16x32xf32, #tpu.memory_space<vmem>>) attributes {dimension_semantics = [#tpu.dimension_semantics<parallel>, #tpu.dimension_semantics<arbitrary>], iteration_bounds = array<i64: 1, 1>, scalar_prefetch = 0 : i64, scratch_operands = 1 : i64, tpu.core_type = #tpu.core_type<tc>, window_params = [{transform_indices = @transform_0, window_bounds = array<i64: 16, 32>}, {transform_indices = @transform_1, window_bounds = array<i64: 32, 64>}, {transform_indices = @transform_2, window_bounds = array<i64: 1, 64>}, {transform_indices = @transform_3, window_bounds = array<i64: 64, 32>}, {pipeline_mode = #tpu.pipeline_mode<synchronous>, transform_indices = @transform_4, window_bounds = array<i64: 1, 32>}, {pipeline_mode = #tpu.pipeline_mode<synchronous>, transform_indices = @transform_5, window_bounds = array<i64: 1, 32>}, {pipeline_mode = #tpu.pipeline_mode<synchronous>, transform_indices = @transform_6, window_bounds = array<i64: 1, 32>}, {transform_indices = @transform_7, window_bounds = array<i64: 16, 32>}]} {
    %c0_i32 = arith.constant 0 : i32
    %0 = arith.cmpi eq, %arg1, %c0_i32 : i32
    %1 = arith.extui %0 : i1 to i32
    %c0_i32_0 = arith.constant 0 : i32
    %2 = arith.cmpi ne, %1, %c0_i32_0 : i32
    scf.if %2 {
      %cst_16 = arith.constant 0.000000e+00 : f32
      %21 = vector.broadcast %cst_16 : f32 to vector<16x32xf32>
      %c0_17 = arith.constant 0 : index
      %c0_18 = arith.constant 0 : index
      %22 = vector.load %arg10[%c0_17, %c0_18] : memref<16x32xf32, #tpu.memory_space<vmem>>, vector<16x32xf32>
      tpu.vector_store %arg10[%c0_17, %c0_18], %21 {strides = array<i32>} : memref<16x32xf32, #tpu.memory_space<vmem>>, vector<16x32xf32>,
    } else {
    }
    %c0 = arith.constant 0 : index
    %c0_1 = arith.constant 0 : index
    %3 = vector.load %arg2[%c0, %c0_1] : memref<16x32xf32, #tpu.memory_space<vmem>>, vector<16x32xf32>
    %4 = arith.truncf %3 : vector<16x32xf32> to vector<16x32xbf16>
    %c0_2 = arith.constant 0 : index
    %c0_3 = arith.constant 0 : index
    %5 = vector.load %arg3[%c0_2, %c0_3] : memref<32x64xbf16, #tpu.memory_space<vmem>>, vector<32x64xbf16>
    %cst = arith.constant dense<0.000000e+00> : vector<16x64xf32>
    %6 = tpu.matmul %4, %5, %cst {dimension_numbers = #tpu.dot_dimension_numbers<[1], [0], [0], [1], [0, 0, 1, 1], [], []>} : vector<16x32xbf16>, vector<32x64xbf16>, vector<16x64xf32> -> vector<16x64xf32>
    %c0_4 = arith.constant 0 : index
    %c0_5 = arith.constant 0 : index
    %7 = vector.load %arg4[%c0_4, %c0_5] : memref<1x64xf32, #tpu.memory_space<vmem>>, vector<1x64xf32>
    %8 = vector.broadcast %7 : vector<1x64xf32> to vector<16x64xf32>
    %9 = arith.addf %6, %8 : vector<16x64xf32>
    %cst_6 = arith.constant 0.000000e+00 : f32
    %10 = vector.broadcast %cst_6 : f32 to vector<16x64xf32>
    %11 = arith.maximumf %9, %10 : vector<16x64xf32>
    %c0_7 = arith.constant 0 : index
    %c0_8 = arith.constant 0 : index
    %12 = vector.load %arg10[%c0_7, %c0_8] : memref<16x32xf32, #tpu.memory_space<vmem>>, vector<16x32xf32>
    %13 = arith.truncf %11 : vector<16x64xf32> to vector<16x64xbf16>
    %c0_9 = arith.constant 0 : index
    %c0_10 = arith.constant 0 : index
    %14 = vector.load %arg5[%c0_9, %c0_10] : memref<64x32xbf16, #tpu.memory_space<vmem>>, vector<64x32xbf16>
    %cst_11 = arith.constant dense<0.000000e+00> : vector<16x32xf32>
    %15 = tpu.matmul %13, %14, %cst_11 {dimension_numbers = #tpu.dot_dimension_numbers<[1], [0], [0], [1], [0, 0, 1, 1], [], []>} : vector<16x64xbf16>, vector<64x32xbf16>, vector<16x32xf32> -> vector<16x32xf32>
    %16 = arith.addf %12, %15 : vector<16x32xf32>
    %c0_12 = arith.constant 0 : index
    %c0_13 = arith.constant 0 : index
    %17 = vector.load %arg10[%c0_12, %c0_13] : memref<16x32xf32, #tpu.memory_space<vmem>>, vector<16x32xf32>
    tpu.vector_store %arg10[%c0_12, %c0_13], %16 {strides = array<i32>} : memref<16x32xf32, #tpu.memory_space<vmem>>, vector<16x32xf32>,
    %c0_i32_14 = arith.constant 0 : i32
    %18 = arith.cmpi eq, %arg1, %c0_i32_14 : i32
    %19 = arith.extui %18 : i1 to i32
    %c0_i32_15 = arith.constant 0 : i32
    %20 = arith.cmpi ne, %19, %c0_i32_15 : i32
    scf.if %20 {
      %c0_16 = arith.constant 0 : index
      %c0_17 = arith.constant 0 : index
      %21 = vector.load %arg10[%c0_16, %c0_17] : memref<16x32xf32, #tpu.memory_space<vmem>>, vector<16x32xf32>
      %c0_18 = arith.constant 0 : index
      %c0_19 = arith.constant 0 : index
      %22 = vector.load %arg6[%c0_18, %c0_19] : memref<1x32xf32, #tpu.memory_space<vmem>>, vector<1x32xf32>
      %23 = vector.broadcast %22 : vector<1x32xf32> to vector<16x32xf32>
      %24 = arith.addf %21, %23 : vector<16x32xf32>
      %c0_20 = arith.constant 0 : index
      %c0_21 = arith.constant 0 : index
      %25 = vector.load %arg2[%c0_20, %c0_21] : memref<16x32xf32, #tpu.memory_space<vmem>>, vector<16x32xf32>
      %26 = arith.addf %24, %25 : vector<16x32xf32>
      %cst_22 = arith.constant dense<0.000000e+00> : vector<16xf32>
      %27 = vector.multi_reduction <add>, %26, %cst_22 [1] : vector<16x32xf32> to vector<16xf32>
      %28 = vector.shape_cast %27 : vector<16xf32> to vector<16x1xf32>
      %cst_23 = arith.constant 3.200000e+01 : f32
      %29 = vector.broadcast %cst_23 : f32 to vector<16x1xf32>
      %30 = arith.divf %28, %29 : vector<16x1xf32>
      %31 = vector.broadcast %30 : vector<16x1xf32> to vector<16x32xf32>
      %32 = arith.subf %26, %31 : vector<16x32xf32>
      %33 = arith.mulf %32, %32 : vector<16x32xf32>
      %cst_24 = arith.constant dense<0.000000e+00> : vector<16xf32>
      %34 = vector.multi_reduction <add>, %33, %cst_24 [1] : vector<16x32xf32> to vector<16xf32>
      %35 = vector.shape_cast %34 : vector<16xf32> to vector<16x1xf32>
      %cst_25 = arith.constant 3.200000e+01 : f32
      %36 = vector.broadcast %cst_25 : f32 to vector<16x1xf32>
      %37 = arith.divf %35, %36 : vector<16x1xf32>
      %38 = vector.broadcast %30 : vector<16x1xf32> to vector<16x32xf32>
      %39 = arith.subf %26, %38 : vector<16x32xf32>
      %cst_26 = arith.constant 9.99999974E-6 : f32
      %40 = vector.broadcast %cst_26 : f32 to vector<16x1xf32>
      %41 = arith.addf %37, %40 : vector<16x1xf32>
      %42 = math.rsqrt %41 : vector<16x1xf32>
      %43 = vector.broadcast %42 : vector<16x1xf32> to vector<16x32xf32>
      %44 = arith.mulf %39, %43 : vector<16x32xf32>
      %c0_27 = arith.constant 0 : index
      %c0_28 = arith.constant 0 : index
      %45 = vector.load %arg7[%c0_27, %c0_28] : memref<1x32xf32, #tpu.memory_space<vmem>>, vector<1x32xf32>
      %46 = vector.broadcast %45 : vector<1x32xf32> to vector<16x32xf32>
      %47 = arith.mulf %44, %46 : vector<16x32xf32>
      %c0_29 = arith.constant 0 : index
      %c0_30 = arith.constant 0 : index
      %48 = vector.load %arg8[%c0_29, %c0_30] : memref<1x32xf32, #tpu.memory_space<vmem>>, vector<1x32xf32>
      %49 = vector.broadcast %48 : vector<1x32xf32> to vector<16x32xf32>
      %50 = arith.addf %47, %49 : vector<16x32xf32>
      %c0_31 = arith.constant 0 : index
      %c0_32 = arith.constant 0 : index
      %51 = vector.load %arg9[%c0_31, %c0_32] : memref<16x32xf32, #tpu.memory_space<vmem>>, vector<16x32xf32>
      tpu.vector_store %arg9[%c0_31, %c0_32], %50 {strides = array<i32>} : memref<16x32xf32, #tpu.memory_space<vmem>>, vector<16x32xf32>,
    } else {
    }
    return
  }
  func.func @transform_0(%arg0: i32, %arg1: i32) -> (i32, i32) {
    %c0_i32 = arith.constant 0 : i32
    %c0_i32_0 = arith.constant 0 : i32
    return %arg0, %c0_i32 : i32, i32
  }
  func.func @transform_1(%arg0: i32, %arg1: i32) -> (i32, i32) {
    %c0_i32 = arith.constant 0 : i32
    %c0_i32_0 = arith.constant 0 : i32
    return %c0_i32, %arg1 : i32, i32
  }
  func.func @transform_2(%arg0: i32, %arg1: i32) -> (i32, i32) {
    %c0_i32 = arith.constant 0 : i32
    %c0_i32_0 = arith.constant 0 : i32
    return %c0_i32, %arg1 : i32, i32
  }
  func.func @transform_3(%arg0: i32, %arg1: i32) -> (i32, i32) {
    %c0_i32 = arith.constant 0 : i32
    %c0_i32_0 = arith.constant 0 : i32
    return %arg1, %c0_i32 : i32, i32
  }
  func.func @transform_4(%arg0: i32, %arg1: i32) -> (i32, i32) {
    %c0_i32 = arith.constant 0 : i32
    %c0_i32_0 = arith.constant 0 : i32
    %c0_i32_1 = arith.constant 0 : i32
    return %c0_i32, %c0_i32_0 : i32, i32
  }
  func.func @transform_5(%arg0: i32, %arg1: i32) -> (i32, i32) {
    %c0_i32 = arith.constant 0 : i32
    %c0_i32_0 = arith.constant 0 : i32
    %c0_i32_1 = arith.constant 0 : i32
    return %c0_i32, %c0_i32_0 : i32, i32
  }
  func.func @transform_6(%arg0: i32, %arg1: i32) -> (i32, i32) {
    %c0_i32 = arith.constant 0 : i32
    %c0_i32_0 = arith.constant 0 : i32
    %c0_i32_1 = arith.constant 0 : i32
    return %c0_i32, %c0_i32_0 : i32, i32
  }
  func.func @transform_7(%arg0: i32, %arg1: i32) -> (i32, i32) {
    %c0_i32 = arith.constant 0 : i32
    %c0_i32_0 = arith.constant 0 : i32
    return %arg0, %c0_i32 : i32, i32
  }
}

module attributes {stable_mosaic.version = 11 : i64} {
  func.func @_flash_mha_kernel(%arg0: i32, %arg1: i32, %arg2: i32, %arg3: memref<1x8x32xf32, #tpu.memory_space<vmem>>, %arg4: memref<1x8x32xf32, #tpu.memory_space<vmem>>, %arg5: memref<1x8x32xf32, #tpu.memory_space<vmem>>, %arg6: memref<1x8x32xf32, #tpu.memory_space<vmem>>, %arg7: memref<4x8x1xf32, #tpu.memory_space<vmem>>, %arg8: memref<4x8x1xf32, #tpu.memory_space<vmem>>, %arg9: memref<4x8x8xf32, #tpu.memory_space<vmem>>) attributes {dimension_semantics = [#tpu.dimension_semantics<parallel>, #tpu.dimension_semantics<parallel>, #tpu.dimension_semantics<arbitrary>], iteration_bounds = array<i64: 2, 1, 1>, scalar_prefetch = 0 : i64, scratch_operands = 3 : i64, tpu.core_type = #tpu.core_type<tc>, window_params = [{transform_indices = @transform_0, window_bounds = array<i64: 1, 8, 32>}, {transform_indices = @transform_1, window_bounds = array<i64: 1, 8, 32>}, {transform_indices = @transform_2, window_bounds = array<i64: 1, 8, 32>}, {transform_indices = @transform_3, window_bounds = array<i64: 1, 8, 32>}]} {
    %c0_i32 = arith.constant 0 : i32
    %0 = arith.cmpi eq, %arg2, %c0_i32 : i32
    %1 = arith.extui %0 : i1 to i32
    %c0_i32_0 = arith.constant 0 : i32
    %2 = arith.cmpi ne, %1, %c0_i32_0 : i32
    scf.if %2 {
      %cst_123 = arith.constant 0xFF800000 : f32
      %182 = vector.broadcast %cst_123 : f32 to vector<4x8x1xf32>
      %c0_124 = arith.constant 0 : index
      %c0_125 = arith.constant 0 : index
      %c0_126 = arith.constant 0 : index
      %183 = vector.load %arg7[%c0_124, %c0_125, %c0_126] : memref<4x8x1xf32, #tpu.memory_space<vmem>>, vector<4x8x1xf32>
      tpu.vector_store %arg7[%c0_124, %c0_125, %c0_126], %182 {strides = array<i32>} : memref<4x8x1xf32, #tpu.memory_space<vmem>>, vector<4x8x1xf32>,
      %cst_127 = arith.constant 0.000000e+00 : f32
      %184 = vector.broadcast %cst_127 : f32 to vector<4x8x1xf32>
      %c0_128 = arith.constant 0 : index
      %c0_129 = arith.constant 0 : index
      %c0_130 = arith.constant 0 : index
      %185 = vector.load %arg8[%c0_128, %c0_129, %c0_130] : memref<4x8x1xf32, #tpu.memory_space<vmem>>, vector<4x8x1xf32>
      tpu.vector_store %arg8[%c0_128, %c0_129, %c0_130], %184 {strides = array<i32>} : memref<4x8x1xf32, #tpu.memory_space<vmem>>, vector<4x8x1xf32>,
      %cst_131 = arith.constant 0.000000e+00 : f32
      %186 = vector.broadcast %cst_131 : f32 to vector<4x8x8xf32>
      %c0_132 = arith.constant 0 : index
      %c0_133 = arith.constant 0 : index
      %c0_134 = arith.constant 0 : index
      %187 = vector.load %arg9[%c0_132, %c0_133, %c0_134] : memref<4x8x8xf32, #tpu.memory_space<vmem>>, vector<4x8x8xf32>
      tpu.vector_store %arg9[%c0_132, %c0_133, %c0_134], %186 {strides = array<i32>} : memref<4x8x8xf32, #tpu.memory_space<vmem>>, vector<4x8x8xf32>,
    } else {
    }
    %c0 = arith.constant 0 : index
    %c0_1 = arith.constant 0 : index
    %c0_2 = arith.constant 0 : index
    %3 = vector.load %arg3[%c0, %c0_1, %c0_2] : memref<1x8x32xf32, #tpu.memory_space<vmem>>, vector<1x8x8xf32>
    %4 = vector.shape_cast %3 : vector<1x8x8xf32> to vector<8x8xf32>
    %cst = arith.constant 0.353553385 : f32
    %5 = vector.broadcast %cst : f32 to vector<8x8xf32>
    %6 = arith.mulf %4, %5 : vector<8x8xf32>
    %c0_3 = arith.constant 0 : index
    %c0_4 = arith.constant 0 : index
    %c0_5 = arith.constant 0 : index
    %7 = vector.load %arg4[%c0_3, %c0_4, %c0_5] : memref<1x8x32xf32, #tpu.memory_space<vmem>>, vector<1x8x8xf32>
    %8 = vector.shape_cast %7 : vector<1x8x8xf32> to vector<8x8xf32>
    %c0_6 = arith.constant 0 : index
    %c0_7 = arith.constant 0 : index
    %c0_8 = arith.constant 0 : index
    %9 = vector.load %arg5[%c0_6, %c0_7, %c0_8] : memref<1x8x32xf32, #tpu.memory_space<vmem>>, vector<1x8x8xf32>
    %10 = vector.shape_cast %9 : vector<1x8x8xf32> to vector<8x8xf32>
    %11 = arith.truncf %6 : vector<8x8xf32> to vector<8x8xbf16>
    %12 = arith.truncf %8 : vector<8x8xf32> to vector<8x8xbf16>
    %cst_9 = arith.constant dense<0.000000e+00> : vector<8x8xf32>
    %13 = tpu.matmul %11, %12, %cst_9 {dimension_numbers = #tpu.dot_dimension_numbers<[1], [1], [0], [0], [0, 0, 1, 0], [], []>} : vector<8x8xbf16>, vector<8x8xbf16>, vector<8x8xf32> -> vector<8x8xf32>
    %c0_10 = arith.constant 0 : index
    %c0_11 = arith.constant 0 : index
    %c0_12 = arith.constant 0 : index
    %14 = vector.load %arg7[%c0_10, %c0_11, %c0_12] : memref<4x8x1xf32, #tpu.memory_space<vmem>>, vector<1x8x1xf32>
    %15 = vector.shape_cast %14 : vector<1x8x1xf32> to vector<8x1xf32>
    %cst_13 = arith.constant dense<0xFF800000> : vector<8xf32>
    %16 = vector.multi_reduction <maximumf>, %13, %cst_13 [1] : vector<8x8xf32> to vector<8xf32>
    %17 = vector.shape_cast %16 : vector<8xf32> to vector<8x1xf32>
    %18 = arith.maximumf %15, %17 : vector<8x1xf32>
    %19 = arith.subf %15, %18 : vector<8x1xf32>
    %20 = math.exp %19 : vector<8x1xf32>
    %21 = vector.broadcast %18 : vector<8x1xf32> to vector<8x8xf32>
    %22 = arith.subf %13, %21 : vector<8x8xf32>
    %23 = math.exp %22 : vector<8x8xf32>
    %c0_14 = arith.constant 0 : index
    %c0_15 = arith.constant 0 : index
    %c0_16 = arith.constant 0 : index
    %24 = vector.load %arg8[%c0_14, %c0_15, %c0_16] : memref<4x8x1xf32, #tpu.memory_space<vmem>>, vector<1x8x1xf32>
    %25 = vector.shape_cast %24 : vector<1x8x1xf32> to vector<8x1xf32>
    %26 = arith.mulf %20, %25 : vector<8x1xf32>
    %cst_17 = arith.constant dense<0.000000e+00> : vector<8xf32>
    %27 = vector.multi_reduction <add>, %23, %cst_17 [1] : vector<8x8xf32> to vector<8xf32>
    %28 = vector.shape_cast %27 : vector<8xf32> to vector<8x1xf32>
    %29 = arith.addf %26, %28 : vector<8x1xf32>
    %c0_18 = arith.constant 0 : index
    %c0_19 = arith.constant 0 : index
    %c0_20 = arith.constant 0 : index
    %30 = vector.load %arg8[%c0_18, %c0_19, %c0_20] : memref<4x8x1xf32, #tpu.memory_space<vmem>>, vector<1x8x1xf32>
    %31 = vector.shape_cast %30 : vector<1x8x1xf32> to vector<8x1xf32>
    %32 = vector.shape_cast %29 : vector<8x1xf32> to vector<1x8x1xf32>
    tpu.vector_store %arg8[%c0_18, %c0_19, %c0_20], %32 {strides = array<i32>} : memref<4x8x1xf32, #tpu.memory_space<vmem>>, vector<1x8x1xf32>,
    %33 = arith.truncf %23 : vector<8x8xf32> to vector<8x8xbf16>
    %34 = arith.truncf %10 : vector<8x8xf32> to vector<8x8xbf16>
    %cst_21 = arith.constant dense<0.000000e+00> : vector<8x8xf32>
    %35 = tpu.matmul %33, %34, %cst_21 {dimension_numbers = #tpu.dot_dimension_numbers<[1], [0], [0], [1], [0, 0, 1, 1], [], []>} : vector<8x8xbf16>, vector<8x8xbf16>, vector<8x8xf32> -> vector<8x8xf32>
    %c0_22 = arith.constant 0 : index
    %c0_23 = arith.constant 0 : index
    %c0_24 = arith.constant 0 : index
    %36 = vector.load %arg9[%c0_22, %c0_23, %c0_24] : memref<4x8x8xf32, #tpu.memory_space<vmem>>, vector<1x8x8xf32>
    %37 = vector.shape_cast %36 : vector<1x8x8xf32> to vector<8x8xf32>
    %38 = vector.broadcast %20 : vector<8x1xf32> to vector<8x8xf32>
    %39 = arith.mulf %38, %37 : vector<8x8xf32>
    %40 = arith.addf %39, %35 : vector<8x8xf32>
    %c0_25 = arith.constant 0 : index
    %c0_26 = arith.constant 0 : index
    %c0_27 = arith.constant 0 : index
    %41 = vector.load %arg9[%c0_25, %c0_26, %c0_27] : memref<4x8x8xf32, #tpu.memory_space<vmem>>, vector<1x8x8xf32>
    %42 = vector.shape_cast %41 : vector<1x8x8xf32> to vector<8x8xf32>
    %43 = vector.shape_cast %40 : vector<8x8xf32> to vector<1x8x8xf32>
    tpu.vector_store %arg9[%c0_25, %c0_26, %c0_27], %43 {strides = array<i32>} : memref<4x8x8xf32, #tpu.memory_space<vmem>>, vector<1x8x8xf32>,
    %c0_28 = arith.constant 0 : index
    %c0_29 = arith.constant 0 : index
    %c0_30 = arith.constant 0 : index
    %44 = vector.load %arg7[%c0_28, %c0_29, %c0_30] : memref<4x8x1xf32, #tpu.memory_space<vmem>>, vector<1x8x1xf32>
    %45 = vector.shape_cast %44 : vector<1x8x1xf32> to vector<8x1xf32>
    %46 = vector.shape_cast %18 : vector<8x1xf32> to vector<1x8x1xf32>
    tpu.vector_store %arg7[%c0_28, %c0_29, %c0_30], %46 {strides = array<i32>} : memref<4x8x1xf32, #tpu.memory_space<vmem>>, vector<1x8x1xf32>,
    %c0_31 = arith.constant 0 : index
    %c0_32 = arith.constant 0 : index
    %c8 = arith.constant 8 : index
    %47 = vector.load %arg3[%c0_31, %c0_32, %c8] : memref<1x8x32xf32, #tpu.memory_space<vmem>>, vector<1x8x8xf32>
    %48 = vector.shape_cast %47 : vector<1x8x8xf32> to vector<8x8xf32>
    %cst_33 = arith.constant 0.353553385 : f32
    %49 = vector.broadcast %cst_33 : f32 to vector<8x8xf32>
    %50 = arith.mulf %48, %49 : vector<8x8xf32>
    %c0_34 = arith.constant 0 : index
    %c0_35 = arith.constant 0 : index
    %c8_36 = arith.constant 8 : index
    %51 = vector.load %arg4[%c0_34, %c0_35, %c8_36] : memref<1x8x32xf32, #tpu.memory_space<vmem>>, vector<1x8x8xf32>
    %52 = vector.shape_cast %51 : vector<1x8x8xf32> to vector<8x8xf32>
    %c0_37 = arith.constant 0 : index
    %c0_38 = arith.constant 0 : index
    %c8_39 = arith.constant 8 : index
    %53 = vector.load %arg5[%c0_37, %c0_38, %c8_39] : memref<1x8x32xf32, #tpu.memory_space<vmem>>, vector<1x8x8xf32>
    %54 = vector.shape_cast %53 : vector<1x8x8xf32> to vector<8x8xf32>
    %55 = arith.truncf %50 : vector<8x8xf32> to vector<8x8xbf16>
    %56 = arith.truncf %52 : vector<8x8xf32> to vector<8x8xbf16>
    %cst_40 = arith.constant dense<0.000000e+00> : vector<8x8xf32>
    %57 = tpu.matmul %55, %56, %cst_40 {dimension_numbers = #tpu.dot_dimension_numbers<[1], [1], [0], [0], [0, 0, 1, 0], [], []>} : vector<8x8xbf16>, vector<8x8xbf16>, vector<8x8xf32> -> vector<8x8xf32>
    %c1 = arith.constant 1 : index
    %c0_41 = arith.constant 0 : index
    %c0_42 = arith.constant 0 : index
    %58 = vector.load %arg7[%c1, %c0_41, %c0_42] : memref<4x8x1xf32, #tpu.memory_space<vmem>>, vector<1x8x1xf32>
    %59 = vector.shape_cast %58 : vector<1x8x1xf32> to vector<8x1xf32>
    %cst_43 = arith.constant dense<0xFF800000> : vector<8xf32>
    %60 = vector.multi_reduction <maximumf>, %57, %cst_43 [1] : vector<8x8xf32> to vector<8xf32>
    %61 = vector.shape_cast %60 : vector<8xf32> to vector<8x1xf32>
    %62 = arith.maximumf %59, %61 : vector<8x1xf32>
    %63 = arith.subf %59, %62 : vector<8x1xf32>
    %64 = math.exp %63 : vector<8x1xf32>
    %65 = vector.broadcast %62 : vector<8x1xf32> to vector<8x8xf32>
    %66 = arith.subf %57, %65 : vector<8x8xf32>
    %67 = math.exp %66 : vector<8x8xf32>
    %c1_44 = arith.constant 1 : index
    %c0_45 = arith.constant 0 : index
    %c0_46 = arith.constant 0 : index
    %68 = vector.load %arg8[%c1_44, %c0_45, %c0_46] : memref<4x8x1xf32, #tpu.memory_space<vmem>>, vector<1x8x1xf32>
    %69 = vector.shape_cast %68 : vector<1x8x1xf32> to vector<8x1xf32>
    %70 = arith.mulf %64, %69 : vector<8x1xf32>
    %cst_47 = arith.constant dense<0.000000e+00> : vector<8xf32>
    %71 = vector.multi_reduction <add>, %67, %cst_47 [1] : vector<8x8xf32> to vector<8xf32>
    %72 = vector.shape_cast %71 : vector<8xf32> to vector<8x1xf32>
    %73 = arith.addf %70, %72 : vector<8x1xf32>
    %c1_48 = arith.constant 1 : index
    %c0_49 = arith.constant 0 : index
    %c0_50 = arith.constant 0 : index
    %74 = vector.load %arg8[%c1_48, %c0_49, %c0_50] : memref<4x8x1xf32, #tpu.memory_space<vmem>>, vector<1x8x1xf32>
    %75 = vector.shape_cast %74 : vector<1x8x1xf32> to vector<8x1xf32>
    %76 = vector.shape_cast %73 : vector<8x1xf32> to vector<1x8x1xf32>
    tpu.vector_store %arg8[%c1_48, %c0_49, %c0_50], %76 {strides = array<i32>} : memref<4x8x1xf32, #tpu.memory_space<vmem>>, vector<1x8x1xf32>,
    %77 = arith.truncf %67 : vector<8x8xf32> to vector<8x8xbf16>
    %78 = arith.truncf %54 : vector<8x8xf32> to vector<8x8xbf16>
    %cst_51 = arith.constant dense<0.000000e+00> : vector<8x8xf32>
    %79 = tpu.matmul %77, %78, %cst_51 {dimension_numbers = #tpu.dot_dimension_numbers<[1], [0], [0], [1], [0, 0, 1, 1], [], []>} : vector<8x8xbf16>, vector<8x8xbf16>, vector<8x8xf32> -> vector<8x8xf32>
    %c1_52 = arith.constant 1 : index
    %c0_53 = arith.constant 0 : index
    %c0_54 = arith.constant 0 : index
    %80 = vector.load %arg9[%c1_52, %c0_53, %c0_54] : memref<4x8x8xf32, #tpu.memory_space<vmem>>, vector<1x8x8xf32>
    %81 = vector.shape_cast %80 : vector<1x8x8xf32> to vector<8x8xf32>
    %82 = vector.broadcast %64 : vector<8x1xf32> to vector<8x8xf32>
    %83 = arith.mulf %82, %81 : vector<8x8xf32>
    %84 = arith.addf %83, %79 : vector<8x8xf32>
    %c1_55 = arith.constant 1 : index
    %c0_56 = arith.constant 0 : index
    %c0_57 = arith.constant 0 : index
    %85 = vector.load %arg9[%c1_55, %c0_56, %c0_57] : memref<4x8x8xf32, #tpu.memory_space<vmem>>, vector<1x8x8xf32>
    %86 = vector.shape_cast %85 : vector<1x8x8xf32> to vector<8x8xf32>
    %87 = vector.shape_cast %84 : vector<8x8xf32> to vector<1x8x8xf32>
    tpu.vector_store %arg9[%c1_55, %c0_56, %c0_57], %87 {strides = array<i32>} : memref<4x8x8xf32, #tpu.memory_space<vmem>>, vector<1x8x8xf32>,
    %c1_58 = arith.constant 1 : index
    %c0_59 = arith.constant 0 : index
    %c0_60 = arith.constant 0 : index
    %88 = vector.load %arg7[%c1_58, %c0_59, %c0_60] : memref<4x8x1xf32, #tpu.memory_space<vmem>>, vector<1x8x1xf32>
    %89 = vector.shape_cast %88 : vector<1x8x1xf32> to vector<8x1xf32>
    %90 = vector.shape_cast %62 : vector<8x1xf32> to vector<1x8x1xf32>
    tpu.vector_store %arg7[%c1_58, %c0_59, %c0_60], %90 {strides = array<i32>} : memref<4x8x1xf32, #tpu.memory_space<vmem>>, vector<1x8x1xf32>,
    %c0_61 = arith.constant 0 : index
    %c0_62 = arith.constant 0 : index
    %c16 = arith.constant 16 : index
    %91 = vector.load %arg3[%c0_61, %c0_62, %c16] : memref<1x8x32xf32, #tpu.memory_space<vmem>>, vector<1x8x8xf32>
    %92 = vector.shape_cast %91 : vector<1x8x8xf32> to vector<8x8xf32>
    %cst_63 = arith.constant 0.353553385 : f32
    %93 = vector.broadcast %cst_63 : f32 to vector<8x8xf32>
    %94 = arith.mulf %92, %93 : vector<8x8xf32>
    %c0_64 = arith.constant 0 : index
    %c0_65 = arith.constant 0 : index
    %c16_66 = arith.constant 16 : index
    %95 = vector.load %arg4[%c0_64, %c0_65, %c16_66] : memref<1x8x32xf32, #tpu.memory_space<vmem>>, vector<1x8x8xf32>
    %96 = vector.shape_cast %95 : vector<1x8x8xf32> to vector<8x8xf32>
    %c0_67 = arith.constant 0 : index
    %c0_68 = arith.constant 0 : index
    %c16_69 = arith.constant 16 : index
    %97 = vector.load %arg5[%c0_67, %c0_68, %c16_69] : memref<1x8x32xf32, #tpu.memory_space<vmem>>, vector<1x8x8xf32>
    %98 = vector.shape_cast %97 : vector<1x8x8xf32> to vector<8x8xf32>
    %99 = arith.truncf %94 : vector<8x8xf32> to vector<8x8xbf16>
    %100 = arith.truncf %96 : vector<8x8xf32> to vector<8x8xbf16>
    %cst_70 = arith.constant dense<0.000000e+00> : vector<8x8xf32>
    %101 = tpu.matmul %99, %100, %cst_70 {dimension_numbers = #tpu.dot_dimension_numbers<[1], [1], [0], [0], [0, 0, 1, 0], [], []>} : vector<8x8xbf16>, vector<8x8xbf16>, vector<8x8xf32> -> vector<8x8xf32>
    %c2 = arith.constant 2 : index
    %c0_71 = arith.constant 0 : index
    %c0_72 = arith.constant 0 : index
    %102 = vector.load %arg7[%c2, %c0_71, %c0_72] : memref<4x8x1xf32, #tpu.memory_space<vmem>>, vector<1x8x1xf32>
    %103 = vector.shape_cast %102 : vector<1x8x1xf32> to vector<8x1xf32>
    %cst_73 = arith.constant dense<0xFF800000> : vector<8xf32>
    %104 = vector.multi_reduction <maximumf>, %101, %cst_73 [1] : vector<8x8xf32> to vector<8xf32>
    %105 = vector.shape_cast %104 : vector<8xf32> to vector<8x1xf32>
    %106 = arith.maximumf %103, %105 : vector<8x1xf32>
    %107 = arith.subf %103, %106 : vector<8x1xf32>
    %108 = math.exp %107 : vector<8x1xf32>
    %109 = vector.broadcast %106 : vector<8x1xf32> to vector<8x8xf32>
    %110 = arith.subf %101, %109 : vector<8x8xf32>
    %111 = math.exp %110 : vector<8x8xf32>
    %c2_74 = arith.constant 2 : index
    %c0_75 = arith.constant 0 : index
    %c0_76 = arith.constant 0 : index
    %112 = vector.load %arg8[%c2_74, %c0_75, %c0_76] : memref<4x8x1xf32, #tpu.memory_space<vmem>>, vector<1x8x1xf32>
    %113 = vector.shape_cast %112 : vector<1x8x1xf32> to vector<8x1xf32>
    %114 = arith.mulf %108, %113 : vector<8x1xf32>
    %cst_77 = arith.constant dense<0.000000e+00> : vector<8xf32>
    %115 = vector.multi_reduction <add>, %111, %cst_77 [1] : vector<8x8xf32> to vector<8xf32>
    %116 = vector.shape_cast %115 : vector<8xf32> to vector<8x1xf32>
    %117 = arith.addf %114, %116 : vector<8x1xf32>
    %c2_78 = arith.constant 2 : index
    %c0_79 = arith.constant 0 : index
    %c0_80 = arith.constant 0 : index
    %118 = vector.load %arg8[%c2_78, %c0_79, %c0_80] : memref<4x8x1xf32, #tpu.memory_space<vmem>>, vector<1x8x1xf32>
    %119 = vector.shape_cast %118 : vector<1x8x1xf32> to vector<8x1xf32>
    %120 = vector.shape_cast %117 : vector<8x1xf32> to vector<1x8x1xf32>
    tpu.vector_store %arg8[%c2_78, %c0_79, %c0_80], %120 {strides = array<i32>} : memref<4x8x1xf32, #tpu.memory_space<vmem>>, vector<1x8x1xf32>,
    %121 = arith.truncf %111 : vector<8x8xf32> to vector<8x8xbf16>
    %122 = arith.truncf %98 : vector<8x8xf32> to vector<8x8xbf16>
    %cst_81 = arith.constant dense<0.000000e+00> : vector<8x8xf32>
    %123 = tpu.matmul %121, %122, %cst_81 {dimension_numbers = #tpu.dot_dimension_numbers<[1], [0], [0], [1], [0, 0, 1, 1], [], []>} : vector<8x8xbf16>, vector<8x8xbf16>, vector<8x8xf32> -> vector<8x8xf32>
    %c2_82 = arith.constant 2 : index
    %c0_83 = arith.constant 0 : index
    %c0_84 = arith.constant 0 : index
    %124 = vector.load %arg9[%c2_82, %c0_83, %c0_84] : memref<4x8x8xf32, #tpu.memory_space<vmem>>, vector<1x8x8xf32>
    %125 = vector.shape_cast %124 : vector<1x8x8xf32> to vector<8x8xf32>
    %126 = vector.broadcast %108 : vector<8x1xf32> to vector<8x8xf32>
    %127 = arith.mulf %126, %125 : vector<8x8xf32>
    %128 = arith.addf %127, %123 : vector<8x8xf32>
    %c2_85 = arith.constant 2 : index
    %c0_86 = arith.constant 0 : index
    %c0_87 = arith.constant 0 : index
    %129 = vector.load %arg9[%c2_85, %c0_86, %c0_87] : memref<4x8x8xf32, #tpu.memory_space<vmem>>, vector<1x8x8xf32>
    %130 = vector.shape_cast %129 : vector<1x8x8xf32> to vector<8x8xf32>
    %131 = vector.shape_cast %128 : vector<8x8xf32> to vector<1x8x8xf32>
    tpu.vector_store %arg9[%c2_85, %c0_86, %c0_87], %131 {strides = array<i32>} : memref<4x8x8xf32, #tpu.memory_space<vmem>>, vector<1x8x8xf32>,
    %c2_88 = arith.constant 2 : index
    %c0_89 = arith.constant 0 : index
    %c0_90 = arith.constant 0 : index
    %132 = vector.load %arg7[%c2_88, %c0_89, %c0_90] : memref<4x8x1xf32, #tpu.memory_space<vmem>>, vector<1x8x1xf32>
    %133 = vector.shape_cast %132 : vector<1x8x1xf32> to vector<8x1xf32>
    %134 = vector.shape_cast %106 : vector<8x1xf32> to vector<1x8x1xf32>
    tpu.vector_store %arg7[%c2_88, %c0_89, %c0_90], %134 {strides = array<i32>} : memref<4x8x1xf32, #tpu.memory_space<vmem>>, vector<1x8x1xf32>,
    %c0_91 = arith.constant 0 : index
    %c0_92 = arith.constant 0 : index
    %c24 = arith.constant 24 : index
    %135 = vector.load %arg3[%c0_91, %c0_92, %c24] : memref<1x8x32xf32, #tpu.memory_space<vmem>>, vector<1x8x8xf32>
    %136 = vector.shape_cast %135 : vector<1x8x8xf32> to vector<8x8xf32>
    %cst_93 = arith.constant 0.353553385 : f32
    %137 = vector.broadcast %cst_93 : f32 to vector<8x8xf32>
    %138 = arith.mulf %136, %137 : vector<8x8xf32>
    %c0_94 = arith.constant 0 : index
    %c0_95 = arith.constant 0 : index
    %c24_96 = arith.constant 24 : index
    %139 = vector.load %arg4[%c0_94, %c0_95, %c24_96] : memref<1x8x32xf32, #tpu.memory_space<vmem>>, vector<1x8x8xf32>
    %140 = vector.shape_cast %139 : vector<1x8x8xf32> to vector<8x8xf32>
    %c0_97 = arith.constant 0 : index
    %c0_98 = arith.constant 0 : index
    %c24_99 = arith.constant 24 : index
    %141 = vector.load %arg5[%c0_97, %c0_98, %c24_99] : memref<1x8x32xf32, #tpu.memory_space<vmem>>, vector<1x8x8xf32>
    %142 = vector.shape_cast %141 : vector<1x8x8xf32> to vector<8x8xf32>
    %143 = arith.truncf %138 : vector<8x8xf32> to vector<8x8xbf16>
    %144 = arith.truncf %140 : vector<8x8xf32> to vector<8x8xbf16>
    %cst_100 = arith.constant dense<0.000000e+00> : vector<8x8xf32>
    %145 = tpu.matmul %143, %144, %cst_100 {dimension_numbers = #tpu.dot_dimension_numbers<[1], [1], [0], [0], [0, 0, 1, 0], [], []>} : vector<8x8xbf16>, vector<8x8xbf16>, vector<8x8xf32> -> vector<8x8xf32>
    %c3 = arith.constant 3 : index
    %c0_101 = arith.constant 0 : index
    %c0_102 = arith.constant 0 : index
    %146 = vector.load %arg7[%c3, %c0_101, %c0_102] : memref<4x8x1xf32, #tpu.memory_space<vmem>>, vector<1x8x1xf32>
    %147 = vector.shape_cast %146 : vector<1x8x1xf32> to vector<8x1xf32>
    %cst_103 = arith.constant dense<0xFF800000> : vector<8xf32>
    %148 = vector.multi_reduction <maximumf>, %145, %cst_103 [1] : vector<8x8xf32> to vector<8xf32>
    %149 = vector.shape_cast %148 : vector<8xf32> to vector<8x1xf32>
    %150 = arith.maximumf %147, %149 : vector<8x1xf32>
    %151 = arith.subf %147, %150 : vector<8x1xf32>
    %152 = math.exp %151 : vector<8x1xf32>
    %153 = vector.broadcast %150 : vector<8x1xf32> to vector<8x8xf32>
    %154 = arith.subf %145, %153 : vector<8x8xf32>
    %155 = math.exp %154 : vector<8x8xf32>
    %c3_104 = arith.constant 3 : index
    %c0_105 = arith.constant 0 : index
    %c0_106 = arith.constant 0 : index
    %156 = vector.load %arg8[%c3_104, %c0_105, %c0_106] : memref<4x8x1xf32, #tpu.memory_space<vmem>>, vector<1x8x1xf32>
    %157 = vector.shape_cast %156 : vector<1x8x1xf32> to vector<8x1xf32>
    %158 = arith.mulf %152, %157 : vector<8x1xf32>
    %cst_107 = arith.constant dense<0.000000e+00> : vector<8xf32>
    %159 = vector.multi_reduction <add>, %155, %cst_107 [1] : vector<8x8xf32> to vector<8xf32>
    %160 = vector.shape_cast %159 : vector<8xf32> to vector<8x1xf32>
    %161 = arith.addf %158, %160 : vector<8x1xf32>
    %c3_108 = arith.constant 3 : index
    %c0_109 = arith.constant 0 : index
    %c0_110 = arith.constant 0 : index
    %162 = vector.load %arg8[%c3_108, %c0_109, %c0_110] : memref<4x8x1xf32, #tpu.memory_space<vmem>>, vector<1x8x1xf32>
    %163 = vector.shape_cast %162 : vector<1x8x1xf32> to vector<8x1xf32>
    %164 = vector.shape_cast %161 : vector<8x1xf32> to vector<1x8x1xf32>
    tpu.vector_store %arg8[%c3_108, %c0_109, %c0_110], %164 {strides = array<i32>} : memref<4x8x1xf32, #tpu.memory_space<vmem>>, vector<1x8x1xf32>,
    %165 = arith.truncf %155 : vector<8x8xf32> to vector<8x8xbf16>
    %166 = arith.truncf %142 : vector<8x8xf32> to vector<8x8xbf16>
    %cst_111 = arith.constant dense<0.000000e+00> : vector<8x8xf32>
    %167 = tpu.matmul %165, %166, %cst_111 {dimension_numbers = #tpu.dot_dimension_numbers<[1], [0], [0], [1], [0, 0, 1, 1], [], []>} : vector<8x8xbf16>, vector<8x8xbf16>, vector<8x8xf32> -> vector<8x8xf32>
    %c3_112 = arith.constant 3 : index
    %c0_113 = arith.constant 0 : index
    %c0_114 = arith.constant 0 : index
    %168 = vector.load %arg9[%c3_112, %c0_113, %c0_114] : memref<4x8x8xf32, #tpu.memory_space<vmem>>, vector<1x8x8xf32>
    %169 = vector.shape_cast %168 : vector<1x8x8xf32> to vector<8x8xf32>
    %170 = vector.broadcast %152 : vector<8x1xf32> to vector<8x8xf32>
    %171 = arith.mulf %170, %169 : vector<8x8xf32>
    %172 = arith.addf %171, %167 : vector<8x8xf32>
    %c3_115 = arith.constant 3 : index
    %c0_116 = arith.constant 0 : index
    %c0_117 = arith.constant 0 : index
    %173 = vector.load %arg9[%c3_115, %c0_116, %c0_117] : memref<4x8x8xf32, #tpu.memory_space<vmem>>, vector<1x8x8xf32>
    %174 = vector.shape_cast %173 : vector<1x8x8xf32> to vector<8x8xf32>
    %175 = vector.shape_cast %172 : vector<8x8xf32> to vector<1x8x8xf32>
    tpu.vector_store %arg9[%c3_115, %c0_116, %c0_117], %175 {strides = array<i32>} : memref<4x8x8xf32, #tpu.memory_space<vmem>>, vector<1x8x8xf32>,
    %c3_118 = arith.constant 3 : index
    %c0_119 = arith.constant 0 : index
    %c0_120 = arith.constant 0 : index
    %176 = vector.load %arg7[%c3_118, %c0_119, %c0_120] : memref<4x8x1xf32, #tpu.memory_space<vmem>>, vector<1x8x1xf32>
    %177 = vector.shape_cast %176 : vector<1x8x1xf32> to vector<8x1xf32>
    %178 = vector.shape_cast %150 : vector<8x1xf32> to vector<1x8x1xf32>
    tpu.vector_store %arg7[%c3_118, %c0_119, %c0_120], %178 {strides = array<i32>} : memref<4x8x1xf32, #tpu.memory_space<vmem>>, vector<1x8x1xf32>,
    %c0_i32_121 = arith.constant 0 : i32
    %179 = arith.cmpi eq, %arg2, %c0_i32_121 : i32
    %180 = arith.extui %179 : i1 to i32
    %c0_i32_122 = arith.constant 0 : i32
    %181 = arith.cmpi ne, %180, %c0_i32_122 : i32
    scf.if %181 {
      %c0_123 = arith.constant 0 : index
      %c0_124 = arith.constant 0 : index
      %c0_125 = arith.constant 0 : index
      %182 = vector.load %arg8[%c0_123, %c0_124, %c0_125] : memref<4x8x1xf32, #tpu.memory_space<vmem>>, vector<1x8x1xf32>
      %183 = vector.shape_cast %182 : vector<1x8x1xf32> to vector<8x1xf32>
      %184 = tpu.reciprocal %183 {approx = true} : vector<8x1xf32> -> vector<8x1xf32>
      %c0_126 = arith.constant 0 : index
      %c0_127 = arith.constant 0 : index
      %c0_128 = arith.constant 0 : index
      %185 = vector.load %arg9[%c0_126, %c0_127, %c0_128] : memref<4x8x8xf32, #tpu.memory_space<vmem>>, vector<1x8x8xf32>
      %186 = vector.shape_cast %185 : vector<1x8x8xf32> to vector<8x8xf32>
      %187 = vector.broadcast %184 : vector<8x1xf32> to vector<8x8xf32>
      %188 = arith.mulf %186, %187 : vector<8x8xf32>
      %c0_129 = arith.constant 0 : index
      %c0_130 = arith.constant 0 : index
      %c0_131 = arith.constant 0 : index
      %189 = vector.load %arg6[%c0_129, %c0_130, %c0_131] : memref<1x8x32xf32, #tpu.memory_space<vmem>>, vector<1x8x8xf32>
      %190 = vector.shape_cast %189 : vector<1x8x8xf32> to vector<8x8xf32>
      %191 = vector.shape_cast %188 : vector<8x8xf32> to vector<1x8x8xf32>
      tpu.vector_store %arg6[%c0_129, %c0_130, %c0_131], %191 {strides = array<i32>} : memref<1x8x32xf32, #tpu.memory_space<vmem>>, vector<1x8x8xf32>,
      %c1_132 = arith.constant 1 : index
      %c0_133 = arith.constant 0 : index
      %c0_134 = arith.constant 0 : index
      %192 = vector.load %arg8[%c1_132, %c0_133, %c0_134] : memref<4x8x1xf32, #tpu.memory_space<vmem>>, vector<1x8x1xf32>
      %193 = vector.shape_cast %192 : vector<1x8x1xf32> to vector<8x1xf32>
      %194 = tpu.reciprocal %193 {approx = true} : vector<8x1xf32> -> vector<8x1xf32>
      %c1_135 = arith.constant 1 : index
      %c0_136 = arith.constant 0 : index
      %c0_137 = arith.constant 0 : index
      %195 = vector.load %arg9[%c1_135, %c0_136, %c0_137] : memref<4x8x8xf32, #tpu.memory_space<vmem>>, vector<1x8x8xf32>
      %196 = vector.shape_cast %195 : vector<1x8x8xf32> to vector<8x8xf32>
      %197 = vector.broadcast %194 : vector<8x1xf32> to vector<8x8xf32>
      %198 = arith.mulf %196, %197 : vector<8x8xf32>
      %c0_138 = arith.constant 0 : index
      %c0_139 = arith.constant 0 : index
      %c8_140 = arith.constant 8 : index
      %199 = vector.load %arg6[%c0_138, %c0_139, %c8_140] : memref<1x8x32xf32, #tpu.memory_space<vmem>>, vector<1x8x8xf32>
      %200 = vector.shape_cast %199 : vector<1x8x8xf32> to vector<8x8xf32>
      %201 = vector.shape_cast %198 : vector<8x8xf32> to vector<1x8x8xf32>
      tpu.vector_store %arg6[%c0_138, %c0_139, %c8_140], %201 {strides = array<i32>} : memref<1x8x32xf32, #tpu.memory_space<vmem>>, vector<1x8x8xf32>,
      %c2_141 = arith.constant 2 : index
      %c0_142 = arith.constant 0 : index
      %c0_143 = arith.constant 0 : index
      %202 = vector.load %arg8[%c2_141, %c0_142, %c0_143] : memref<4x8x1xf32, #tpu.memory_space<vmem>>, vector<1x8x1xf32>
      %203 = vector.shape_cast %202 : vector<1x8x1xf32> to vector<8x1xf32>
      %204 = tpu.reciprocal %203 {approx = true} : vector<8x1xf32> -> vector<8x1xf32>
      %c2_144 = arith.constant 2 : index
      %c0_145 = arith.constant 0 : index
      %c0_146 = arith.constant 0 : index
      %205 = vector.load %arg9[%c2_144, %c0_145, %c0_146] : memref<4x8x8xf32, #tpu.memory_space<vmem>>, vector<1x8x8xf32>
      %206 = vector.shape_cast %205 : vector<1x8x8xf32> to vector<8x8xf32>
      %207 = vector.broadcast %204 : vector<8x1xf32> to vector<8x8xf32>
      %208 = arith.mulf %206, %207 : vector<8x8xf32>
      %c0_147 = arith.constant 0 : index
      %c0_148 = arith.constant 0 : index
      %c16_149 = arith.constant 16 : index
      %209 = vector.load %arg6[%c0_147, %c0_148, %c16_149] : memref<1x8x32xf32, #tpu.memory_space<vmem>>, vector<1x8x8xf32>
      %210 = vector.shape_cast %209 : vector<1x8x8xf32> to vector<8x8xf32>
      %211 = vector.shape_cast %208 : vector<8x8xf32> to vector<1x8x8xf32>
      tpu.vector_store %arg6[%c0_147, %c0_148, %c16_149], %211 {strides = array<i32>} : memref<1x8x32xf32, #tpu.memory_space<vmem>>, vector<1x8x8xf32>,
      %c3_150 = arith.constant 3 : index
      %c0_151 = arith.constant 0 : index
      %c0_152 = arith.constant 0 : index
      %212 = vector.load %arg8[%c3_150, %c0_151, %c0_152] : memref<4x8x1xf32, #tpu.memory_space<vmem>>, vector<1x8x1xf32>
      %213 = vector.shape_cast %212 : vector<1x8x1xf32> to vector<8x1xf32>
      %214 = tpu.reciprocal %213 {approx = true} : vector<8x1xf32> -> vector<8x1xf32>
      %c3_153 = arith.constant 3 : index
      %c0_154 = arith.constant 0 : index
      %c0_155 = arith.constant 0 : index
      %215 = vector.load %arg9[%c3_153, %c0_154, %c0_155] : memref<4x8x8xf32, #tpu.memory_space<vmem>>, vector<1x8x8xf32>
      %216 = vector.shape_cast %215 : vector<1x8x8xf32> to vector<8x8xf32>
      %217 = vector.broadcast %214 : vector<8x1xf32> to vector<8x8xf32>
      %218 = arith.mulf %216, %217 : vector<8x8xf32>
      %c0_156 = arith.constant 0 : index
      %c0_157 = arith.constant 0 : index
      %c24_158 = arith.constant 24 : index
      %219 = vector.load %arg6[%c0_156, %c0_157, %c24_158] : memref<1x8x32xf32, #tpu.memory_space<vmem>>, vector<1x8x8xf32>
      %220 = vector.shape_cast %219 : vector<1x8x8xf32> to vector<8x8xf32>
      %221 = vector.shape_cast %218 : vector<8x8xf32> to vector<1x8x8xf32>
      tpu.vector_store %arg6[%c0_156, %c0_157, %c24_158], %221 {strides = array<i32>} : memref<1x8x32xf32, #tpu.memory_space<vmem>>, vector<1x8x8xf32>,
    } else {
    }
    return
  }
  func.func @transform_0(%arg0: i32, %arg1: i32, %arg2: i32) -> (i32, i32, i32) {
    %c0_i32 = arith.constant 0 : i32
    %c0_i32_0 = arith.constant 0 : i32
    return %arg0, %arg1, %c0_i32 : i32, i32, i32
  }
  func.func @transform_1(%arg0: i32, %arg1: i32, %arg2: i32) -> (i32, i32, i32) {
    %c0_i32 = arith.constant 0 : i32
    %c0_i32_0 = arith.constant 0 : i32
    return %arg0, %arg2, %c0_i32 : i32, i32, i32
  }
  func.func @transform_2(%arg0: i32, %arg1: i32, %arg2: i32) -> (i32, i32, i32) {
    %c0_i32 = arith.constant 0 : i32
    %c0_i32_0 = arith.constant 0 : i32
    return %arg0, %arg2, %c0_i32 : i32, i32, i32
  }
  func.func @transform_3(%arg0: i32, %arg1: i32, %arg2: i32) -> (i32, i32, i32) {
    %c0_i32 = arith.constant 0 : i32
    %c0_i32_0 = arith.constant 0 : i32
    return %arg0, %arg1, %c0_i32 : i32, i32, i32
  }
}

module attributes {stable_mosaic.version = 11 : i64} {
  func.func @_ffn_ln_kernel(%arg0: i32, %arg1: i32, %arg2: memref<16x32xf32, #tpu.memory_space<vmem>>, %arg3: memref<32x64xbf16, #tpu.memory_space<vmem>>, %arg4: memref<1x64xf32, #tpu.memory_space<vmem>>, %arg5: memref<64x32xbf16, #tpu.memory_space<vmem>>, %arg6: memref<1x32xf32, #tpu.memory_space<vmem>>, %arg7: memref<1x32xf32, #tpu.memory_space<vmem>>, %arg8: memref<1x32xf32, #tpu.memory_space<vmem>>, %arg9: memref<16x32xf32, #tpu.memory_space<vmem>>, %arg10: memref<16x32xf32, #tpu.memory_space<vmem>>) attributes {dimension_semantics = [#tpu.dimension_semantics<parallel>, #tpu.dimension_semantics<arbitrary>], iteration_bounds = array<i64: 1, 1>, scalar_prefetch = 0 : i64, scratch_operands = 1 : i64, tpu.core_type = #tpu.core_type<tc>, window_params = [{transform_indices = @transform_0, window_bounds = array<i64: 16, 32>}, {transform_indices = @transform_1, window_bounds = array<i64: 32, 64>}, {transform_indices = @transform_2, window_bounds = array<i64: 1, 64>}, {transform_indices = @transform_3, window_bounds = array<i64: 64, 32>}, {pipeline_mode = #tpu.pipeline_mode<synchronous>, transform_indices = @transform_4, window_bounds = array<i64: 1, 32>}, {pipeline_mode = #tpu.pipeline_mode<synchronous>, transform_indices = @transform_5, window_bounds = array<i64: 1, 32>}, {pipeline_mode = #tpu.pipeline_mode<synchronous>, transform_indices = @transform_6, window_bounds = array<i64: 1, 32>}, {transform_indices = @transform_7, window_bounds = array<i64: 16, 32>}]} {
    %c0_i32 = arith.constant 0 : i32
    %0 = arith.cmpi eq, %arg1, %c0_i32 : i32
    %1 = arith.extui %0 : i1 to i32
    %c0_i32_0 = arith.constant 0 : i32
    %2 = arith.cmpi ne, %1, %c0_i32_0 : i32
    scf.if %2 {
      %cst_16 = arith.constant 0.000000e+00 : f32
      %21 = vector.broadcast %cst_16 : f32 to vector<16x32xf32>
      %c0_17 = arith.constant 0 : index
      %c0_18 = arith.constant 0 : index
      %22 = vector.load %arg10[%c0_17, %c0_18] : memref<16x32xf32, #tpu.memory_space<vmem>>, vector<16x32xf32>
      tpu.vector_store %arg10[%c0_17, %c0_18], %21 {strides = array<i32>} : memref<16x32xf32, #tpu.memory_space<vmem>>, vector<16x32xf32>,
    } else {
    }
    %c0 = arith.constant 0 : index
    %c0_1 = arith.constant 0 : index
    %3 = vector.load %arg2[%c0, %c0_1] : memref<16x32xf32, #tpu.memory_space<vmem>>, vector<16x32xf32>
    %4 = arith.truncf %3 : vector<16x32xf32> to vector<16x32xbf16>
    %c0_2 = arith.constant 0 : index
    %c0_3 = arith.constant 0 : index
    %5 = vector.load %arg3[%c0_2, %c0_3] : memref<32x64xbf16, #tpu.memory_space<vmem>>, vector<32x64xbf16>
    %cst = arith.constant dense<0.000000e+00> : vector<16x64xf32>
    %6 = tpu.matmul %4, %5, %cst {dimension_numbers = #tpu.dot_dimension_numbers<[1], [0], [0], [1], [0, 0, 1, 1], [], []>} : vector<16x32xbf16>, vector<32x64xbf16>, vector<16x64xf32> -> vector<16x64xf32>
    %c0_4 = arith.constant 0 : index
    %c0_5 = arith.constant 0 : index
    %7 = vector.load %arg4[%c0_4, %c0_5] : memref<1x64xf32, #tpu.memory_space<vmem>>, vector<1x64xf32>
    %8 = vector.broadcast %7 : vector<1x64xf32> to vector<16x64xf32>
    %9 = arith.addf %6, %8 : vector<16x64xf32>
    %cst_6 = arith.constant 0.000000e+00 : f32
    %10 = vector.broadcast %cst_6 : f32 to vector<16x64xf32>
    %11 = arith.maximumf %9, %10 : vector<16x64xf32>
    %c0_7 = arith.constant 0 : index
    %c0_8 = arith.constant 0 : index
    %12 = vector.load %arg10[%c0_7, %c0_8] : memref<16x32xf32, #tpu.memory_space<vmem>>, vector<16x32xf32>
    %13 = arith.truncf %11 : vector<16x64xf32> to vector<16x64xbf16>
    %c0_9 = arith.constant 0 : index
    %c0_10 = arith.constant 0 : index
    %14 = vector.load %arg5[%c0_9, %c0_10] : memref<64x32xbf16, #tpu.memory_space<vmem>>, vector<64x32xbf16>
    %cst_11 = arith.constant dense<0.000000e+00> : vector<16x32xf32>
    %15 = tpu.matmul %13, %14, %cst_11 {dimension_numbers = #tpu.dot_dimension_numbers<[1], [0], [0], [1], [0, 0, 1, 1], [], []>} : vector<16x64xbf16>, vector<64x32xbf16>, vector<16x32xf32> -> vector<16x32xf32>
    %16 = arith.addf %12, %15 : vector<16x32xf32>
    %c0_12 = arith.constant 0 : index
    %c0_13 = arith.constant 0 : index
    %17 = vector.load %arg10[%c0_12, %c0_13] : memref<16x32xf32, #tpu.memory_space<vmem>>, vector<16x32xf32>
    tpu.vector_store %arg10[%c0_12, %c0_13], %16 {strides = array<i32>} : memref<16x32xf32, #tpu.memory_space<vmem>>, vector<16x32xf32>,
    %c0_i32_14 = arith.constant 0 : i32
    %18 = arith.cmpi eq, %arg1, %c0_i32_14 : i32
    %19 = arith.extui %18 : i1 to i32
    %c0_i32_15 = arith.constant 0 : i32
    %20 = arith.cmpi ne, %19, %c0_i32_15 : i32
    scf.if %20 {
      %c0_16 = arith.constant 0 : index
      %c0_17 = arith.constant 0 : index
      %21 = vector.load %arg10[%c0_16, %c0_17] : memref<16x32xf32, #tpu.memory_space<vmem>>, vector<16x32xf32>
      %c0_18 = arith.constant 0 : index
      %c0_19 = arith.constant 0 : index
      %22 = vector.load %arg6[%c0_18, %c0_19] : memref<1x32xf32, #tpu.memory_space<vmem>>, vector<1x32xf32>
      %23 = vector.broadcast %22 : vector<1x32xf32> to vector<16x32xf32>
      %24 = arith.addf %21, %23 : vector<16x32xf32>
      %c0_20 = arith.constant 0 : index
      %c0_21 = arith.constant 0 : index
      %25 = vector.load %arg2[%c0_20, %c0_21] : memref<16x32xf32, #tpu.memory_space<vmem>>, vector<16x32xf32>
      %26 = arith.addf %24, %25 : vector<16x32xf32>
      %cst_22 = arith.constant dense<0.000000e+00> : vector<16xf32>
      %27 = vector.multi_reduction <add>, %26, %cst_22 [1] : vector<16x32xf32> to vector<16xf32>
      %28 = vector.shape_cast %27 : vector<16xf32> to vector<16x1xf32>
      %cst_23 = arith.constant 3.200000e+01 : f32
      %29 = vector.broadcast %cst_23 : f32 to vector<16x1xf32>
      %30 = arith.divf %28, %29 : vector<16x1xf32>
      %31 = vector.broadcast %30 : vector<16x1xf32> to vector<16x32xf32>
      %32 = arith.subf %26, %31 : vector<16x32xf32>
      %33 = arith.mulf %32, %32 : vector<16x32xf32>
      %cst_24 = arith.constant dense<0.000000e+00> : vector<16xf32>
      %34 = vector.multi_reduction <add>, %33, %cst_24 [1] : vector<16x32xf32> to vector<16xf32>
      %35 = vector.shape_cast %34 : vector<16xf32> to vector<16x1xf32>
      %cst_25 = arith.constant 3.200000e+01 : f32
      %36 = vector.broadcast %cst_25 : f32 to vector<16x1xf32>
      %37 = arith.divf %35, %36 : vector<16x1xf32>
      %38 = vector.broadcast %30 : vector<16x1xf32> to vector<16x32xf32>
      %39 = arith.subf %26, %38 : vector<16x32xf32>
      %cst_26 = arith.constant 9.99999974E-6 : f32
      %40 = vector.broadcast %cst_26 : f32 to vector<16x1xf32>
      %41 = arith.addf %37, %40 : vector<16x1xf32>
      %42 = math.rsqrt %41 : vector<16x1xf32>
      %43 = vector.broadcast %42 : vector<16x1xf32> to vector<16x32xf32>
      %44 = arith.mulf %39, %43 : vector<16x32xf32>
      %c0_27 = arith.constant 0 : index
      %c0_28 = arith.constant 0 : index
      %45 = vector.load %arg7[%c0_27, %c0_28] : memref<1x32xf32, #tpu.memory_space<vmem>>, vector<1x32xf32>
      %46 = vector.broadcast %45 : vector<1x32xf32> to vector<16x32xf32>
      %47 = arith.mulf %44, %46 : vector<16x32xf32>
      %c0_29 = arith.constant 0 : index
      %c0_30 = arith.constant 0 : index
      %48 = vector.load %arg8[%c0_29, %c0_30] : memref<1x32xf32, #tpu.memory_space<vmem>>, vector<1x32xf32>
      %49 = vector.broadcast %48 : vector<1x32xf32> to vector<16x32xf32>
      %50 = arith.addf %47, %49 : vector<16x32xf32>
      %c0_31 = arith.constant 0 : index
      %c0_32 = arith.constant 0 : index
      %51 = vector.load %arg9[%c0_31, %c0_32] : memref<16x32xf32, #tpu.memory_space<vmem>>, vector<16x32xf32>
      tpu.vector_store %arg9[%c0_31, %c0_32], %50 {strides = array<i32>} : memref<16x32xf32, #tpu.memory_space<vmem>>, vector<16x32xf32>,
    } else {
    }
    return
  }
  func.func @transform_0(%arg0: i32, %arg1: i32) -> (i32, i32) {
    %c0_i32 = arith.constant 0 : i32
    %c0_i32_0 = arith.constant 0 : i32
    return %arg0, %c0_i32 : i32, i32
  }
  func.func @transform_1(%arg0: i32, %arg1: i32) -> (i32, i32) {
    %c0_i32 = arith.constant 0 : i32
    %c0_i32_0 = arith.constant 0 : i32
    return %c0_i32, %arg1 : i32, i32
  }
  func.func @transform_2(%arg0: i32, %arg1: i32) -> (i32, i32) {
    %c0_i32 = arith.constant 0 : i32
    %c0_i32_0 = arith.constant 0 : i32
    return %c0_i32, %arg1 : i32, i32
  }
  func.func @transform_3(%arg0: i32, %arg1: i32) -> (i32, i32) {
    %c0_i32 = arith.constant 0 : i32
    %c0_i32_0 = arith.constant 0 : i32
    return %arg1, %c0_i32 : i32, i32
  }
  func.func @transform_4(%arg0: i32, %arg1: i32) -> (i32, i32) {
    %c0_i32 = arith.constant 0 : i32
    %c0_i32_0 = arith.constant 0 : i32
    %c0_i32_1 = arith.constant 0 : i32
    return %c0_i32, %c0_i32_0 : i32, i32
  }
  func.func @transform_5(%arg0: i32, %arg1: i32) -> (i32, i32) {
    %c0_i32 = arith.constant 0 : i32
    %c0_i32_0 = arith.constant 0 : i32
    %c0_i32_1 = arith.constant 0 : i32
    return %c0_i32, %c0_i32_0 : i32, i32
  }
  func.func @transform_6(%arg0: i32, %arg1: i32) -> (i32, i32) {
    %c0_i32 = arith.constant 0 : i32
    %c0_i32_0 = arith.constant 0 : i32
    %c0_i32_1 = arith.constant 0 : i32
    return %c0_i32, %c0_i32_0 : i32, i32
  }
  func.func @transform_7(%arg0: i32, %arg1: i32) -> (i32, i32) {
    %c0_i32 = arith.constant 0 : i32
    %c0_i32_0 = arith.constant 0 : i32
    return %arg0, %c0_i32 : i32, i32
  }
}

</mosaic_0001>

<llo_original>
// kernel: transformer_forward.32
$region0: #{transformer_forward.32}
  #allocation0 [shape = 'u32[]', space=smem, size = 0x4, offset = 0x4, fixed_abs, tag = 'smem constant byte address 0x4 - core index']
  #allocation1 [shape = 'u32[72,128]{1,0:T(1,128)}', space=vmem, size = 0x9000, scoped, tag = 'internal scratch']
  #allocation2 [shape = 'f32[16,96]{1,0:T(8,128)}', space=vmem, size = 0x2000, scoped, tag = 'scratch operand']
  %s0 = inlined_call_operand.vmem [shape: f32[16,32], index: 0, kind: input, shape index: {}]
  %s1 = inlined_call_operand.vmem [shape: bf16[32,96], index: 1, kind: input, shape index: {}]
  %s2 = inlined_call_operand.vmem [shape: f32[1,96], index: 2, kind: input, shape index: {}]
  %s3 = inlined_call_operand.vmem [shape: f32[16,96], index: 3, kind: output, shape index: {}]
  %s4 = sld [smem:[#allocation0]]
  $region30: #{transformer_forward.32} parent=0
    _
  %s6 = ssub.s32 1, %s4
  %s7 = scalar_select 0, %s6, %s4
  // Predicated region
  $region2: #{transformer_forward.32} parent=0 // pred_check
    _
  $region3: #{transformer_forward.32} parent=0 // pred_check_branch
    %9 = sbr.rel (0) target = $region5
  $region4: #{transformer_forward.32} parent=0 // pred_region
    _
  $region5: #{transformer_forward.32} parent=0 // pred_fallthru
    _
  // Predicated region
  $region6: #{transformer_forward.32} parent=0 // pred_check
    _
  $region7: #{transformer_forward.32} parent=0 // pred_check_branch
    %11 = sbr.rel (0) target = $region9
  $region8: #{transformer_forward.32} parent=0 // pred_region
    _
  $region9: #{transformer_forward.32} parent=0 // pred_fallthru
    _
  // Predicated region
  $region10: #{transformer_forward.32} parent=0 // pred_check
    _
  $region11: #{transformer_forward.32} parent=0 // pred_check_branch
    %13 = sbr.rel (0) target = $region13
  $region12: #{transformer_forward.32} parent=0 // pred_region
    _
  $region13: #{transformer_forward.32} parent=0 // pred_fallthru
    _
  %p15 = scmp.eq.s32.totalorder 0, 0
  // Predicated region
  $region14: #{transformer_forward.32} parent=0 // pred_check
    %p16 = pneg %p15
  $region15: #{transformer_forward.32} parent=0 // pred_check_branch
    %18 = sbr.rel (%p16) target = $region17
  $region16: #{transformer_forward.32} parent=0 // pred_region
    %vm19 = vcmask 785408
    %20 = vst.msk [vmem:[#allocation2] sm:$0xff] %vm19, 0.0
    %21 = vst.msk [vmem:[#allocation2 + $0x8] sm:$0xff] %vm19, 0.0
  $region17: #{transformer_forward.32} parent=0 // pred_fallthru
    _
  %v22 = vld [vmem:[#allocation2] sm:$0xff]
  %v23 = vld [vmem:[#allocation2 + $0x8] sm:$0xff]
  %v24 = vld [vmem:[%s0] sm:$0xff]
  %v25 = vld [vmem:[%s0 + $0x8] sm:$0xff]
  %v26 = vpack.c.bf16 %v25, %v24
  %v27 = vld [vmem:[%s1] sm:$0xf]
  %v28 = vld [vmem:[%s1 + $0x4] sm:$0xf]
  %v29 = vld [vmem:[%s1 + $0x8] sm:$0xf]
  %v30 = vld [vmem:[%s1 + $0xc] sm:$0xf]
  %v35 = vunpack.c.l.b16 %v27
  %v36 = vunpack.c.l.b16 %v28
  %v37 = vunpack.c.l.b16 %v29
  %v38 = vunpack.c.l.b16 %v30
  %v39 = vpack.c.b16 %v36, %v35
  %v40 = vpack.c.b16 %v38, %v37
  %vm43 = vcmask 261120
  %v45 = vsel %vm43, %v26, 0
  %47 = vmatpush.bf16.msra.mxu0 0
  %48 = vmatpush.bf16.msra.mxu0 0
  %49 = vmatpush.bf16.msra.mxu0 0
  %50 = vmatpush.bf16.msra.mxu0 0
  %51 = vmatpush.bf16.msra.mxu0 0
  %52 = vmatpush.bf16.msra.mxu0 0
  %53 = vmatpush.bf16.msra.mxu0 %v40
  %54 = vmatpush.bf16.msra.mxu0 %v39
  %55 = vmatmul.bf16.gmra.mxu0 %v45
  %v56 = vpop.f32.mrf.mxu0
  %v57 = vadd.f32 0.0, %v56
  %v58 = vpop.f32.mrf.mxu0
  %v59 = vadd.f32 0.0, %v58
  %60 = vdwg.mxu0
  %v61 = vadd.f32 %v22, %v57
  %v62 = vadd.f32 %v23, %v59
  %vm63 = vcmask 785408
  %64 = vst.msk [vmem:[#allocation2] sm:$0xff] %vm63, %v61
  %65 = vst.msk [vmem:[#allocation2 + $0x8] sm:$0xff] %vm63, %v62
  // Predicated region
  $region18: #{transformer_forward.32} parent=0 // pred_check
    %p66 = pneg %p15
  $region19: #{transformer_forward.32} parent=0 // pred_check_branch
    %68 = sbr.rel (%p66) target = $region21
  $region20: #{transformer_forward.32} parent=0 // pred_region
    %v69 = vld [vmem:[#allocation2] sm:$0xff]
    %v70 = vld [vmem:[#allocation2 + $0x8] sm:$0xff]
    %v71 = vld [vmem:[%s2] sm:$0x1]
    %v73 = vperm.slane %v71, 0
    %v75 = vadd.f32 %v69, %v73
    %v76 = vadd.f32 %v70, %v73
    %77 = vst.msk [vmem:[%s3] sm:$0xff] %vm63, %v75
    %78 = vst.msk [vmem:[%s3 + $0x8] sm:$0xff] %vm63, %v76
  $region21: #{transformer_forward.32} parent=0 // pred_fallthru
    _
  // Predicated region
  $region22: #{transformer_forward.32} parent=0 // pred_check
    _
  $region23: #{transformer_forward.32} parent=0 // pred_check_branch
    %80 = sbr.rel (0) target = $region25
  $region24: #{transformer_forward.32} parent=0 // pred_region
    _
  $region25: #{transformer_forward.32} parent=0 // pred_fallthru
    _
  // Predicated region
  $region26: #{transformer_forward.32} parent=0 // pred_check
    _
  $region27: #{transformer_forward.32} parent=0 // pred_check_branch
    %82 = sbr.rel (0) target = $region29
  $region28: #{transformer_forward.32} parent=0 // pred_region
    _
  $region29: #{transformer_forward.32} parent=0 // pred_fallthru
    _

// kernel: transformer_forward.34
$region0: #{transformer_forward.34}
  #allocation0 [shape = 'u32[]', space=smem, size = 0x4, offset = 0x4, fixed_abs, tag = 'smem constant byte address 0x4 - core index']
  #allocation1 [shape = 'u32[72,128]{1,0:T(1,128)}', space=vmem, size = 0x9000, scoped, tag = 'internal scratch']
  #allocation2 [shape = 'f32[16,32]{1,0:T(8,128)}', space=vmem, size = 0x2000, scoped, tag = 'scratch operand']
  %s0 = inlined_call_operand.vmem [shape: f32[16,32], index: 0, kind: input, shape index: {}]
  %s1 = inlined_call_operand.vmem [shape: bf16[32,32], index: 1, kind: input, shape index: {}]
  %s2 = inlined_call_operand.vmem [shape: f32[1,32], index: 2, kind: input, shape index: {}]
  %s3 = inlined_call_operand.vmem [shape: f32[16,32], index: 3, kind: input, shape index: {}]
  %s4 = inlined_call_operand.vmem [shape: f32[1,32], index: 4, kind: input, shape index: {}]
  %s5 = inlined_call_operand.vmem [shape: f32[1,32], index: 5, kind: input, shape index: {}]
  %s6 = inlined_call_operand.vmem [shape: f32[16,32], index: 6, kind: output, shape index: {}]
  %s7 = sld [smem:[#allocation0]]
  $region42: #{transformer_forward.34} parent=0
    _
  %s9 = ssub.s32 1, %s7
  %s10 = scalar_select 0, %s9, %s7
  // Predicated region
  $region2: #{transformer_forward.34} parent=0 // pred_check
    _
  $region3: #{transformer_forward.34} parent=0 // pred_check_branch
    %12 = sbr.rel (0) target = $region5
  $region4: #{transformer_forward.34} parent=0 // pred_region
    _
  $region5: #{transformer_forward.34} parent=0 // pred_fallthru
    _
  // Predicated region
  $region6: #{transformer_forward.34} parent=0 // pred_check
    _
  $region7: #{transformer_forward.34} parent=0 // pred_check_branch
    %14 = sbr.rel (0) target = $region9
  $region8: #{transformer_forward.34} parent=0 // pred_region
    _
  $region9: #{transformer_forward.34} parent=0 // pred_fallthru
    _
  // Predicated region
  $region10: #{transformer_forward.34} parent=0 // pred_check
    _
  $region11: #{transformer_forward.34} parent=0 // pred_check_branch
    %16 = sbr.rel (0) target = $region13
  $region12: #{transformer_forward.34} parent=0 // pred_region
    _
  $region13: #{transformer_forward.34} parent=0 // pred_fallthru
    _
  // Predicated region
  $region14: #{transformer_forward.34} parent=0 // pred_check
    _
  $region15: #{transformer_forward.34} parent=0 // pred_check_branch
    %18 = sbr.rel (0) target = $region17
  $region16: #{transformer_forward.34} parent=0 // pred_region
    _
  $region17: #{transformer_forward.34} parent=0 // pred_fallthru
    _
  // Predicated region
  $region18: #{transformer_forward.34} parent=0 // pred_check
    _
  $region19: #{transformer_forward.34} parent=0 // pred_check_branch
    %20 = sbr.rel (0) target = $region21
  $region20: #{transformer_forward.34} parent=0 // pred_region
    _
  $region21: #{transformer_forward.34} parent=0 // pred_fallthru
    _
  // Predicated region
  $region22: #{transformer_forward.34} parent=0 // pred_check
    _
  $region23: #{transformer_forward.34} parent=0 // pred_check_branch
    %22 = sbr.rel (0) target = $region25
  $region24: #{transformer_forward.34} parent=0 // pred_region
    _
  $region25: #{transformer_forward.34} parent=0 // pred_fallthru
    _
  %p24 = scmp.eq.s32.totalorder 0, 0
  // Predicated region
  $region26: #{transformer_forward.34} parent=0 // pred_check
    %p25 = pneg %p24
  $region27: #{transformer_forward.34} parent=0 // pred_check_branch
    %27 = sbr.rel (%p25) target = $region29
  $region28: #{transformer_forward.34} parent=0 // pred_region
    %vm28 = vcmask 261120
    %29 = vst.msk [vmem:[#allocation2] sm:$0xff] %vm28, 0.0
    %30 = vst.msk [vmem:[#allocation2 + $0x8] sm:$0xff] %vm28, 0.0
  $region29: #{transformer_forward.34} parent=0 // pred_fallthru
    _
  %v31 = vld [vmem:[#allocation2] sm:$0xff]
  %v32 = vld [vmem:[#allocation2 + $0x8] sm:$0xff]
  %v33 = vld [vmem:[%s0] sm:$0xff]
  %v34 = vld [vmem:[%s0 + $0x8] sm:$0xff]
  %v35 = vpack.c.bf16 %v34, %v33
  %v36 = vld [vmem:[%s1] sm:$0xf]
  %v37 = vld [vmem:[%s1 + $0x4] sm:$0xf]
  %v38 = vld [vmem:[%s1 + $0x8] sm:$0xf]
  %v39 = vld [vmem:[%s1 + $0xc] sm:$0xf]
  %v44 = vunpack.c.l.b16 %v36
  %v45 = vunpack.c.l.b16 %v37
  %v46 = vunpack.c.l.b16 %v38
  %v47 = vunpack.c.l.b16 %v39
  %v48 = vpack.c.b16 %v45, %v44
  %v49 = vpack.c.b16 %v47, %v46
  %vm52 = vcmask 261120
  %v54 = vsel %vm52, %v35, 0
  %56 = vmatpush.bf16.msra.mxu0 0
  %57 = vmatpush.bf16.msra.mxu0 0
  %58 = vmatpush.bf16.msra.mxu0 0
  %59 = vmatpush.bf16.msra.mxu0 0
  %60 = vmatpush.bf16.msra.mxu0 0
  %61 = vmatpush.bf16.msra.mxu0 0
  %62 = vmatpush.bf16.msra.mxu0 %v49
  %63 = vmatpush.bf16.msra.mxu0 %v48
  %64 = vmatmul.bf16.gmra.mxu0 %v54
  %v65 = vpop.f32.mrf.mxu0
  %v66 = vadd.f32 0.0, %v65
  %v67 = vpop.f32.mrf.mxu0
  %v68 = vadd.f32 0.0, %v67
  %69 = vdwg.mxu0
  %v70 = vadd.f32 %v31, %v66
  %v71 = vadd.f32 %v32, %v68
  %72 = vst.msk [vmem:[#allocation2] sm:$0xff] %vm52, %v70
  %73 = vst.msk [vmem:[#allocation2 + $0x8] sm:$0xff] %vm52, %v71
  // Predicated region
  $region30: #{transformer_forward.34} parent=0 // pred_check
    %p74 = pneg %p24
  $region31: #{transformer_forward.34} parent=0 // pred_check_branch
    %76 = sbr.rel (%p74) target = $region33
  $region32: #{transformer_forward.34} parent=0 // pred_region
    %v77 = vld [vmem:[#allocation2] sm:$0xff]
    %v78 = vld [vmem:[#allocation2 + $0x8] sm:$0xff]
    %v79 = vld [vmem:[%s2] sm:$0x1]
    %v81 = vperm.slane %v79, 0
    %v83 = vadd.f32 %v77, %v81
    %v84 = vadd.f32 %v78, %v81
    %v85 = vld [vmem:[%s3] sm:$0xff]
    %v86 = vld [vmem:[%s3 + $0x8] sm:$0xff]
    %v87 = vadd.f32 %v83, %v85
    %v88 = vadd.f32 %v84, %v86
    %v89 = vsel %vm52, %v87, 0.0
    %90 = vadd.xlane.f32.xlu0 %v89
    %v91 = vpop.xlane.xlu0 %90
    %v92 = vsel %vm52, %v88, 0.0
    %93 = vadd.xlane.f32.xlu0 %v92
    %v94 = vpop.xlane.xlu0 %93
    %v95 = vrcp.pop 32.0
    %v96 = vmul.f32 32.0, %v95
    %v97 = vsub.f32 1.0, %v96
    %v98 = vmul.f32 %v95, %v97
    %v99 = vadd.f32 %v95, %v98
    %vm100 = vweird.f32 %v95
    %v101 = vsel %vm100, %v95, %v99
    %v102 = vmul.f32 %v91, %v101
    %v103 = vmul.f32 %v94, %v101
    %v104 = vsub.f32 %v87, %v102
    %v105 = vsub.f32 %v88, %v103
    %v106 = vmul.f32 %v104, %v104
    %v107 = vmul.f32 %v105, %v105
    %v108 = vsel %vm52, %v106, 0.0
    %109 = vadd.xlane.f32.xlu0 %v108
    %v110 = vpop.xlane.xlu0 %109
    %v111 = vsel %vm52, %v107, 0.0
    %112 = vadd.xlane.f32.xlu0 %v111
    %v113 = vpop.xlane.xlu0 %112
    %v114 = vmul.f32 %v110, %v101
    %v115 = vmul.f32 %v113, %v101
    %v116 = vadd.f32 %v114, 1e-05
    %v117 = vadd.f32 %v115, 1e-05
    %v118 = vrsqrt.pop %v116
    %v119 = vmul.f32 %v118, %v116
    %v120 = vmul.f32 %v119, %v118
    %v121 = vmul.f32 0.5, %v120
    %v122 = vsub.f32 1.5, %v121
    %v123 = vmul.f32 %v118, %v122
    %vm124 = vweird.f32 %v116
    %vm125 = vweird.f32 %v118
    %vm126 = vmor %vm124, %vm125
    %v127 = vsel %vm126, %v118, %v123
    %v128 = vrsqrt.pop %v117
    %v129 = vmul.f32 %v128, %v117
    %v130 = vmul.f32 %v129, %v128
    %v131 = vmul.f32 0.5, %v130
    %v132 = vsub.f32 1.5, %v131
    %v133 = vmul.f32 %v128, %v132
    %vm134 = vweird.f32 %v117
    %vm135 = vweird.f32 %v128
    %vm136 = vmor %vm134, %vm135
    %v137 = vsel %vm136, %v128, %v133
    %v138 = vmul.f32 %v104, %v127
    %v139 = vmul.f32 %v105, %v137
    %v140 = vld [vmem:[%s4] sm:$0x1]
    %v142 = vperm.slane %v140, 0
    %v144 = vmul.f32 %v138, %v142
    %v145 = vmul.f32 %v139, %v142
    %v146 = vld [vmem:[%s5] sm:$0x1]
    %v148 = vperm.slane %v146, 0
    %v150 = vadd.f32 %v144, %v148
    %v151 = vadd.f32 %v145, %v148
    %152 = vst.msk [vmem:[%s6] sm:$0xff] %vm52, %v150
    %153 = vst.msk [vmem:[%s6 + $0x8] sm:$0xff] %vm52, %v151
  $region33: #{transformer_forward.34} parent=0 // pred_fallthru
    _
  // Predicated region
  $region34: #{transformer_forward.34} parent=0 // pred_check
    _
  $region35: #{transformer_forward.34} parent=0 // pred_check_branch
    %155 = sbr.rel (0) target = $region37
  $region36: #{transformer_forward.34} parent=0 // pred_region
    _
  $region37: #{transformer_forward.34} parent=0 // pred_fallthru
    _
  // Predicated region
  $region38: #{transformer_forward.34} parent=0 // pred_check
    _
  $region39: #{transformer_forward.34} parent=0 // pred_check_branch
    %157 = sbr.rel (0) target = $region41
  $region40: #{transformer_forward.34} parent=0 // pred_region
    _
  $region41: #{transformer_forward.34} parent=0 // pred_fallthru
    _

// kernel: transformer_forward.35
$region0: #{transformer_forward.35}
  #allocation0 [shape = 'u32[]', space=smem, size = 0x4, offset = 0x4, fixed_abs, tag = 'smem constant byte address 0x4 - core index']
  #allocation1 [shape = 'u32[72,128]{1,0:T(1,128)}', space=vmem, size = 0x9000, scoped, tag = 'internal scratch']
  #allocation2 [shape = 'f32[16,32]{1,0:T(8,128)}', space=vmem, size = 0x2000, scoped, tag = 'scratch operand']
  %s0 = inlined_call_operand.vmem [shape: f32[16,32], index: 0, kind: input, shape index: {}]
  %s1 = inlined_call_operand.vmem [shape: bf16[32,32], index: 1, kind: input, shape index: {}]
  %s2 = inlined_call_operand.vmem [shape: f32[1,32], index: 2, kind: input, shape index: {}]
  %s3 = inlined_call_operand.vmem [shape: f32[16,32], index: 3, kind: output, shape index: {}]
  %s4 = sld [smem:[#allocation0]]
  $region30: #{transformer_forward.35} parent=0
    _
  %s6 = ssub.s32 1, %s4
  %s7 = scalar_select 0, %s6, %s4
  // Predicated region
  $region2: #{transformer_forward.35} parent=0 // pred_check
    _
  $region3: #{transformer_forward.35} parent=0 // pred_check_branch
    %9 = sbr.rel (0) target = $region5
  $region4: #{transformer_forward.35} parent=0 // pred_region
    _
  $region5: #{transformer_forward.35} parent=0 // pred_fallthru
    _
  // Predicated region
  $region6: #{transformer_forward.35} parent=0 // pred_check
    _
  $region7: #{transformer_forward.35} parent=0 // pred_check_branch
    %11 = sbr.rel (0) target = $region9
  $region8: #{transformer_forward.35} parent=0 // pred_region
    _
  $region9: #{transformer_forward.35} parent=0 // pred_fallthru
    _
  // Predicated region
  $region10: #{transformer_forward.35} parent=0 // pred_check
    _
  $region11: #{transformer_forward.35} parent=0 // pred_check_branch
    %13 = sbr.rel (0) target = $region13
  $region12: #{transformer_forward.35} parent=0 // pred_region
    _
  $region13: #{transformer_forward.35} parent=0 // pred_fallthru
    _
  %p15 = scmp.eq.s32.totalorder 0, 0
  // Predicated region
  $region14: #{transformer_forward.35} parent=0 // pred_check
    %p16 = pneg %p15
  $region15: #{transformer_forward.35} parent=0 // pred_check_branch
    %18 = sbr.rel (%p16) target = $region17
  $region16: #{transformer_forward.35} parent=0 // pred_region
    %vm19 = vcmask 261120
    %20 = vst.msk [vmem:[#allocation2] sm:$0xff] %vm19, 0.0
    %21 = vst.msk [vmem:[#allocation2 + $0x8] sm:$0xff] %vm19, 0.0
  $region17: #{transformer_forward.35} parent=0 // pred_fallthru
    _
  %v22 = vld [vmem:[#allocation2] sm:$0xff]
  %v23 = vld [vmem:[#allocation2 + $0x8] sm:$0xff]
  %v24 = vld [vmem:[%s0] sm:$0xff]
  %v25 = vld [vmem:[%s0 + $0x8] sm:$0xff]
  %v26 = vpack.c.bf16 %v25, %v24
  %v27 = vld [vmem:[%s1] sm:$0xf]
  %v28 = vld [vmem:[%s1 + $0x4] sm:$0xf]
  %v29 = vld [vmem:[%s1 + $0x8] sm:$0xf]
  %v30 = vld [vmem:[%s1 + $0xc] sm:$0xf]
  %v35 = vunpack.c.l.b16 %v27
  %v36 = vunpack.c.l.b16 %v28
  %v37 = vunpack.c.l.b16 %v29
  %v38 = vunpack.c.l.b16 %v30
  %v39 = vpack.c.b16 %v36, %v35
  %v40 = vpack.c.b16 %v38, %v37
  %vm43 = vcmask 261120
  %v45 = vsel %vm43, %v26, 0
  %47 = vmatpush.bf16.msra.mxu0 0
  %48 = vmatpush.bf16.msra.mxu0 0
  %49 = vmatpush.bf16.msra.mxu0 0
  %50 = vmatpush.bf16.msra.mxu0 0
  %51 = vmatpush.bf16.msra.mxu0 0
  %52 = vmatpush.bf16.msra.mxu0 0
  %53 = vmatpush.bf16.msra.mxu0 %v40
  %54 = vmatpush.bf16.msra.mxu0 %v39
  %55 = vmatmul.bf16.gmra.mxu0 %v45
  %v56 = vpop.f32.mrf.mxu0
  %v57 = vadd.f32 0.0, %v56
  %v58 = vpop.f32.mrf.mxu0
  %v59 = vadd.f32 0.0, %v58
  %60 = vdwg.mxu0
  %v61 = vadd.f32 %v22, %v57
  %v62 = vadd.f32 %v23, %v59
  %63 = vst.msk [vmem:[#allocation2] sm:$0xff] %vm43, %v61
  %64 = vst.msk [vmem:[#allocation2 + $0x8] sm:$0xff] %vm43, %v62
  // Predicated region
  $region18: #{transformer_forward.35} parent=0 // pred_check
    %p65 = pneg %p15
  $region19: #{transformer_forward.35} parent=0 // pred_check_branch
    %67 = sbr.rel (%p65) target = $region21
  $region20: #{transformer_forward.35} parent=0 // pred_region
    %v68 = vld [vmem:[#allocation2] sm:$0xff]
    %v69 = vld [vmem:[#allocation2 + $0x8] sm:$0xff]
    %v70 = vld [vmem:[%s2] sm:$0x1]
    %v72 = vperm.slane %v70, 0
    %v74 = vadd.f32 %v68, %v72
    %v75 = vadd.f32 %v69, %v72
    %76 = vst.msk [vmem:[%s3] sm:$0xff] %vm43, %v74
    %77 = vst.msk [vmem:[%s3 + $0x8] sm:$0xff] %vm43, %v75
  $region21: #{transformer_forward.35} parent=0 // pred_fallthru
    _
  // Predicated region
  $region22: #{transformer_forward.35} parent=0 // pred_check
    _
  $region23: #{transformer_forward.35} parent=0 // pred_check_branch
    %79 = sbr.rel (0) target = $region25
  $region24: #{transformer_forward.35} parent=0 // pred_region
    _
  $region25: #{transformer_forward.35} parent=0 // pred_fallthru
    _
  // Predicated region
  $region26: #{transformer_forward.35} parent=0 // pred_check
    _
  $region27: #{transformer_forward.35} parent=0 // pred_check_branch
    %81 = sbr.rel (0) target = $region29
  $region28: #{transformer_forward.35} parent=0 // pred_region
    _
  $region29: #{transformer_forward.35} parent=0 // pred_fallthru
    _

// kernel: transformer_forward.33
$region0: #{transformer_forward.33}
  #allocation0 [shape = 'u32[]', space=smem, size = 0x4, offset = 0x4, fixed_abs, tag = 'smem constant byte address 0x4 - core index']
  #allocation1 [shape = 'u32[72,128]{1,0:T(1,128)}', space=vmem, size = 0x9000, scoped, tag = 'internal scratch']
  #allocation2 [shape = 'f32[4,8,1]{2,1,0:T(8,128)}', space=vmem, size = 0x4000, scoped, tag = 'scratch operand']
  #allocation3 [shape = 'f32[4,8,1]{2,1,0:T(8,128)}', space=vmem, size = 0x4000, scoped, tag = 'scratch operand']
  #allocation4 [shape = 'f32[4,8,8]{2,1,0:T(8,128)}', space=vmem, size = 0x4000, scoped, tag = 'scratch operand']
  %s0 = inlined_call_operand.vmem [shape: f32[2,8,32], index: 0, kind: input, shape index: {}]
  %s1 = inlined_call_operand.vmem [shape: f32[2,8,32], index: 1, kind: input, shape index: {}]
  %s2 = inlined_call_operand.vmem [shape: f32[2,8,32], index: 2, kind: input, shape index: {}]
  %s3 = inlined_call_operand.vmem [shape: f32[2,8,32], index: 3, kind: output, shape index: {}]
  %s4 = sld [smem:[#allocation0]]
  $region57: #{transformer_forward.33} parent=0
    _
  %s6 = ssub.s32 1, %s4
  %s7 = scalar_select 0, %s6, %s4
  loop: start=0, step=1, limit=4
  $region2: #{transformer_forward.33} parent=0 // loop_pre_header
    _
  $region3: #{transformer_forward.33} parent=0 // loop_header
    %s9 = sphi 0, %s13
    %p10 = scmp.ge.s32.totalorder %s9, 4
    %s16 = sphi 0, %s35
    %s17 = sphi 0, %s31
    %s18 = sphi 0, %s27
    %s19 = sphi 0, %s16
    %s20 = sphi 0, %s17
    %s21 = sphi 0, %s18
    %s22 = sphi 0, %s19
    %s23 = sphi 0, %s20
    %s24 = sphi 0, %s21
    %s40 = sphi 0, %s42
    %s43 = sphi 0, %s40
    %s44 = sphi 0, %s43
    %s60 = sphi 0, %s44
    %s68 = sphi 0, %s70
    %s71 = sphi 0, %s68
    %s72 = sphi 0, %s71
    %s88 = sphi 0, %s72
    %s96 = sphi 0, %s98
    %s99 = sphi 0, %s96
    %s100 = sphi 0, %s99
    %s116 = sphi 0, %s100
    %s124 = sphi 0, %s126
    %s127 = sphi 0, %s124
    %s128 = sphi 0, %s127
    %s144 = sphi 0, %s128
  $region4: #{transformer_forward.33} parent=0 // loop_header_branch
    %12 = sbr.rel (%p10) target = $region8
  $region5: #{transformer_forward.33} parent=0 // loop_body
    %s14 = ssub.s32 %s9, 1
    %s15 = ssub.s32 %s9, 2
    %s25 = sadd.s32 1, %s18
    %p26 = scmp.ge.s32.totalorder %s25, 1
    %s27 = scalar_select %p26, 0, %s25
    %s28 = sadd.s32 1, %s17
    %s29 = scalar_select %p26, %s28, %s17
    %p30 = scmp.ge.s32.totalorder %s29, 1
    %s31 = scalar_select %p30, 0, %s29
    %s32 = sadd.s32 1, %s16
    %s33 = scalar_select %p30, %s32, %s16
    %p34 = scmp.ge.s32.totalorder %s33, 2
    %s35 = scalar_select %p34, 0, %s33
    %s36 = ssub.s32 %s16, %s35
    %s37 = ssub.s32 %s17, %s31
    %s38 = sor.u32 %s36, %s37
    %p39 = scmp.eq.s32.totalorder %s38, 0
    %s41 = sadd.s32 %s40, 1
    %s42 = scalar_select %p39, %s40, %s41
    %p45 = pneg %p39
    %p46 = scmp.eq.s32.totalorder %s9, 1
    %p47 = por %p45, %p46
    %p48 = scmp.ne.s32.totalorder %s40, %s43
    %p49 = scmp.eq.s32.totalorder %s9, 0
    %p50 = por %p48, %p49
    %p51 = scmp.ne.s32.totalorder %s40, %s43
    %p52 = scmp.eq.s32.totalorder %s14, 1
    %p53 = por %p51, %p52
    %p54 = scmp.ne.s32.totalorder %s43, %s44
    %p55 = scmp.eq.s32.totalorder %s14, 0
    %p56 = por %p54, %p55
    %p57 = scmp.ne.s32.totalorder %s43, %s44
    %p58 = scmp.eq.s32.totalorder %s15, 1
    %p59 = por %p57, %p58
    %p61 = scmp.ne.s32.totalorder %s44, %s60
    %p62 = scmp.eq.s32.totalorder %s15, 0
    %p63 = por %p61, %p62
    %s64 = ssub.s32 %s16, %s35
    %s65 = ssub.s32 %s18, %s27
    %s66 = sor.u32 %s64, %s65
    %p67 = scmp.eq.s32.totalorder %s66, 0
    %s69 = sadd.s32 %s68, 1
    %s70 = scalar_select %p67, %s68, %s69
    %p73 = pneg %p67
    %p74 = scmp.eq.s32.totalorder %s9, 1
    %p75 = por %p73, %p74
    %p76 = scmp.ne.s32.totalorder %s68, %s71
    %p77 = scmp.eq.s32.totalorder %s9, 0
    %p78 = por %p76, %p77
    %p79 = scmp.ne.s32.totalorder %s68, %s71
    %p80 = scmp.eq.s32.totalorder %s14, 1
    %p81 = por %p79, %p80
    %p82 = scmp.ne.s32.totalorder %s71, %s72
    %p83 = scmp.eq.s32.totalorder %s14, 0
    %p84 = por %p82, %p83
    %p85 = scmp.ne.s32.totalorder %s71, %s72
    %p86 = scmp.eq.s32.totalorder %s15, 1
    %p87 = por %p85, %p86
    %p89 = scmp.ne.s32.totalorder %s72, %s88
    %p90 = scmp.eq.s32.totalorder %s15, 0
    %p91 = por %p89, %p90
    %s92 = ssub.s32 %s16, %s35
    %s93 = ssub.s32 %s18, %s27
    %s94 = sor.u32 %s92, %s93
    %p95 = scmp.eq.s32.totalorder %s94, 0
    %s97 = sadd.s32 %s96, 1
    %s98 = scalar_select %p95, %s96, %s97
    %p101 = pneg %p95
    %p102 = scmp.eq.s32.totalorder %s9, 1
    %p103 = por %p101, %p102
    %p104 = scmp.ne.s32.totalorder %s96, %s99
    %p105 = scmp.eq.s32.totalorder %s9, 0
    %p106 = por %p104, %p105
    %p107 = scmp.ne.s32.totalorder %s96, %s99
    %p108 = scmp.eq.s32.totalorder %s14, 1
    %p109 = por %p107, %p108
    %p110 = scmp.ne.s32.totalorder %s99, %s100
    %p111 = scmp.eq.s32.totalorder %s14, 0
    %p112 = por %p110, %p111
    %p113 = scmp.ne.s32.totalorder %s99, %s100
    %p114 = scmp.eq.s32.totalorder %s15, 1
    %p115 = por %p113, %p114
    %p117 = scmp.ne.s32.totalorder %s100, %s116
    %p118 = scmp.eq.s32.totalorder %s15, 0
    %p119 = por %p117, %p118
    %s120 = ssub.s32 %s16, %s35
    %s121 = ssub.s32 %s17, %s31
    %s122 = sor.u32 %s120, %s121
    %p123 = scmp.eq.s32.totalorder %s122, 0
    %s125 = sadd.s32 %s124, 1
    %s126 = scalar_select %p123, %s124, %s125
    %p129 = pneg %p123
    %p130 = scmp.eq.s32.totalorder %s9, 1
    %p131 = por %p129, %p130
    %p132 = scmp.ne.s32.totalorder %s124, %s127
    %p133 = scmp.eq.s32.totalorder %s9, 0
    %p134 = por %p132, %p133
    %p135 = scmp.ne.s32.totalorder %s124, %s127
    %p136 = scmp.eq.s32.totalorder %s14, 1
    %p137 = por %p135, %p136
    %p138 = scmp.ne.s32.totalorder %s127, %s128
    %p139 = scmp.eq.s32.totalorder %s14, 0
    %p140 = por %p138, %p139
    %p141 = scmp.ne.s32.totalorder %s127, %s128
    %p142 = scmp.eq.s32.totalorder %s15, 1
    %p143 = por %p141, %p142
    %p145 = scmp.ne.s32.totalorder %s128, %s144
    %p146 = scmp.eq.s32.totalorder %s15, 0
    %p147 = por %p145, %p146
    %p148 = scmp.le.s32.totalorder 1, %s9
    %p149 = scmp.lt.s32.totalorder %s9, 3
    %p150 = pnand %p148, %p149
    %p151 = pneg %p150
    // Predicated region
    $region9: #{transformer_forward.33} parent=5 // pred_check
      _
    $region10: #{transformer_forward.33} parent=5 // pred_check_branch
      %153 = sbr.rel (%p150) target = $region12
    $region11: #{transformer_forward.33} parent=5 // pred_region
      %s154 = ssub.s32 %s9, 1
    $region12: #{transformer_forward.33} parent=5 // pred_fallthru
      _
    %p155 = scmp.lt.s32.totalorder %s9, 2
    // Predicated region
    $region13: #{transformer_forward.33} parent=5 // pred_check
      %p156 = pneg %p155
    $region14: #{transformer_forward.33} parent=5 // pred_check_branch
      %158 = sbr.rel (%p156) target = $region16
    $region15: #{transformer_forward.33} parent=5 // pred_region
      // Predicated region
      $region17: #{transformer_forward.33} parent=15 // pred_check
        %p159 = pneg %p50
      $region18: #{transformer_forward.33} parent=15 // pred_check_branch
        %161 = sbr.rel (%p159) target = $region20
      $region19: #{transformer_forward.33} parent=15 // pred_region
        %p162 = scmp.lt.s32.totalorder %s16, 1
        %s163 = scalar_select %p162, %s16, 1
        %p164 = scmp.lt.s32.totalorder %s17, 0
        %s165 = scalar_select %p164, %s17, 0
        %s166 = sadd.s32 %s165, %s163
        %s167 = smul.addr %s166, 8
        %s168 = scalar_lea.vmem %s0, %s167
      $region20: #{transformer_forward.33} parent=15 // pred_fallthru
        _
      // Predicated region
      $region21: #{transformer_forward.33} parent=15 // pred_check
        %p169 = pneg %p78
      $region22: #{transformer_forward.33} parent=15 // pred_check_branch
        %171 = sbr.rel (%p169) target = $region24
      $region23: #{transformer_forward.33} parent=15 // pred_region
        %p172 = scmp.lt.s32.totalorder %s16, 1
        %s173 = scalar_select %p172, %s16, 1
        %p174 = scmp.lt.s32.totalorder %s18, 0
        %s175 = scalar_select %p174, %s18, 0
        %s176 = sadd.s32 %s175, %s173
        %s177 = smul.addr %s176, 8
        %s178 = scalar_lea.vmem %s1, %s177
      $region24: #{transformer_forward.33} parent=15 // pred_fallthru
        _
      // Predicated region
      $region25: #{transformer_forward.33} parent=15 // pred_check
        %p179 = pneg %p106
      $region26: #{transformer_forward.33} parent=15 // pred_check_branch
        %181 = sbr.rel (%p179) target = $region28
      $region27: #{transformer_forward.33} parent=15 // pred_region
        %p182 = scmp.lt.s32.totalorder %s16, 1
        %s183 = scalar_select %p182, %s16, 1
        %p184 = scmp.lt.s32.totalorder %s18, 0
        %s185 = scalar_select %p184, %s18, 0
        %s186 = sadd.s32 %s185, %s183
        %s187 = smul.addr %s186, 8
        %s188 = scalar_lea.vmem %s2, %s187
      $region28: #{transformer_forward.33} parent=15 // pred_fallthru
        _
    $region16: #{transformer_forward.33} parent=5 // pred_fallthru
      _
    %p189 = scmp.le.s32.totalorder 1, %s9
    %p190 = scmp.lt.s32.totalorder %s9, 3
    %p191 = pnand %p189, %p190
    %p192 = pneg %p191
    // Predicated region
    $region29: #{transformer_forward.33} parent=5 // pred_check
      _
    $region30: #{transformer_forward.33} parent=5 // pred_check_branch
      %194 = sbr.rel (%p191) target = $region32
    $region31: #{transformer_forward.33} parent=5 // pred_region
      %s195 = ssub.s32 %s9, 1
      %p196 = scmp.lt.s32.totalorder %s19, 1
      %s197 = scalar_select %p196, %s19, 1
      %p198 = scmp.lt.s32.totalorder %s20, 0
      %s199 = scalar_select %p198, %s20, 0
      %s200 = sadd.s32 %s199, %s197
      %s201 = smul.addr %s200, 8
      %s202 = scalar_lea.vmem %s0, %s201
      %p203 = pneg %p56
      %p204 = pneg %p53
      %p205 = scmp.lt.s32.totalorder %s19, 1
      %s206 = scalar_select %p205, %s19, 1
      %p207 = scmp.lt.s32.totalorder %s21, 0
      %s208 = scalar_select %p207, %s21, 0
      %s209 = sadd.s32 %s208, %s206
      %s210 = smul.addr %s209, 8
      %s211 = scalar_lea.vmem %s1, %s210
      %p212 = pneg %p84
      %p213 = pneg %p81
      %p214 = scmp.lt.s32.totalorder %s19, 1
      %s215 = scalar_select %p214, %s19, 1
      %p216 = scmp.lt.s32.totalorder %s21, 0
      %s217 = scalar_select %p216, %s21, 0
      %s218 = sadd.s32 %s217, %s215
      %s219 = smul.addr %s218, 8
      %s220 = scalar_lea.vmem %s2, %s219
      %p221 = pneg %p112
      %p222 = pneg %p109
      %p223 = pneg %p140
      %p224 = pneg %p137
      %p225 = scmp.lt.s32.totalorder %s19, 1
      %s226 = scalar_select %p225, %s19, 1
      %p227 = scmp.lt.s32.totalorder %s20, 0
      %s228 = scalar_select %p227, %s20, 0
      %s229 = sadd.s32 %s228, %s226
      %s230 = smul.addr %s229, 8
      %s231 = scalar_lea.vmem %s3, %s230
      %p232 = scmp.lt.s32.totalorder %s19, 1
      %s233 = scalar_select %p232, %s19, 1
      %p234 = scmp.lt.s32.totalorder %s20, 0
      %s235 = scalar_select %p234, %s20, 0
      %s236 = sadd.s32 %s235, %s233
      %s237 = smul.addr %s236, 8
      %s238 = scalar_lea.vmem %s0, %s237
      %p239 = scmp.lt.s32.totalorder %s19, 1
      %s240 = scalar_select %p239, %s19, 1
      %p241 = scmp.lt.s32.totalorder %s21, 0
      %s242 = scalar_select %p241, %s21, 0
      %s243 = sadd.s32 %s242, %s240
      %s244 = smul.addr %s243, 8
      %s245 = scalar_lea.vmem %s1, %s244
      %p246 = scmp.lt.s32.totalorder %s19, 1
      %s247 = scalar_select %p246, %s19, 1
      %p248 = scmp.lt.s32.totalorder %s21, 0
      %s249 = scalar_select %p248, %s21, 0
      %s250 = sadd.s32 %s249, %s247
      %s251 = smul.addr %s250, 8
      %s252 = scalar_lea.vmem %s2, %s251
      %p253 = scmp.lt.s32.totalorder %s19, 1
      %s254 = scalar_select %p253, %s19, 1
      %p255 = scmp.lt.s32.totalorder %s20, 0
      %s256 = scalar_select %p255, %s20, 0
      %s257 = sadd.s32 %s256, %s254
      %s258 = smul.addr %s257, 8
      %s259 = scalar_lea.vmem %s3, %s258
      %p261 = scmp.eq.s32.totalorder %s21, 0
      // Predicated region
      $region33: #{transformer_forward.33} parent=31 // pred_check
        %p262 = pneg %p261
      $region34: #{transformer_forward.33} parent=31 // pred_check_branch
        %264 = sbr.rel (%p262) target = $region36
      $region35: #{transformer_forward.33} parent=31 // pred_region
        %vm265 = vcmask 7168
        %266 = vst.msk [vmem:[#allocation2] sm:$0xff] %vm265, -inf
        %267 = vst.msk [vmem:[#allocation2 + $0x8] sm:$0xff] %vm265, -inf
        %268 = vst.msk [vmem:[#allocation2 + $0x10] sm:$0xff] %vm265, -inf
        %269 = vst.msk [vmem:[#allocation2 + $0x18] sm:$0xff] %vm265, -inf
        %270 = vst.msk [vmem:[#allocation3] sm:$0xff] %vm265, 0.0
        %271 = vst.msk [vmem:[#allocation3 + $0x8] sm:$0xff] %vm265, 0.0
        %272 = vst.msk [vmem:[#allocation3 + $0x10] sm:$0xff] %vm265, 0.0
        %273 = vst.msk [vmem:[#allocation3 + $0x18] sm:$0xff] %vm265, 0.0
        %vm274 = vcmask 64512
        %275 = vst.msk [vmem:[#allocation4] sm:$0xff] %vm274, 0.0
        %276 = vst.msk [vmem:[#allocation4 + $0x8] sm:$0xff] %vm274, 0.0
        %277 = vst.msk [vmem:[#allocation4 + $0x10] sm:$0xff] %vm274, 0.0
        %278 = vst.msk [vmem:[#allocation4 + $0x18] sm:$0xff] %vm274, 0.0
      $region36: #{transformer_forward.33} parent=31 // pred_fallthru
        _
      %s279 = smul.u32 %s21, 8
      %s280 = smul.u32 %s20, 8
      %s281 = sadd.s32 %s280, 7
      %p282 = scmp.le.s32.totalorder %s279, %s281
      // Predicated region
      $region37: #{transformer_forward.33} parent=31 // pred_check
        %p283 = pneg %p282
      $region38: #{transformer_forward.33} parent=31 // pred_check_branch
        %285 = sbr.rel (%p283) target = $region40
      $region39: #{transformer_forward.33} parent=31 // pred_region
        %v286 = vld [vmem:[%s238] sm:$0xff]
        %v287 = vmul.f32 %v286, 0.35355338
        %v288 = vld [vmem:[%s245] sm:$0xff]
        %v289 = vld [vmem:[%s252] sm:$0xff]
        %v290 = vpack.c.bf16 %v287, %v287
        %v291 = vpack.c.bf16 %v288, %v288
        %vm292 = vcmask 64512
        %v294 = vsel %vm292, %v290, 0
        %v297 = vsel %vm292, %v291, 0
        %299 = vmatpush.bf16.xpose.msra.mxu0 0
        %300 = vmatpush.bf16.xpose.msra.mxu0 0
        %301 = vmatpush.bf16.xpose.msra.mxu0 0
        %302 = vmatpush.bf16.xpose.msra.mxu0 0
        %303 = vmatpush.bf16.xpose.msra.mxu0 0
        %304 = vmatpush.bf16.xpose.msra.mxu0 0
        %305 = vmatpush.bf16.xpose.msra.mxu0 0
        %306 = vmatpush.bf16.xpose.msra.mxu0 %v297
        %307 = vmatmul.bf16.gmra.mxu0 %v294
        %v308 = vpop.f32.mrf.mxu0
        %v309 = vadd.f32 0.0, %v308
        %v310 = vpop.f32.mrf.mxu0
        %311 = vdwg.mxu0
        %v312 = vlaneseq
        %v313 = vshrl.u32 %v312, 7
        %v314 = vstv %s280
        %v315 = vadd.s32 %v314, %v313
        %v316 = vlaneseq
        %v317 = vand.u32 %v316, 127
        %v318 = vstv %s279
        %v319 = vadd.s32 %v318, %v317
        %vm320 = vcmp.le.s32.totalorder %v319, %v315
        %v321 = vsel %vm320, %v309, -1e+30
        %v322 = vld [vmem:[#allocation2] sm:$0xff]
        %v323 = vsel %vm292, %v321, -inf
        %324 = vmax.xlane.f32.xlu0 %v323
        %v325 = vpop.xlane.xlu0 %324
        %v326 = vmax.f32 %v322, %v325
        %v327 = vsub.f32 %v322, %v326
        %v328 = vmul.f32 %v327, 1.442695
        %v329 = vpow.pop %v328
        %331 = vset.pattern.permute.xlu0 0
        %332 = vperm.xlu0 %331, %v326
        %v333 = vpop.permute.xlu0 %332
        %v335 = vsub.f32 %v321, %v333
        %v336 = vmul.f32 %v335, 1.442695
        %v337 = vpow.pop %v336
        %v338 = vld [vmem:[#allocation3] sm:$0xff]
        %v339 = vmul.f32 %v329, %v338
        %v340 = vsel %vm292, %v337, 0.0
        %341 = vadd.xlane.f32.xlu0 %v340
        %v342 = vpop.xlane.xlu0 %341
        %v343 = vadd.f32 %v339, %v342
        %vm344 = vcmask 7168
        %345 = vst.msk [vmem:[#allocation3] sm:$0xff] %vm344, %v343
        %v346 = vpack.c.bf16 %v337, %v337
        %v347 = vpack.c.bf16 %v289, %v289
        %v349 = vsel %vm292, %v346, 0
        %vm351 = vcmask 1043456
        %v353 = vsel %vm351, %v347, 0
        %355 = vmatpush.bf16.msra.mxu0 0
        %356 = vmatpush.bf16.msra.mxu0 0
        %357 = vmatpush.bf16.msra.mxu0 0
        %358 = vmatpush.bf16.msra.mxu0 0
        %359 = vmatpush.bf16.msra.mxu0 0
        %360 = vmatpush.bf16.msra.mxu0 0
        %361 = vmatpush.bf16.msra.mxu0 0
        %362 = vmatpush.bf16.msra.mxu0 %v353
        %363 = vmatmul.bf16.gmra.mxu0 %v349
        %v364 = vpop.f32.mrf.mxu0
        %v365 = vadd.f32 0.0, %v364
        %v366 = vpop.f32.mrf.mxu0
        %367 = vdwg.mxu0
        %v368 = vld [vmem:[#allocation4] sm:$0xff]
        %370 = vset.pattern.permute.xlu0 0
        %371 = vperm.xlu0 %370, %v329
        %v372 = vpop.permute.xlu0 %371
        %v374 = vmul.f32 %v372, %v368
        %v375 = vadd.f32 %v374, %v365
        %376 = vst.msk [vmem:[#allocation4] sm:$0xff] %vm292, %v375
        %377 = vst.msk [vmem:[#allocation2] sm:$0xff] %vm344, %v326
        %v378 = vld [vmem:[%s238] sm:$0xff]
        %v379 = vmul.f32 %v378, 0.35355338
        %v380 = vld [vmem:[%s245] sm:$0xff]
        %v381 = vld [vmem:[%s252] sm:$0xff]
        %v382 = vpack.c.bf16 %v379, %v379
        %v383 = vpack.c.bf16 %v380, %v380
        %385 = vrot.lane.b32.xlu0 %v382, 120
        %v386 = vpop.permute.xlu0 %385
        %388 = vrot.lane.b32.xlu0 %v383, 120
        %v389 = vpop.permute.xlu0 %388
        %v391 = vsel %vm292, %v386, 0
        %v394 = vsel %vm292, %v389, 0
        %396 = vmatpush.bf16.xpose.msra.mxu0 0
        %397 = vmatpush.bf16.xpose.msra.mxu0 0
        %398 = vmatpush.bf16.xpose.msra.mxu0 0
        %399 = vmatpush.bf16.xpose.msra.mxu0 0
        %400 = vmatpush.bf16.xpose.msra.mxu0 0
        %401 = vmatpush.bf16.xpose.msra.mxu0 0
        %402 = vmatpush.bf16.xpose.msra.mxu0 0
        %403 = vmatpush.bf16.xpose.msra.mxu0 %v394
        %404 = vmatmul.bf16.gmra.mxu0 %v391
        %v405 = vpop.f32.mrf.mxu0
        %v406 = vadd.f32 0.0, %v405
        %v407 = vpop.f32.mrf.mxu0
        %408 = vdwg.mxu0
        %v409 = vsel %vm320, %v406, -1e+30
        %s410 = scalar_lea.vmem [#allocation2], 8
        %v411 = vld [vmem:[%s410] sm:$0xff]
        %v412 = vsel %vm292, %v409, -inf
        %413 = vmax.xlane.f32.xlu0 %v412
        %v414 = vpop.xlane.xlu0 %413
        %v415 = vmax.f32 %v411, %v414
        %v416 = vsub.f32 %v411, %v415
        %v417 = vmul.f32 %v416, 1.442695
        %v418 = vpow.pop %v417
        %420 = vset.pattern.permute.xlu0 0
        %421 = vperm.xlu0 %420, %v415
        %v422 = vpop.permute.xlu0 %421
        %v424 = vsub.f32 %v409, %v422
        %v425 = vmul.f32 %v424, 1.442695
        %v426 = vpow.pop %v425
        %s427 = scalar_lea.vmem [#allocation3], 8
        %v428 = vld [vmem:[%s427] sm:$0xff]
        %v429 = vmul.f32 %v418, %v428
        %v430 = vsel %vm292, %v426, 0.0
        %431 = vadd.xlane.f32.xlu0 %v430
        %v432 = vpop.xlane.xlu0 %431
        %v433 = vadd.f32 %v429, %v432
        %434 = vst.msk [vmem:[%s427] sm:$0xff] %vm344, %v433
        %v435 = vpack.c.bf16 %v426, %v426
        %v436 = vpack.c.bf16 %v381, %v381
        %438 = vrot.lane.b32.xlu0 %v436, 120
        %v439 = vpop.permute.xlu0 %438
        %v441 = vsel %vm292, %v435, 0
        %v444 = vsel %vm351, %v439, 0
        %446 = vmatpush.bf16.msra.mxu0 0
        %447 = vmatpush.bf16.msra.mxu0 0
        %448 = vmatpush.bf16.msra.mxu0 0
        %449 = vmatpush.bf16.msra.mxu0 0
        %450 = vmatpush.bf16.msra.mxu0 0
        %451 = vmatpush.bf16.msra.mxu0 0
        %452 = vmatpush.bf16.msra.mxu0 0
        %453 = vmatpush.bf16.msra.mxu0 %v444
        %454 = vmatmul.bf16.gmra.mxu0 %v441
        %v455 = vpop.f32.mrf.mxu0
        %v456 = vadd.f32 0.0, %v455
        %v457 = vpop.f32.mrf.mxu0
        %458 = vdwg.mxu0
        %s459 = scalar_lea.vmem [#allocation4], 8
        %v460 = vld [vmem:[%s459] sm:$0xff]
        %462 = vset.pattern.permute.xlu0 0
        %463 = vperm.xlu0 %462, %v418
        %v464 = vpop.permute.xlu0 %463
        %v466 = vmul.f32 %v464, %v460
        %v467 = vadd.f32 %v466, %v456
        %468 = vst.msk [vmem:[%s459] sm:$0xff] %vm292, %v467
        %469 = vst.msk [vmem:[%s410] sm:$0xff] %vm344, %v415
        %v470 = vld [vmem:[%s238] sm:$0xff]
        %v471 = vmul.f32 %v470, 0.35355338
        %v472 = vld [vmem:[%s245] sm:$0xff]
        %v473 = vld [vmem:[%s252] sm:$0xff]
        %v474 = vpack.c.bf16 %v471, %v471
        %v475 = vpack.c.bf16 %v472, %v472
        %477 = vrot.lane.b32.xlu0 %v474, 112
        %v478 = vpop.permute.xlu0 %477
        %480 = vrot.lane.b32.xlu0 %v475, 112
        %v481 = vpop.permute.xlu0 %480
        %v483 = vsel %vm292, %v478, 0
        %v486 = vsel %vm292, %v481, 0
        %488 = vmatpush.bf16.xpose.msra.mxu0 0
        %489 = vmatpush.bf16.xpose.msra.mxu0 0
        %490 = vmatpush.bf16.xpose.msra.mxu0 0
        %491 = vmatpush.bf16.xpose.msra.mxu0 0
        %492 = vmatpush.bf16.xpose.msra.mxu0 0
        %493 = vmatpush.bf16.xpose.msra.mxu0 0
        %494 = vmatpush.bf16.xpose.msra.mxu0 0
        %495 = vmatpush.bf16.xpose.msra.mxu0 %v486
        %496 = vmatmul.bf16.gmra.mxu0 %v483
        %v497 = vpop.f32.mrf.mxu0
        %v498 = vadd.f32 0.0, %v497
        %v499 = vpop.f32.mrf.mxu0
        %500 = vdwg.mxu0
        %v501 = vsel %vm320, %v498, -1e+30
        %s502 = scalar_lea.vmem [#allocation2], 16
        %v503 = vld [vmem:[%s502] sm:$0xff]
        %v504 = vsel %vm292, %v501, -inf
        %505 = vmax.xlane.f32.xlu0 %v504
        %v506 = vpop.xlane.xlu0 %505
        %v507 = vmax.f32 %v503, %v506
        %v508 = vsub.f32 %v503, %v507
        %v509 = vmul.f32 %v508, 1.442695
        %v510 = vpow.pop %v509
        %512 = vset.pattern.permute.xlu0 0
        %513 = vperm.xlu0 %512, %v507
        %v514 = vpop.permute.xlu0 %513
        %v516 = vsub.f32 %v501, %v514
        %v517 = vmul.f32 %v516, 1.442695
        %v518 = vpow.pop %v517
        %s519 = scalar_lea.vmem [#allocation3], 16
        %v520 = vld [vmem:[%s519] sm:$0xff]
        %v521 = vmul.f32 %v510, %v520
        %v522 = vsel %vm292, %v518, 0.0
        %523 = vadd.xlane.f32.xlu0 %v522
        %v524 = vpop.xlane.xlu0 %523
        %v525 = vadd.f32 %v521, %v524
        %526 = vst.msk [vmem:[%s519] sm:$0xff] %vm344, %v525
        %v527 = vpack.c.bf16 %v518, %v518
        %v528 = vpack.c.bf16 %v473, %v473
        %530 = vrot.lane.b32.xlu0 %v528, 112
        %v531 = vpop.permute.xlu0 %530
        %v533 = vsel %vm292, %v527, 0
        %v536 = vsel %vm351, %v531, 0
        %538 = vmatpush.bf16.msra.mxu0 0
        %539 = vmatpush.bf16.msra.mxu0 0
        %540 = vmatpush.bf16.msra.mxu0 0
        %541 = vmatpush.bf16.msra.mxu0 0
        %542 = vmatpush.bf16.msra.mxu0 0
        %543 = vmatpush.bf16.msra.mxu0 0
        %544 = vmatpush.bf16.msra.mxu0 0
        %545 = vmatpush.bf16.msra.mxu0 %v536
        %546 = vmatmul.bf16.gmra.mxu0 %v533
        %v547 = vpop.f32.mrf.mxu0
        %v548 = vadd.f32 0.0, %v547
        %v549 = vpop.f32.mrf.mxu0
        %550 = vdwg.mxu0
        %s551 = scalar_lea.vmem [#allocation4], 16
        %v552 = vld [vmem:[%s551] sm:$0xff]
        %554 = vset.pattern.permute.xlu0 0
        %555 = vperm.xlu0 %554, %v510
        %v556 = vpop.permute.xlu0 %555
        %v558 = vmul.f32 %v556, %v552
        %v559 = vadd.f32 %v558, %v548
        %560 = vst.msk [vmem:[%s551] sm:$0xff] %vm292, %v559
        %561 = vst.msk [vmem:[%s502] sm:$0xff] %vm344, %v507
        %v562 = vld [vmem:[%s238] sm:$0xff]
        %v563 = vmul.f32 %v562, 0.35355338
        %v564 = vld [vmem:[%s245] sm:$0xff]
        %v565 = vld [vmem:[%s252] sm:$0xff]
        %v566 = vpack.c.bf16 %v563, %v563
        %v567 = vpack.c.bf16 %v564, %v564
        %569 = vrot.lane.b32.xlu0 %v566, 104
        %v570 = vpop.permute.xlu0 %569
        %572 = vrot.lane.b32.xlu0 %v567, 104
        %v573 = vpop.permute.xlu0 %572
        %v575 = vsel %vm292, %v570, 0
        %v578 = vsel %vm292, %v573, 0
        %580 = vmatpush.bf16.xpose.msra.mxu0 0
        %581 = vmatpush.bf16.xpose.msra.mxu0 0
        %582 = vmatpush.bf16.xpose.msra.mxu0 0
        %583 = vmatpush.bf16.xpose.msra.mxu0 0
        %584 = vmatpush.bf16.xpose.msra.mxu0 0
        %585 = vmatpush.bf16.xpose.msra.mxu0 0
        %586 = vmatpush.bf16.xpose.msra.mxu0 0
        %587 = vmatpush.bf16.xpose.msra.mxu0 %v578
        %588 = vmatmul.bf16.gmra.mxu0 %v575
        %v589 = vpop.f32.mrf.mxu0
        %v590 = vadd.f32 0.0, %v589
        %v591 = vpop.f32.mrf.mxu0
        %592 = vdwg.mxu0
        %v593 = vsel %vm320, %v590, -1e+30
        %s594 = scalar_lea.vmem [#allocation2], 24
        %v595 = vld [vmem:[%s594] sm:$0xff]
        %v596 = vsel %vm292, %v593, -inf
        %597 = vmax.xlane.f32.xlu0 %v596
        %v598 = vpop.xlane.xlu0 %597
        %v599 = vmax.f32 %v595, %v598
        %v600 = vsub.f32 %v595, %v599
        %v601 = vmul.f32 %v600, 1.442695
        %v602 = vpow.pop %v601
        %604 = vset.pattern.permute.xlu0 0
        %605 = vperm.xlu0 %604, %v599
        %v606 = vpop.permute.xlu0 %605
        %v608 = vsub.f32 %v593, %v606
        %v609 = vmul.f32 %v608, 1.442695
        %v610 = vpow.pop %v609
        %s611 = scalar_lea.vmem [#allocation3], 24
        %v612 = vld [vmem:[%s611] sm:$0xff]
        %v613 = vmul.f32 %v602, %v612
        %v614 = vsel %vm292, %v610, 0.0
        %615 = vadd.xlane.f32.xlu0 %v614
        %v616 = vpop.xlane.xlu0 %615
        %v617 = vadd.f32 %v613, %v616
        %618 = vst.msk [vmem:[%s611] sm:$0xff] %vm344, %v617
        %v619 = vpack.c.bf16 %v610, %v610
        %v620 = vpack.c.bf16 %v565, %v565
        %622 = vrot.lane.b32.xlu0 %v620, 104
        %v623 = vpop.permute.xlu0 %622
        %v625 = vsel %vm292, %v619, 0
        %v628 = vsel %vm351, %v623, 0
        %630 = vmatpush.bf16.msra.mxu0 0
        %631 = vmatpush.bf16.msra.mxu0 0
        %632 = vmatpush.bf16.msra.mxu0 0
        %633 = vmatpush.bf16.msra.mxu0 0
        %634 = vmatpush.bf16.msra.mxu0 0
        %635 = vmatpush.bf16.msra.mxu0 0
        %636 = vmatpush.bf16.msra.mxu0 0
        %637 = vmatpush.bf16.msra.mxu0 %v628
        %638 = vmatmul.bf16.gmra.mxu0 %v625
        %v639 = vpop.f32.mrf.mxu0
        %v640 = vadd.f32 0.0, %v639
        %v641 = vpop.f32.mrf.mxu0
        %642 = vdwg.mxu0
        %s643 = scalar_lea.vmem [#allocation4], 24
        %v644 = vld [vmem:[%s643] sm:$0xff]
        %646 = vset.pattern.permute.xlu0 0
        %647 = vperm.xlu0 %646, %v602
        %v648 = vpop.permute.xlu0 %647
        %v650 = vmul.f32 %v648, %v644
        %v651 = vadd.f32 %v650, %v640
        %652 = vst.msk [vmem:[%s643] sm:$0xff] %vm292, %v651
        %653 = vst.msk [vmem:[%s594] sm:$0xff] %vm344, %v599
      $region40: #{transformer_forward.33} parent=31 // pred_fallthru
        _
      // Predicated region
      $region41: #{transformer_forward.33} parent=31 // pred_check
        %p654 = pneg %p261
      $region42: #{transformer_forward.33} parent=31 // pred_check_branch
        %656 = sbr.rel (%p654) target = $region44
      $region43: #{transformer_forward.33} parent=31 // pred_region
        %v657 = vld [vmem:[#allocation3] sm:$0xff]
        %v658 = vrcp.pop %v657
        %v659 = vld [vmem:[#allocation4] sm:$0xff]
        %661 = vset.pattern.permute.xlu0 0
        %662 = vperm.xlu0 %661, %v658
        %v663 = vpop.permute.xlu0 %662
        %v665 = vmul.f32 %v659, %v663
        %vm666 = vcmask 64512
        %667 = vst.msk [vmem:[%s259] sm:$0xff] %vm666, %v665
        %s668 = scalar_lea.vmem [#allocation3], 8
        %v669 = vld [vmem:[%s668] sm:$0xff]
        %v670 = vrcp.pop %v669
        %s671 = scalar_lea.vmem [#allocation4], 8
        %v672 = vld [vmem:[%s671] sm:$0xff]
        %674 = vset.pattern.permute.xlu0 0
        %675 = vperm.xlu0 %674, %v670
        %v676 = vpop.permute.xlu0 %675
        %v678 = vmul.f32 %v672, %v676
        %680 = vrot.lane.b32.xlu0 %v678, 8
        %v681 = vpop.permute.xlu0 %680
        %vm683 = vcmask 130112
        %684 = vst.msk [vmem:[%s259] sm:$0xff] %vm683, %v681
        %s685 = scalar_lea.vmem [#allocation3], 16
        %v686 = vld [vmem:[%s685] sm:$0xff]
        %v687 = vrcp.pop %v686
        %s688 = scalar_lea.vmem [#allocation4], 16
        %v689 = vld [vmem:[%s688] sm:$0xff]
        %691 = vset.pattern.permute.xlu0 0
        %692 = vperm.xlu0 %691, %v687
        %v693 = vpop.permute.xlu0 %692
        %v695 = vmul.f32 %v689, %v693
        %697 = vrot.lane.b32.xlu0 %v695, 16
        %v698 = vpop.permute.xlu0 %697
        %vm700 = vcmask 195712
        %701 = vst.msk [vmem:[%s259] sm:$0xff] %vm700, %v698
        %s702 = scalar_lea.vmem [#allocation3], 24
        %v703 = vld [vmem:[%s702] sm:$0xff]
        %v704 = vrcp.pop %v703
        %s705 = scalar_lea.vmem [#allocation4], 24
        %v706 = vld [vmem:[%s705] sm:$0xff]
        %708 = vset.pattern.permute.xlu0 0
        %709 = vperm.xlu0 %708, %v704
        %v710 = vpop.permute.xlu0 %709
        %v712 = vmul.f32 %v706, %v710
        %714 = vrot.lane.b32.xlu0 %v712, 24
        %v715 = vpop.permute.xlu0 %714
        %vm717 = vcmask 261312
        %718 = vst.msk [vmem:[%s259] sm:$0xff] %vm717, %v715
      $region44: #{transformer_forward.33} parent=31 // pred_fallthru
        _
      %p719 = scmp.lt.s32.totalorder %s19, 1
      %s720 = scalar_select %p719, %s19, 1
      %p721 = scmp.lt.s32.totalorder %s20, 0
      %s722 = scalar_select %p721, %s20, 0
      %s723 = sadd.s32 %s722, %s720
      %s724 = smul.addr %s723, 8
      %s725 = scalar_lea.vmem %s3, %s724
      // Predicated region
      $region45: #{transformer_forward.33} parent=31 // pred_check
        %p726 = pneg %p137
      $region46: #{transformer_forward.33} parent=31 // pred_check_branch
        %728 = sbr.rel (%p726) target = $region48
      $region47: #{transformer_forward.33} parent=31 // pred_region
        _
      $region48: #{transformer_forward.33} parent=31 // pred_fallthru
        _
    $region32: #{transformer_forward.33} parent=5 // pred_fallthru
      _
    %p729 = scmp.le.s32.totalorder 2, %s9
    // Predicated region
    $region49: #{transformer_forward.33} parent=5 // pred_check
      %p730 = pneg %p729
    $region50: #{transformer_forward.33} parent=5 // pred_check_branch
      %732 = sbr.rel (%p730) target = $region52
    $region51: #{transformer_forward.33} parent=5 // pred_region
      %s733 = ssub.s32 %s9, 2
      // Predicated region
      $region53: #{transformer_forward.33} parent=51 // pred_check
        %p734 = pneg %p143
      $region54: #{transformer_forward.33} parent=51 // pred_check_branch
        %736 = sbr.rel (%p734) target = $region56
      $region55: #{transformer_forward.33} parent=51 // pred_region
        %p737 = scmp.lt.s32.totalorder %s22, 1
        %s738 = scalar_select %p737, %s22, 1
        %p739 = scmp.lt.s32.totalorder %s23, 0
        %s740 = scalar_select %p739, %s23, 0
        %s741 = sadd.s32 %s740, %s738
        %s742 = smul.addr %s741, 8
        %s743 = scalar_lea.vmem %s3, %s742
      $region56: #{transformer_forward.33} parent=51 // pred_fallthru
        _
    $region52: #{transformer_forward.33} parent=5 // pred_fallthru
      _
  $region6: #{transformer_forward.33} parent=0 // loop_footer
    %s13 = sadd.s32 1, %s9
  $region7: #{transformer_forward.33} parent=0 // loop_footer_branch
    %8 = sbr.rel target = $region3
  $region8: #{transformer_forward.33} parent=0 // loop_exit
    _

// kernel: transformer_forward.36
$region0: #{transformer_forward.36}
  #allocation0 [shape = 'u32[]', space=smem, size = 0x4, offset = 0x4, fixed_abs, tag = 'smem constant byte address 0x4 - core index']
  #allocation1 [shape = 'u32[72,128]{1,0:T(1,128)}', space=vmem, size = 0x9000, scoped, tag = 'internal scratch']
  #allocation2 [shape = 'f32[16,64]{1,0:T(8,128)}', space=vmem, size = 0x2000, scoped, tag = 'scratch operand']
  %s0 = inlined_call_operand.vmem [shape: f32[16,32], index: 0, kind: input, shape index: {}]
  %s1 = inlined_call_operand.vmem [shape: bf16[32,64], index: 1, kind: input, shape index: {}]
  %s2 = inlined_call_operand.vmem [shape: f32[1,64], index: 2, kind: input, shape index: {}]
  %s3 = inlined_call_operand.vmem [shape: f32[16,64], index: 3, kind: output, shape index: {}]
  %s4 = sld [smem:[#allocation0]]
  $region30: #{transformer_forward.36} parent=0
    _
  %s6 = ssub.s32 1, %s4
  %s7 = scalar_select 0, %s6, %s4
  // Predicated region
  $region2: #{transformer_forward.36} parent=0 // pred_check
    _
  $region3: #{transformer_forward.36} parent=0 // pred_check_branch
    %9 = sbr.rel (0) target = $region5
  $region4: #{transformer_forward.36} parent=0 // pred_region
    _
  $region5: #{transformer_forward.36} parent=0 // pred_fallthru
    _
  // Predicated region
  $region6: #{transformer_forward.36} parent=0 // pred_check
    _
  $region7: #{transformer_forward.36} parent=0 // pred_check_branch
    %11 = sbr.rel (0) target = $region9
  $region8: #{transformer_forward.36} parent=0 // pred_region
    _
  $region9: #{transformer_forward.36} parent=0 // pred_fallthru
    _
  // Predicated region
  $region10: #{transformer_forward.36} parent=0 // pred_check
    _
  $region11: #{transformer_forward.36} parent=0 // pred_check_branch
    %13 = sbr.rel (0) target = $region13
  $region12: #{transformer_forward.36} parent=0 // pred_region
    _
  $region13: #{transformer_forward.36} parent=0 // pred_fallthru
    _
  %p15 = scmp.eq.s32.totalorder 0, 0
  // Predicated region
  $region14: #{transformer_forward.36} parent=0 // pred_check
    %p16 = pneg %p15
  $region15: #{transformer_forward.36} parent=0 // pred_check_branch
    %18 = sbr.rel (%p16) target = $region17
  $region16: #{transformer_forward.36} parent=0 // pred_region
    %vm19 = vcmask 523264
    %20 = vst.msk [vmem:[#allocation2] sm:$0xff] %vm19, 0.0
    %21 = vst.msk [vmem:[#allocation2 + $0x8] sm:$0xff] %vm19, 0.0
  $region17: #{transformer_forward.36} parent=0 // pred_fallthru
    _
  %v22 = vld [vmem:[#allocation2] sm:$0xff]
  %v23 = vld [vmem:[#allocation2 + $0x8] sm:$0xff]
  %v24 = vld [vmem:[%s0] sm:$0xff]
  %v25 = vld [vmem:[%s0 + $0x8] sm:$0xff]
  %v26 = vpack.c.bf16 %v25, %v24
  %v27 = vld [vmem:[%s1] sm:$0xf]
  %v28 = vld [vmem:[%s1 + $0x4] sm:$0xf]
  %v29 = vld [vmem:[%s1 + $0x8] sm:$0xf]
  %v30 = vld [vmem:[%s1 + $0xc] sm:$0xf]
  %v35 = vunpack.c.l.b16 %v27
  %v36 = vunpack.c.l.b16 %v28
  %v37 = vunpack.c.l.b16 %v29
  %v38 = vunpack.c.l.b16 %v30
  %v39 = vpack.c.b16 %v36, %v35
  %v40 = vpack.c.b16 %v38, %v37
  %vm43 = vcmask 261120
  %v45 = vsel %vm43, %v26, 0
  %47 = vmatpush.bf16.msra.mxu0 0
  %48 = vmatpush.bf16.msra.mxu0 0
  %49 = vmatpush.bf16.msra.mxu0 0
  %50 = vmatpush.bf16.msra.mxu0 0
  %51 = vmatpush.bf16.msra.mxu0 0
  %52 = vmatpush.bf16.msra.mxu0 0
  %53 = vmatpush.bf16.msra.mxu0 %v40
  %54 = vmatpush.bf16.msra.mxu0 %v39
  %55 = vmatmul.bf16.gmra.mxu0 %v45
  %v56 = vpop.f32.mrf.mxu0
  %v57 = vadd.f32 0.0, %v56
  %v58 = vpop.f32.mrf.mxu0
  %v59 = vadd.f32 0.0, %v58
  %60 = vdwg.mxu0
  %v61 = vadd.f32 %v22, %v57
  %v62 = vadd.f32 %v23, %v59
  %vm63 = vcmask 523264
  %64 = vst.msk [vmem:[#allocation2] sm:$0xff] %vm63, %v61
  %65 = vst.msk [vmem:[#allocation2 + $0x8] sm:$0xff] %vm63, %v62
  // Predicated region
  $region18: #{transformer_forward.36} parent=0 // pred_check
    %p66 = pneg %p15
  $region19: #{transformer_forward.36} parent=0 // pred_check_branch
    %68 = sbr.rel (%p66) target = $region21
  $region20: #{transformer_forward.36} parent=0 // pred_region
    %v69 = vld [vmem:[#allocation2] sm:$0xff]
    %v70 = vld [vmem:[#allocation2 + $0x8] sm:$0xff]
    %v71 = vld [vmem:[%s2] sm:$0x1]
    %v73 = vperm.slane %v71, 0
    %v75 = vadd.f32 %v69, %v73
    %v76 = vadd.f32 %v70, %v73
    %77 = vst.msk [vmem:[%s3] sm:$0xff] %vm63, %v75
    %78 = vst.msk [vmem:[%s3 + $0x8] sm:$0xff] %vm63, %v76
  $region21: #{transformer_forward.36} parent=0 // pred_fallthru
    _
  // Predicated region
  $region22: #{transformer_forward.36} parent=0 // pred_check
    _
  $region23: #{transformer_forward.36} parent=0 // pred_check_branch
    %80 = sbr.rel (0) target = $region25
  $region24: #{transformer_forward.36} parent=0 // pred_region
    _
  $region25: #{transformer_forward.36} parent=0 // pred_fallthru
    _
  // Predicated region
  $region26: #{transformer_forward.36} parent=0 // pred_check
    _
  $region27: #{transformer_forward.36} parent=0 // pred_check_branch
    %82 = sbr.rel (0) target = $region29
  $region28: #{transformer_forward.36} parent=0 // pred_region
    _
  $region29: #{transformer_forward.36} parent=0 // pred_fallthru
    _

// kernel: transformer_forward.27
$region0: #{transformer_forward.27}
  #allocation0 [shape = 'u32[]', space=smem, size = 0x4, offset = 0x4, fixed_abs, tag = 'smem constant byte address 0x4 - core index']
  #allocation1 [shape = 'u32[72,128]{1,0:T(1,128)}', space=vmem, size = 0x9000, scoped, tag = 'internal scratch']
  #allocation2 [shape = 'f32[16,32]{1,0:T(8,128)}', space=vmem, size = 0x2000, scoped, tag = 'scratch operand']
  %s0 = inlined_call_operand.vmem [shape: f32[16,32], index: 0, kind: input, shape index: {}]
  %s1 = inlined_call_operand.vmem [shape: bf16[32,64], index: 1, kind: input, shape index: {}]
  %s2 = inlined_call_operand.vmem [shape: f32[1,64], index: 2, kind: input, shape index: {}]
  %s3 = inlined_call_operand.vmem [shape: bf16[64,32], index: 3, kind: input, shape index: {}]
  %s4 = inlined_call_operand.vmem [shape: f32[1,32], index: 4, kind: input, shape index: {}]
  %s5 = inlined_call_operand.vmem [shape: f32[1,32], index: 5, kind: input, shape index: {}]
  %s6 = inlined_call_operand.vmem [shape: f32[1,32], index: 6, kind: input, shape index: {}]
  %s7 = inlined_call_operand.vmem [shape: f32[16,32], index: 7, kind: output, shape index: {}]
  %s8 = sld [smem:[#allocation0]]
  $region46: #{transformer_forward.27} parent=0
    _
  %s10 = ssub.s32 1, %s8
  %s11 = scalar_select 0, %s10, %s8
  // Predicated region
  $region2: #{transformer_forward.27} parent=0 // pred_check
    _
  $region3: #{transformer_forward.27} parent=0 // pred_check_branch
    %13 = sbr.rel (0) target = $region5
  $region4: #{transformer_forward.27} parent=0 // pred_region
    _
  $region5: #{transformer_forward.27} parent=0 // pred_fallthru
    _
  // Predicated region
  $region6: #{transformer_forward.27} parent=0 // pred_check
    _
  $region7: #{transformer_forward.27} parent=0 // pred_check_branch
    %15 = sbr.rel (0) target = $region9
  $region8: #{transformer_forward.27} parent=0 // pred_region
    _
  $region9: #{transformer_forward.27} parent=0 // pred_fallthru
    _
  // Predicated region
  $region10: #{transformer_forward.27} parent=0 // pred_check
    _
  $region11: #{transformer_forward.27} parent=0 // pred_check_branch
    %17 = sbr.rel (0) target = $region13
  $region12: #{transformer_forward.27} parent=0 // pred_region
    _
  $region13: #{transformer_forward.27} parent=0 // pred_fallthru
    _
  // Predicated region
  $region14: #{transformer_forward.27} parent=0 // pred_check
    _
  $region15: #{transformer_forward.27} parent=0 // pred_check_branch
    %19 = sbr.rel (0) target = $region17
  $region16: #{transformer_forward.27} parent=0 // pred_region
    _
  $region17: #{transformer_forward.27} parent=0 // pred_fallthru
    _
  // Predicated region
  $region18: #{transformer_forward.27} parent=0 // pred_check
    _
  $region19: #{transformer_forward.27} parent=0 // pred_check_branch
    %21 = sbr.rel (0) target = $region21
  $region20: #{transformer_forward.27} parent=0 // pred_region
    _
  $region21: #{transformer_forward.27} parent=0 // pred_fallthru
    _
  // Predicated region
  $region22: #{transformer_forward.27} parent=0 // pred_check
    _
  $region23: #{transformer_forward.27} parent=0 // pred_check_branch
    %23 = sbr.rel (0) target = $region25
  $region24: #{transformer_forward.27} parent=0 // pred_region
    _
  $region25: #{transformer_forward.27} parent=0 // pred_fallthru
    _
  // Predicated region
  $region26: #{transformer_forward.27} parent=0 // pred_check
    _
  $region27: #{transformer_forward.27} parent=0 // pred_check_branch
    %25 = sbr.rel (0) target = $region29
  $region28: #{transformer_forward.27} parent=0 // pred_region
    _
  $region29: #{transformer_forward.27} parent=0 // pred_fallthru
    _
  %p27 = scmp.eq.s32.totalorder 0, 0
  // Predicated region
  $region30: #{transformer_forward.27} parent=0 // pred_check
    %p28 = pneg %p27
  $region31: #{transformer_forward.27} parent=0 // pred_check_branch
    %30 = sbr.rel (%p28) target = $region33
  $region32: #{transformer_forward.27} parent=0 // pred_region
    %vm31 = vcmask 261120
    %32 = vst.msk [vmem:[#allocation2] sm:$0xff] %vm31, 0.0
    %33 = vst.msk [vmem:[#allocation2 + $0x8] sm:$0xff] %vm31, 0.0
  $region33: #{transformer_forward.27} parent=0 // pred_fallthru
    _
  %v34 = vld [vmem:[%s0] sm:$0xff]
  %v35 = vld [vmem:[%s0 + $0x8] sm:$0xff]
  %v36 = vpack.c.bf16 %v35, %v34
  %v37 = vld [vmem:[%s1] sm:$0xf]
  %v38 = vld [vmem:[%s1 + $0x4] sm:$0xf]
  %v39 = vld [vmem:[%s1 + $0x8] sm:$0xf]
  %v40 = vld [vmem:[%s1 + $0xc] sm:$0xf]
  %v41 = vld [vmem:[%s2] sm:$0x1]
  %v43 = vperm.slane %v41, 0
  %v49 = vunpack.c.l.b16 %v37
  %v50 = vunpack.c.l.b16 %v38
  %v51 = vunpack.c.l.b16 %v39
  %v52 = vunpack.c.l.b16 %v40
  %v53 = vpack.c.b16 %v50, %v49
  %v54 = vpack.c.b16 %v52, %v51
  %vm57 = vcmask 261120
  %v59 = vsel %vm57, %v36, 0
  %61 = vmatpush.bf16.msra.mxu0 0
  %62 = vmatpush.bf16.msra.mxu0 0
  %63 = vmatpush.bf16.msra.mxu0 0
  %64 = vmatpush.bf16.msra.mxu0 0
  %65 = vmatpush.bf16.msra.mxu0 0
  %66 = vmatpush.bf16.msra.mxu0 0
  %67 = vmatpush.bf16.msra.mxu0 %v54
  %68 = vmatpush.bf16.msra.mxu0 %v53
  %69 = vmatmul.bf16.gmra.mxu0 %v59
  %v70 = vpop.f32.mrf.mxu0
  %v71 = vadd.f32 %v43, %v70
  %v72 = vpop.f32.mrf.mxu0
  %v73 = vadd.f32 %v43, %v72
  %74 = vdwg.mxu0
  %v75 = vmax.f32 %v71, 0.0
  %v76 = vmax.f32 %v73, 0.0
  %v77 = vld [vmem:[#allocation2] sm:$0xff]
  %v78 = vld [vmem:[#allocation2 + $0x8] sm:$0xff]
  %v79 = vpack.c.bf16 %v76, %v75
  %v80 = vld [vmem:[%s3] sm:$0xf]
  %v81 = vld [vmem:[%s3 + $0x4] sm:$0xf]
  %v82 = vld [vmem:[%s3 + $0x8] sm:$0xf]
  %v83 = vld [vmem:[%s3 + $0xc] sm:$0xf]
  %v84 = vld [vmem:[%s3 + $0x10] sm:$0xf]
  %v85 = vld [vmem:[%s3 + $0x14] sm:$0xf]
  %v86 = vld [vmem:[%s3 + $0x18] sm:$0xf]
  %v87 = vld [vmem:[%s3 + $0x1c] sm:$0xf]
  %v96 = vunpack.c.l.b16 %v80
  %v97 = vunpack.c.l.b16 %v81
  %v98 = vunpack.c.l.b16 %v82
  %v99 = vunpack.c.l.b16 %v83
  %v100 = vunpack.c.l.b16 %v84
  %v101 = vunpack.c.l.b16 %v85
  %v102 = vunpack.c.l.b16 %v86
  %v103 = vunpack.c.l.b16 %v87
  %v104 = vpack.c.b16 %v97, %v96
  %v105 = vpack.c.b16 %v99, %v98
  %v106 = vpack.c.b16 %v101, %v100
  %v107 = vpack.c.b16 %v103, %v102
  %vm112 = vcmask 523264
  %v114 = vsel %vm112, %v79, 0
  %116 = vmatpush.bf16.msra.mxu0 0
  %117 = vmatpush.bf16.msra.mxu0 0
  %118 = vmatpush.bf16.msra.mxu0 0
  %119 = vmatpush.bf16.msra.mxu0 0
  %120 = vmatpush.bf16.msra.mxu0 %v107
  %121 = vmatpush.bf16.msra.mxu0 %v106
  %122 = vmatpush.bf16.msra.mxu0 %v105
  %123 = vmatpush.bf16.msra.mxu0 %v104
  %124 = vmatmul.bf16.gmra.mxu0 %v114
  %v125 = vpop.f32.mrf.mxu0
  %v126 = vadd.f32 0.0, %v125
  %v127 = vpop.f32.mrf.mxu0
  %v128 = vadd.f32 0.0, %v127
  %129 = vdwg.mxu0
  %v130 = vadd.f32 %v77, %v126
  %v131 = vadd.f32 %v78, %v128
  %132 = vst.msk [vmem:[#allocation2] sm:$0xff] %vm57, %v130
  %133 = vst.msk [vmem:[#allocation2 + $0x8] sm:$0xff] %vm57, %v131
  // Predicated region
  $region34: #{transformer_forward.27} parent=0 // pred_check
    %p134 = pneg %p27
  $region35: #{transformer_forward.27} parent=0 // pred_check_branch
    %136 = sbr.rel (%p134) target = $region37
  $region36: #{transformer_forward.27} parent=0 // pred_region
    %v137 = vld [vmem:[#allocation2] sm:$0xff]
    %v138 = vld [vmem:[#allocation2 + $0x8] sm:$0xff]
    %v139 = vld [vmem:[%s4] sm:$0x1]
    %v141 = vperm.slane %v139, 0
    %v143 = vadd.f32 %v137, %v141
    %v144 = vadd.f32 %v138, %v141
    %v145 = vld [vmem:[%s0] sm:$0xff]
    %v146 = vld [vmem:[%s0 + $0x8] sm:$0xff]
    %v147 = vadd.f32 %v143, %v145
    %v148 = vadd.f32 %v144, %v146
    %v149 = vsel %vm57, %v147, 0.0
    %150 = vadd.xlane.f32.xlu0 %v149
    %v151 = vpop.xlane.xlu0 %150
    %v152 = vsel %vm57, %v148, 0.0
    %153 = vadd.xlane.f32.xlu0 %v152
    %v154 = vpop.xlane.xlu0 %153
    %v155 = vrcp.pop 32.0
    %v156 = vmul.f32 32.0, %v155
    %v157 = vsub.f32 1.0, %v156
    %v158 = vmul.f32 %v155, %v157
    %v159 = vadd.f32 %v155, %v158
    %vm160 = vweird.f32 %v155
    %v161 = vsel %vm160, %v155, %v159
    %v162 = vmul.f32 %v151, %v161
    %v163 = vmul.f32 %v154, %v161
    %v164 = vsub.f32 %v147, %v162
    %v165 = vsub.f32 %v148, %v163
    %v166 = vmul.f32 %v164, %v164
    %v167 = vmul.f32 %v165, %v165
    %v168 = vsel %vm57, %v166, 0.0
    %169 = vadd.xlane.f32.xlu0 %v168
    %v170 = vpop.xlane.xlu0 %169
    %v171 = vsel %vm57, %v167, 0.0
    %172 = vadd.xlane.f32.xlu0 %v171
    %v173 = vpop.xlane.xlu0 %172
    %v174 = vmul.f32 %v170, %v161
    %v175 = vmul.f32 %v173, %v161
    %v176 = vadd.f32 %v174, 1e-05
    %v177 = vadd.f32 %v175, 1e-05
    %v178 = vrsqrt.pop %v176
    %v179 = vmul.f32 %v178, %v176
    %v180 = vmul.f32 %v179, %v178
    %v181 = vmul.f32 0.5, %v180
    %v182 = vsub.f32 1.5, %v181
    %v183 = vmul.f32 %v178, %v182
    %vm184 = vweird.f32 %v176
    %vm185 = vweird.f32 %v178
    %vm186 = vmor %vm184, %vm185
    %v187 = vsel %vm186, %v178, %v183
    %v188 = vrsqrt.pop %v177
    %v189 = vmul.f32 %v188, %v177
    %v190 = vmul.f32 %v189, %v188
    %v191 = vmul.f32 0.5, %v190
    %v192 = vsub.f32 1.5, %v191
    %v193 = vmul.f32 %v188, %v192
    %vm194 = vweird.f32 %v177
    %vm195 = vweird.f32 %v188
    %vm196 = vmor %vm194, %vm195
    %v197 = vsel %vm196, %v188, %v193
    %v198 = vmul.f32 %v164, %v187
    %v199 = vmul.f32 %v165, %v197
    %v200 = vld [vmem:[%s5] sm:$0x1]
    %v202 = vperm.slane %v200, 0
    %v204 = vmul.f32 %v198, %v202
    %v205 = vmul.f32 %v199, %v202
    %v206 = vld [vmem:[%s6] sm:$0x1]
    %v208 = vperm.slane %v206, 0
    %v210 = vadd.f32 %v204, %v208
    %v211 = vadd.f32 %v205, %v208
    %212 = vst.msk [vmem:[%s7] sm:$0xff] %vm57, %v210
    %213 = vst.msk [vmem:[%s7 + $0x8] sm:$0xff] %vm57, %v211
  $region37: #{transformer_forward.27} parent=0 // pred_fallthru
    _
  // Predicated region
  $region38: #{transformer_forward.27} parent=0 // pred_check
    _
  $region39: #{transformer_forward.27} parent=0 // pred_check_branch
    %215 = sbr.rel (0) target = $region41
  $region40: #{transformer_forward.27} parent=0 // pred_region
    _
  $region41: #{transformer_forward.27} parent=0 // pred_fallthru
    _
  // Predicated region
  $region42: #{transformer_forward.27} parent=0 // pred_check
    _
  $region43: #{transformer_forward.27} parent=0 // pred_check_branch
    %217 = sbr.rel (0) target = $region45
  $region44: #{transformer_forward.27} parent=0 // pred_region
    _
  $region45: #{transformer_forward.27} parent=0 // pred_fallthru
    _

// kernel: transformer_forward.25
$region0: #{transformer_forward.25}
  #allocation0 [shape = 'u32[]', space=smem, size = 0x4, offset = 0x4, fixed_abs, tag = 'smem constant byte address 0x4 - core index']
  #allocation1 [shape = 'u32[72,128]{1,0:T(1,128)}', space=vmem, size = 0x9000, scoped, tag = 'internal scratch']
  #allocation2 [shape = 'f32[4,8,1]{2,1,0:T(8,128)}', space=vmem, size = 0x4000, scoped, tag = 'scratch operand']
  #allocation3 [shape = 'f32[4,8,1]{2,1,0:T(8,128)}', space=vmem, size = 0x4000, scoped, tag = 'scratch operand']
  #allocation4 [shape = 'f32[4,8,8]{2,1,0:T(8,128)}', space=vmem, size = 0x4000, scoped, tag = 'scratch operand']
  %s0 = inlined_call_operand.vmem [shape: f32[2,8,32], index: 0, kind: input, shape index: {}]
  %s1 = inlined_call_operand.vmem [shape: f32[2,8,32], index: 1, kind: input, shape index: {}]
  %s2 = inlined_call_operand.vmem [shape: f32[2,8,32], index: 2, kind: input, shape index: {}]
  %s3 = inlined_call_operand.vmem [shape: f32[2,8,32], index: 3, kind: output, shape index: {}]
  %s4 = sld [smem:[#allocation0]]
  $region53: #{transformer_forward.25} parent=0
    _
  %s6 = ssub.s32 1, %s4
  %s7 = scalar_select 0, %s6, %s4
  loop: start=0, step=1, limit=4
  $region2: #{transformer_forward.25} parent=0 // loop_pre_header
    _
  $region3: #{transformer_forward.25} parent=0 // loop_header
    %s9 = sphi 0, %s13
    %p10 = scmp.ge.s32.totalorder %s9, 4
    %s16 = sphi 0, %s35
    %s17 = sphi 0, %s31
    %s18 = sphi 0, %s27
    %s19 = sphi 0, %s16
    %s20 = sphi 0, %s17
    %s21 = sphi 0, %s18
    %s22 = sphi 0, %s19
    %s23 = sphi 0, %s20
    %s24 = sphi 0, %s21
    %s40 = sphi 0, %s42
    %s43 = sphi 0, %s40
    %s44 = sphi 0, %s43
    %s60 = sphi 0, %s44
    %s68 = sphi 0, %s70
    %s71 = sphi 0, %s68
    %s72 = sphi 0, %s71
    %s88 = sphi 0, %s72
    %s96 = sphi 0, %s98
    %s99 = sphi 0, %s96
    %s100 = sphi 0, %s99
    %s116 = sphi 0, %s100
    %s124 = sphi 0, %s126
    %s127 = sphi 0, %s124
    %s128 = sphi 0, %s127
    %s144 = sphi 0, %s128
  $region4: #{transformer_forward.25} parent=0 // loop_header_branch
    %12 = sbr.rel (%p10) target = $region8
  $region5: #{transformer_forward.25} parent=0 // loop_body
    %s14 = ssub.s32 %s9, 1
    %s15 = ssub.s32 %s9, 2
    %s25 = sadd.s32 1, %s18
    %p26 = scmp.ge.s32.totalorder %s25, 1
    %s27 = scalar_select %p26, 0, %s25
    %s28 = sadd.s32 1, %s17
    %s29 = scalar_select %p26, %s28, %s17
    %p30 = scmp.ge.s32.totalorder %s29, 1
    %s31 = scalar_select %p30, 0, %s29
    %s32 = sadd.s32 1, %s16
    %s33 = scalar_select %p30, %s32, %s16
    %p34 = scmp.ge.s32.totalorder %s33, 2
    %s35 = scalar_select %p34, 0, %s33
    %s36 = ssub.s32 %s16, %s35
    %s37 = ssub.s32 %s17, %s31
    %s38 = sor.u32 %s36, %s37
    %p39 = scmp.eq.s32.totalorder %s38, 0
    %s41 = sadd.s32 %s40, 1
    %s42 = scalar_select %p39, %s40, %s41
    %p45 = pneg %p39
    %p46 = scmp.eq.s32.totalorder %s9, 1
    %p47 = por %p45, %p46
    %p48 = scmp.ne.s32.totalorder %s40, %s43
    %p49 = scmp.eq.s32.totalorder %s9, 0
    %p50 = por %p48, %p49
    %p51 = scmp.ne.s32.totalorder %s40, %s43
    %p52 = scmp.eq.s32.totalorder %s14, 1
    %p53 = por %p51, %p52
    %p54 = scmp.ne.s32.totalorder %s43, %s44
    %p55 = scmp.eq.s32.totalorder %s14, 0
    %p56 = por %p54, %p55
    %p57 = scmp.ne.s32.totalorder %s43, %s44
    %p58 = scmp.eq.s32.totalorder %s15, 1
    %p59 = por %p57, %p58
    %p61 = scmp.ne.s32.totalorder %s44, %s60
    %p62 = scmp.eq.s32.totalorder %s15, 0
    %p63 = por %p61, %p62
    %s64 = ssub.s32 %s16, %s35
    %s65 = ssub.s32 %s18, %s27
    %s66 = sor.u32 %s64, %s65
    %p67 = scmp.eq.s32.totalorder %s66, 0
    %s69 = sadd.s32 %s68, 1
    %s70 = scalar_select %p67, %s68, %s69
    %p73 = pneg %p67
    %p74 = scmp.eq.s32.totalorder %s9, 1
    %p75 = por %p73, %p74
    %p76 = scmp.ne.s32.totalorder %s68, %s71
    %p77 = scmp.eq.s32.totalorder %s9, 0
    %p78 = por %p76, %p77
    %p79 = scmp.ne.s32.totalorder %s68, %s71
    %p80 = scmp.eq.s32.totalorder %s14, 1
    %p81 = por %p79, %p80
    %p82 = scmp.ne.s32.totalorder %s71, %s72
    %p83 = scmp.eq.s32.totalorder %s14, 0
    %p84 = por %p82, %p83
    %p85 = scmp.ne.s32.totalorder %s71, %s72
    %p86 = scmp.eq.s32.totalorder %s15, 1
    %p87 = por %p85, %p86
    %p89 = scmp.ne.s32.totalorder %s72, %s88
    %p90 = scmp.eq.s32.totalorder %s15, 0
    %p91 = por %p89, %p90
    %s92 = ssub.s32 %s16, %s35
    %s93 = ssub.s32 %s18, %s27
    %s94 = sor.u32 %s92, %s93
    %p95 = scmp.eq.s32.totalorder %s94, 0
    %s97 = sadd.s32 %s96, 1
    %s98 = scalar_select %p95, %s96, %s97
    %p101 = pneg %p95
    %p102 = scmp.eq.s32.totalorder %s9, 1
    %p103 = por %p101, %p102
    %p104 = scmp.ne.s32.totalorder %s96, %s99
    %p105 = scmp.eq.s32.totalorder %s9, 0
    %p106 = por %p104, %p105
    %p107 = scmp.ne.s32.totalorder %s96, %s99
    %p108 = scmp.eq.s32.totalorder %s14, 1
    %p109 = por %p107, %p108
    %p110 = scmp.ne.s32.totalorder %s99, %s100
    %p111 = scmp.eq.s32.totalorder %s14, 0
    %p112 = por %p110, %p111
    %p113 = scmp.ne.s32.totalorder %s99, %s100
    %p114 = scmp.eq.s32.totalorder %s15, 1
    %p115 = por %p113, %p114
    %p117 = scmp.ne.s32.totalorder %s100, %s116
    %p118 = scmp.eq.s32.totalorder %s15, 0
    %p119 = por %p117, %p118
    %s120 = ssub.s32 %s16, %s35
    %s121 = ssub.s32 %s17, %s31
    %s122 = sor.u32 %s120, %s121
    %p123 = scmp.eq.s32.totalorder %s122, 0
    %s125 = sadd.s32 %s124, 1
    %s126 = scalar_select %p123, %s124, %s125
    %p129 = pneg %p123
    %p130 = scmp.eq.s32.totalorder %s9, 1
    %p131 = por %p129, %p130
    %p132 = scmp.ne.s32.totalorder %s124, %s127
    %p133 = scmp.eq.s32.totalorder %s9, 0
    %p134 = por %p132, %p133
    %p135 = scmp.ne.s32.totalorder %s124, %s127
    %p136 = scmp.eq.s32.totalorder %s14, 1
    %p137 = por %p135, %p136
    %p138 = scmp.ne.s32.totalorder %s127, %s128
    %p139 = scmp.eq.s32.totalorder %s14, 0
    %p140 = por %p138, %p139
    %p141 = scmp.ne.s32.totalorder %s127, %s128
    %p142 = scmp.eq.s32.totalorder %s15, 1
    %p143 = por %p141, %p142
    %p145 = scmp.ne.s32.totalorder %s128, %s144
    %p146 = scmp.eq.s32.totalorder %s15, 0
    %p147 = por %p145, %p146
    %p148 = scmp.le.s32.totalorder 1, %s9
    %p149 = scmp.lt.s32.totalorder %s9, 3
    %p150 = pnand %p148, %p149
    %p151 = pneg %p150
    // Predicated region
    $region9: #{transformer_forward.25} parent=5 // pred_check
      _
    $region10: #{transformer_forward.25} parent=5 // pred_check_branch
      %153 = sbr.rel (%p150) target = $region12
    $region11: #{transformer_forward.25} parent=5 // pred_region
      %s154 = ssub.s32 %s9, 1
    $region12: #{transformer_forward.25} parent=5 // pred_fallthru
      _
    %p155 = scmp.lt.s32.totalorder %s9, 2
    // Predicated region
    $region13: #{transformer_forward.25} parent=5 // pred_check
      %p156 = pneg %p155
    $region14: #{transformer_forward.25} parent=5 // pred_check_branch
      %158 = sbr.rel (%p156) target = $region16
    $region15: #{transformer_forward.25} parent=5 // pred_region
      // Predicated region
      $region17: #{transformer_forward.25} parent=15 // pred_check
        %p159 = pneg %p50
      $region18: #{transformer_forward.25} parent=15 // pred_check_branch
        %161 = sbr.rel (%p159) target = $region20
      $region19: #{transformer_forward.25} parent=15 // pred_region
        %p162 = scmp.lt.s32.totalorder %s16, 1
        %s163 = scalar_select %p162, %s16, 1
        %p164 = scmp.lt.s32.totalorder %s17, 0
        %s165 = scalar_select %p164, %s17, 0
        %s166 = sadd.s32 %s165, %s163
        %s167 = smul.addr %s166, 8
        %s168 = scalar_lea.vmem %s0, %s167
      $region20: #{transformer_forward.25} parent=15 // pred_fallthru
        _
      // Predicated region
      $region21: #{transformer_forward.25} parent=15 // pred_check
        %p169 = pneg %p78
      $region22: #{transformer_forward.25} parent=15 // pred_check_branch
        %171 = sbr.rel (%p169) target = $region24
      $region23: #{transformer_forward.25} parent=15 // pred_region
        %p172 = scmp.lt.s32.totalorder %s16, 1
        %s173 = scalar_select %p172, %s16, 1
        %p174 = scmp.lt.s32.totalorder %s18, 0
        %s175 = scalar_select %p174, %s18, 0
        %s176 = sadd.s32 %s175, %s173
        %s177 = smul.addr %s176, 8
        %s178 = scalar_lea.vmem %s1, %s177
      $region24: #{transformer_forward.25} parent=15 // pred_fallthru
        _
      // Predicated region
      $region25: #{transformer_forward.25} parent=15 // pred_check
        %p179 = pneg %p106
      $region26: #{transformer_forward.25} parent=15 // pred_check_branch
        %181 = sbr.rel (%p179) target = $region28
      $region27: #{transformer_forward.25} parent=15 // pred_region
        %p182 = scmp.lt.s32.totalorder %s16, 1
        %s183 = scalar_select %p182, %s16, 1
        %p184 = scmp.lt.s32.totalorder %s18, 0
        %s185 = scalar_select %p184, %s18, 0
        %s186 = sadd.s32 %s185, %s183
        %s187 = smul.addr %s186, 8
        %s188 = scalar_lea.vmem %s2, %s187
      $region28: #{transformer_forward.25} parent=15 // pred_fallthru
        _
    $region16: #{transformer_forward.25} parent=5 // pred_fallthru
      _
    %p189 = scmp.le.s32.totalorder 1, %s9
    %p190 = scmp.lt.s32.totalorder %s9, 3
    %p191 = pnand %p189, %p190
    %p192 = pneg %p191
    // Predicated region
    $region29: #{transformer_forward.25} parent=5 // pred_check
      _
    $region30: #{transformer_forward.25} parent=5 // pred_check_branch
      %194 = sbr.rel (%p191) target = $region32
    $region31: #{transformer_forward.25} parent=5 // pred_region
      %s195 = ssub.s32 %s9, 1
      %p196 = scmp.lt.s32.totalorder %s19, 1
      %s197 = scalar_select %p196, %s19, 1
      %p198 = scmp.lt.s32.totalorder %s20, 0
      %s199 = scalar_select %p198, %s20, 0
      %s200 = sadd.s32 %s199, %s197
      %s201 = smul.addr %s200, 8
      %s202 = scalar_lea.vmem %s0, %s201
      %p203 = pneg %p56
      %p204 = pneg %p53
      %p205 = scmp.lt.s32.totalorder %s19, 1
      %s206 = scalar_select %p205, %s19, 1
      %p207 = scmp.lt.s32.totalorder %s21, 0
      %s208 = scalar_select %p207, %s21, 0
      %s209 = sadd.s32 %s208, %s206
      %s210 = smul.addr %s209, 8
      %s211 = scalar_lea.vmem %s1, %s210
      %p212 = pneg %p84
      %p213 = pneg %p81
      %p214 = scmp.lt.s32.totalorder %s19, 1
      %s215 = scalar_select %p214, %s19, 1
      %p216 = scmp.lt.s32.totalorder %s21, 0
      %s217 = scalar_select %p216, %s21, 0
      %s218 = sadd.s32 %s217, %s215
      %s219 = smul.addr %s218, 8
      %s220 = scalar_lea.vmem %s2, %s219
      %p221 = pneg %p112
      %p222 = pneg %p109
      %p223 = pneg %p140
      %p224 = pneg %p137
      %p225 = scmp.lt.s32.totalorder %s19, 1
      %s226 = scalar_select %p225, %s19, 1
      %p227 = scmp.lt.s32.totalorder %s20, 0
      %s228 = scalar_select %p227, %s20, 0
      %s229 = sadd.s32 %s228, %s226
      %s230 = smul.addr %s229, 8
      %s231 = scalar_lea.vmem %s3, %s230
      %p232 = scmp.lt.s32.totalorder %s19, 1
      %s233 = scalar_select %p232, %s19, 1
      %p234 = scmp.lt.s32.totalorder %s20, 0
      %s235 = scalar_select %p234, %s20, 0
      %s236 = sadd.s32 %s235, %s233
      %s237 = smul.addr %s236, 8
      %s238 = scalar_lea.vmem %s0, %s237
      %p239 = scmp.lt.s32.totalorder %s19, 1
      %s240 = scalar_select %p239, %s19, 1
      %p241 = scmp.lt.s32.totalorder %s21, 0
      %s242 = scalar_select %p241, %s21, 0
      %s243 = sadd.s32 %s242, %s240
      %s244 = smul.addr %s243, 8
      %s245 = scalar_lea.vmem %s1, %s244
      %p246 = scmp.lt.s32.totalorder %s19, 1
      %s247 = scalar_select %p246, %s19, 1
      %p248 = scmp.lt.s32.totalorder %s21, 0
      %s249 = scalar_select %p248, %s21, 0
      %s250 = sadd.s32 %s249, %s247
      %s251 = smul.addr %s250, 8
      %s252 = scalar_lea.vmem %s2, %s251
      %p253 = scmp.lt.s32.totalorder %s19, 1
      %s254 = scalar_select %p253, %s19, 1
      %p255 = scmp.lt.s32.totalorder %s20, 0
      %s256 = scalar_select %p255, %s20, 0
      %s257 = sadd.s32 %s256, %s254
      %s258 = smul.addr %s257, 8
      %s259 = scalar_lea.vmem %s3, %s258
      %p261 = scmp.eq.s32.totalorder %s21, 0
      // Predicated region
      $region33: #{transformer_forward.25} parent=31 // pred_check
        %p262 = pneg %p261
      $region34: #{transformer_forward.25} parent=31 // pred_check_branch
        %264 = sbr.rel (%p262) target = $region36
      $region35: #{transformer_forward.25} parent=31 // pred_region
        %vm265 = vcmask 7168
        %266 = vst.msk [vmem:[#allocation2] sm:$0xff] %vm265, -inf
        %267 = vst.msk [vmem:[#allocation2 + $0x8] sm:$0xff] %vm265, -inf
        %268 = vst.msk [vmem:[#allocation2 + $0x10] sm:$0xff] %vm265, -inf
        %269 = vst.msk [vmem:[#allocation2 + $0x18] sm:$0xff] %vm265, -inf
        %270 = vst.msk [vmem:[#allocation3] sm:$0xff] %vm265, 0.0
        %271 = vst.msk [vmem:[#allocation3 + $0x8] sm:$0xff] %vm265, 0.0
        %272 = vst.msk [vmem:[#allocation3 + $0x10] sm:$0xff] %vm265, 0.0
        %273 = vst.msk [vmem:[#allocation3 + $0x18] sm:$0xff] %vm265, 0.0
        %vm274 = vcmask 64512
        %275 = vst.msk [vmem:[#allocation4] sm:$0xff] %vm274, 0.0
        %276 = vst.msk [vmem:[#allocation4 + $0x8] sm:$0xff] %vm274, 0.0
        %277 = vst.msk [vmem:[#allocation4 + $0x10] sm:$0xff] %vm274, 0.0
        %278 = vst.msk [vmem:[#allocation4 + $0x18] sm:$0xff] %vm274, 0.0
      $region36: #{transformer_forward.25} parent=31 // pred_fallthru
        _
      %v279 = vld [vmem:[%s238] sm:$0xff]
      %v280 = vmul.f32 %v279, 0.35355338
      %v281 = vld [vmem:[%s245] sm:$0xff]
      %v282 = vld [vmem:[%s252] sm:$0xff]
      %v283 = vpack.c.bf16 %v280, %v280
      %v284 = vpack.c.bf16 %v281, %v281
      %vm285 = vcmask 64512
      %v287 = vsel %vm285, %v283, 0
      %v290 = vsel %vm285, %v284, 0
      %292 = vmatpush.bf16.xpose.msra.mxu0 0
      %293 = vmatpush.bf16.xpose.msra.mxu0 0
      %294 = vmatpush.bf16.xpose.msra.mxu0 0
      %295 = vmatpush.bf16.xpose.msra.mxu0 0
      %296 = vmatpush.bf16.xpose.msra.mxu0 0
      %297 = vmatpush.bf16.xpose.msra.mxu0 0
      %298 = vmatpush.bf16.xpose.msra.mxu0 0
      %299 = vmatpush.bf16.xpose.msra.mxu0 %v290
      %300 = vmatmul.bf16.gmra.mxu0 %v287
      %v301 = vpop.f32.mrf.mxu0
      %v302 = vadd.f32 0.0, %v301
      %v303 = vpop.f32.mrf.mxu0
      %304 = vdwg.mxu0
      %v305 = vld [vmem:[#allocation2] sm:$0xff]
      %v306 = vsel %vm285, %v302, -inf
      %307 = vmax.xlane.f32.xlu0 %v306
      %v308 = vpop.xlane.xlu0 %307
      %v309 = vmax.f32 %v305, %v308
      %v310 = vsub.f32 %v305, %v309
      %v311 = vmul.f32 %v310, 1.442695
      %v312 = vpow.pop %v311
      %314 = vset.pattern.permute.xlu0 0
      %315 = vperm.xlu0 %314, %v309
      %v316 = vpop.permute.xlu0 %315
      %v318 = vsub.f32 %v302, %v316
      %v319 = vmul.f32 %v318, 1.442695
      %v320 = vpow.pop %v319
      %v321 = vld [vmem:[#allocation3] sm:$0xff]
      %v322 = vmul.f32 %v312, %v321
      %v323 = vsel %vm285, %v320, 0.0
      %324 = vadd.xlane.f32.xlu0 %v323
      %v325 = vpop.xlane.xlu0 %324
      %v326 = vadd.f32 %v322, %v325
      %vm327 = vcmask 7168
      %328 = vst.msk [vmem:[#allocation3] sm:$0xff] %vm327, %v326
      %v329 = vpack.c.bf16 %v320, %v320
      %v330 = vpack.c.bf16 %v282, %v282
      %v332 = vsel %vm285, %v329, 0
      %vm334 = vcmask 1043456
      %v336 = vsel %vm334, %v330, 0
      %338 = vmatpush.bf16.msra.mxu0 0
      %339 = vmatpush.bf16.msra.mxu0 0
      %340 = vmatpush.bf16.msra.mxu0 0
      %341 = vmatpush.bf16.msra.mxu0 0
      %342 = vmatpush.bf16.msra.mxu0 0
      %343 = vmatpush.bf16.msra.mxu0 0
      %344 = vmatpush.bf16.msra.mxu0 0
      %345 = vmatpush.bf16.msra.mxu0 %v336
      %346 = vmatmul.bf16.gmra.mxu0 %v332
      %v347 = vpop.f32.mrf.mxu0
      %v348 = vadd.f32 0.0, %v347
      %v349 = vpop.f32.mrf.mxu0
      %350 = vdwg.mxu0
      %v351 = vld [vmem:[#allocation4] sm:$0xff]
      %353 = vset.pattern.permute.xlu0 0
      %354 = vperm.xlu0 %353, %v312
      %v355 = vpop.permute.xlu0 %354
      %v357 = vmul.f32 %v355, %v351
      %v358 = vadd.f32 %v357, %v348
      %359 = vst.msk [vmem:[#allocation4] sm:$0xff] %vm285, %v358
      %360 = vst.msk [vmem:[#allocation2] sm:$0xff] %vm327, %v309
      %v361 = vld [vmem:[%s238] sm:$0xff]
      %v362 = vmul.f32 %v361, 0.35355338
      %v363 = vld [vmem:[%s245] sm:$0xff]
      %v364 = vld [vmem:[%s252] sm:$0xff]
      %v365 = vpack.c.bf16 %v362, %v362
      %v366 = vpack.c.bf16 %v363, %v363
      %368 = vrot.lane.b32.xlu0 %v365, 120
      %v369 = vpop.permute.xlu0 %368
      %371 = vrot.lane.b32.xlu0 %v366, 120
      %v372 = vpop.permute.xlu0 %371
      %v374 = vsel %vm285, %v369, 0
      %v377 = vsel %vm285, %v372, 0
      %379 = vmatpush.bf16.xpose.msra.mxu0 0
      %380 = vmatpush.bf16.xpose.msra.mxu0 0
      %381 = vmatpush.bf16.xpose.msra.mxu0 0
      %382 = vmatpush.bf16.xpose.msra.mxu0 0
      %383 = vmatpush.bf16.xpose.msra.mxu0 0
      %384 = vmatpush.bf16.xpose.msra.mxu0 0
      %385 = vmatpush.bf16.xpose.msra.mxu0 0
      %386 = vmatpush.bf16.xpose.msra.mxu0 %v377
      %387 = vmatmul.bf16.gmra.mxu0 %v374
      %v388 = vpop.f32.mrf.mxu0
      %v389 = vadd.f32 0.0, %v388
      %v390 = vpop.f32.mrf.mxu0
      %391 = vdwg.mxu0
      %s392 = scalar_lea.vmem [#allocation2], 8
      %v393 = vld [vmem:[%s392] sm:$0xff]
      %v394 = vsel %vm285, %v389, -inf
      %395 = vmax.xlane.f32.xlu0 %v394
      %v396 = vpop.xlane.xlu0 %395
      %v397 = vmax.f32 %v393, %v396
      %v398 = vsub.f32 %v393, %v397
      %v399 = vmul.f32 %v398, 1.442695
      %v400 = vpow.pop %v399
      %402 = vset.pattern.permute.xlu0 0
      %403 = vperm.xlu0 %402, %v397
      %v404 = vpop.permute.xlu0 %403
      %v406 = vsub.f32 %v389, %v404
      %v407 = vmul.f32 %v406, 1.442695
      %v408 = vpow.pop %v407
      %s409 = scalar_lea.vmem [#allocation3], 8
      %v410 = vld [vmem:[%s409] sm:$0xff]
      %v411 = vmul.f32 %v400, %v410
      %v412 = vsel %vm285, %v408, 0.0
      %413 = vadd.xlane.f32.xlu0 %v412
      %v414 = vpop.xlane.xlu0 %413
      %v415 = vadd.f32 %v411, %v414
      %416 = vst.msk [vmem:[%s409] sm:$0xff] %vm327, %v415
      %v417 = vpack.c.bf16 %v408, %v408
      %v418 = vpack.c.bf16 %v364, %v364
      %420 = vrot.lane.b32.xlu0 %v418, 120
      %v421 = vpop.permute.xlu0 %420
      %v423 = vsel %vm285, %v417, 0
      %v426 = vsel %vm334, %v421, 0
      %428 = vmatpush.bf16.msra.mxu0 0
      %429 = vmatpush.bf16.msra.mxu0 0
      %430 = vmatpush.bf16.msra.mxu0 0
      %431 = vmatpush.bf16.msra.mxu0 0
      %432 = vmatpush.bf16.msra.mxu0 0
      %433 = vmatpush.bf16.msra.mxu0 0
      %434 = vmatpush.bf16.msra.mxu0 0
      %435 = vmatpush.bf16.msra.mxu0 %v426
      %436 = vmatmul.bf16.gmra.mxu0 %v423
      %v437 = vpop.f32.mrf.mxu0
      %v438 = vadd.f32 0.0, %v437
      %v439 = vpop.f32.mrf.mxu0
      %440 = vdwg.mxu0
      %s441 = scalar_lea.vmem [#allocation4], 8
      %v442 = vld [vmem:[%s441] sm:$0xff]
      %444 = vset.pattern.permute.xlu0 0
      %445 = vperm.xlu0 %444, %v400
      %v446 = vpop.permute.xlu0 %445
      %v448 = vmul.f32 %v446, %v442
      %v449 = vadd.f32 %v448, %v438
      %450 = vst.msk [vmem:[%s441] sm:$0xff] %vm285, %v449
      %451 = vst.msk [vmem:[%s392] sm:$0xff] %vm327, %v397
      %v452 = vld [vmem:[%s238] sm:$0xff]
      %v453 = vmul.f32 %v452, 0.35355338
      %v454 = vld [vmem:[%s245] sm:$0xff]
      %v455 = vld [vmem:[%s252] sm:$0xff]
      %v456 = vpack.c.bf16 %v453, %v453
      %v457 = vpack.c.bf16 %v454, %v454
      %459 = vrot.lane.b32.xlu0 %v456, 112
      %v460 = vpop.permute.xlu0 %459
      %462 = vrot.lane.b32.xlu0 %v457, 112
      %v463 = vpop.permute.xlu0 %462
      %v465 = vsel %vm285, %v460, 0
      %v468 = vsel %vm285, %v463, 0
      %470 = vmatpush.bf16.xpose.msra.mxu0 0
      %471 = vmatpush.bf16.xpose.msra.mxu0 0
      %472 = vmatpush.bf16.xpose.msra.mxu0 0
      %473 = vmatpush.bf16.xpose.msra.mxu0 0
      %474 = vmatpush.bf16.xpose.msra.mxu0 0
      %475 = vmatpush.bf16.xpose.msra.mxu0 0
      %476 = vmatpush.bf16.xpose.msra.mxu0 0
      %477 = vmatpush.bf16.xpose.msra.mxu0 %v468
      %478 = vmatmul.bf16.gmra.mxu0 %v465
      %v479 = vpop.f32.mrf.mxu0
      %v480 = vadd.f32 0.0, %v479
      %v481 = vpop.f32.mrf.mxu0
      %482 = vdwg.mxu0
      %s483 = scalar_lea.vmem [#allocation2], 16
      %v484 = vld [vmem:[%s483] sm:$0xff]
      %v485 = vsel %vm285, %v480, -inf
      %486 = vmax.xlane.f32.xlu0 %v485
      %v487 = vpop.xlane.xlu0 %486
      %v488 = vmax.f32 %v484, %v487
      %v489 = vsub.f32 %v484, %v488
      %v490 = vmul.f32 %v489, 1.442695
      %v491 = vpow.pop %v490
      %493 = vset.pattern.permute.xlu0 0
      %494 = vperm.xlu0 %493, %v488
      %v495 = vpop.permute.xlu0 %494
      %v497 = vsub.f32 %v480, %v495
      %v498 = vmul.f32 %v497, 1.442695
      %v499 = vpow.pop %v498
      %s500 = scalar_lea.vmem [#allocation3], 16
      %v501 = vld [vmem:[%s500] sm:$0xff]
      %v502 = vmul.f32 %v491, %v501
      %v503 = vsel %vm285, %v499, 0.0
      %504 = vadd.xlane.f32.xlu0 %v503
      %v505 = vpop.xlane.xlu0 %504
      %v506 = vadd.f32 %v502, %v505
      %507 = vst.msk [vmem:[%s500] sm:$0xff] %vm327, %v506
      %v508 = vpack.c.bf16 %v499, %v499
      %v509 = vpack.c.bf16 %v455, %v455
      %511 = vrot.lane.b32.xlu0 %v509, 112
      %v512 = vpop.permute.xlu0 %511
      %v514 = vsel %vm285, %v508, 0
      %v517 = vsel %vm334, %v512, 0
      %519 = vmatpush.bf16.msra.mxu0 0
      %520 = vmatpush.bf16.msra.mxu0 0
      %521 = vmatpush.bf16.msra.mxu0 0
      %522 = vmatpush.bf16.msra.mxu0 0
      %523 = vmatpush.bf16.msra.mxu0 0
      %524 = vmatpush.bf16.msra.mxu0 0
      %525 = vmatpush.bf16.msra.mxu0 0
      %526 = vmatpush.bf16.msra.mxu0 %v517
      %527 = vmatmul.bf16.gmra.mxu0 %v514
      %v528 = vpop.f32.mrf.mxu0
      %v529 = vadd.f32 0.0, %v528
      %v530 = vpop.f32.mrf.mxu0
      %531 = vdwg.mxu0
      %s532 = scalar_lea.vmem [#allocation4], 16
      %v533 = vld [vmem:[%s532] sm:$0xff]
      %535 = vset.pattern.permute.xlu0 0
      %536 = vperm.xlu0 %535, %v491
      %v537 = vpop.permute.xlu0 %536
      %v539 = vmul.f32 %v537, %v533
      %v540 = vadd.f32 %v539, %v529
      %541 = vst.msk [vmem:[%s532] sm:$0xff] %vm285, %v540
      %542 = vst.msk [vmem:[%s483] sm:$0xff] %vm327, %v488
      %v543 = vld [vmem:[%s238] sm:$0xff]
      %v544 = vmul.f32 %v543, 0.35355338
      %v545 = vld [vmem:[%s245] sm:$0xff]
      %v546 = vld [vmem:[%s252] sm:$0xff]
      %v547 = vpack.c.bf16 %v544, %v544
      %v548 = vpack.c.bf16 %v545, %v545
      %550 = vrot.lane.b32.xlu0 %v547, 104
      %v551 = vpop.permute.xlu0 %550
      %553 = vrot.lane.b32.xlu0 %v548, 104
      %v554 = vpop.permute.xlu0 %553
      %v556 = vsel %vm285, %v551, 0
      %v559 = vsel %vm285, %v554, 0
      %561 = vmatpush.bf16.xpose.msra.mxu0 0
      %562 = vmatpush.bf16.xpose.msra.mxu0 0
      %563 = vmatpush.bf16.xpose.msra.mxu0 0
      %564 = vmatpush.bf16.xpose.msra.mxu0 0
      %565 = vmatpush.bf16.xpose.msra.mxu0 0
      %566 = vmatpush.bf16.xpose.msra.mxu0 0
      %567 = vmatpush.bf16.xpose.msra.mxu0 0
      %568 = vmatpush.bf16.xpose.msra.mxu0 %v559
      %569 = vmatmul.bf16.gmra.mxu0 %v556
      %v570 = vpop.f32.mrf.mxu0
      %v571 = vadd.f32 0.0, %v570
      %v572 = vpop.f32.mrf.mxu0
      %573 = vdwg.mxu0
      %s574 = scalar_lea.vmem [#allocation2], 24
      %v575 = vld [vmem:[%s574] sm:$0xff]
      %v576 = vsel %vm285, %v571, -inf
      %577 = vmax.xlane.f32.xlu0 %v576
      %v578 = vpop.xlane.xlu0 %577
      %v579 = vmax.f32 %v575, %v578
      %v580 = vsub.f32 %v575, %v579
      %v581 = vmul.f32 %v580, 1.442695
      %v582 = vpow.pop %v581
      %584 = vset.pattern.permute.xlu0 0
      %585 = vperm.xlu0 %584, %v579
      %v586 = vpop.permute.xlu0 %585
      %v588 = vsub.f32 %v571, %v586
      %v589 = vmul.f32 %v588, 1.442695
      %v590 = vpow.pop %v589
      %s591 = scalar_lea.vmem [#allocation3], 24
      %v592 = vld [vmem:[%s591] sm:$0xff]
      %v593 = vmul.f32 %v582, %v592
      %v594 = vsel %vm285, %v590, 0.0
      %595 = vadd.xlane.f32.xlu0 %v594
      %v596 = vpop.xlane.xlu0 %595
      %v597 = vadd.f32 %v593, %v596
      %598 = vst.msk [vmem:[%s591] sm:$0xff] %vm327, %v597
      %v599 = vpack.c.bf16 %v590, %v590
      %v600 = vpack.c.bf16 %v546, %v546
      %602 = vrot.lane.b32.xlu0 %v600, 104
      %v603 = vpop.permute.xlu0 %602
      %v605 = vsel %vm285, %v599, 0
      %v608 = vsel %vm334, %v603, 0
      %610 = vmatpush.bf16.msra.mxu0 0
      %611 = vmatpush.bf16.msra.mxu0 0
      %612 = vmatpush.bf16.msra.mxu0 0
      %613 = vmatpush.bf16.msra.mxu0 0
      %614 = vmatpush.bf16.msra.mxu0 0
      %615 = vmatpush.bf16.msra.mxu0 0
      %616 = vmatpush.bf16.msra.mxu0 0
      %617 = vmatpush.bf16.msra.mxu0 %v608
      %618 = vmatmul.bf16.gmra.mxu0 %v605
      %v619 = vpop.f32.mrf.mxu0
      %v620 = vadd.f32 0.0, %v619
      %v621 = vpop.f32.mrf.mxu0
      %622 = vdwg.mxu0
      %s623 = scalar_lea.vmem [#allocation4], 24
      %v624 = vld [vmem:[%s623] sm:$0xff]
      %626 = vset.pattern.permute.xlu0 0
      %627 = vperm.xlu0 %626, %v582
      %v628 = vpop.permute.xlu0 %627
      %v630 = vmul.f32 %v628, %v624
      %v631 = vadd.f32 %v630, %v620
      %632 = vst.msk [vmem:[%s623] sm:$0xff] %vm285, %v631
      %633 = vst.msk [vmem:[%s574] sm:$0xff] %vm327, %v579
      // Predicated region
      $region37: #{transformer_forward.25} parent=31 // pred_check
        %p634 = pneg %p261
      $region38: #{transformer_forward.25} parent=31 // pred_check_branch
        %636 = sbr.rel (%p634) target = $region40
      $region39: #{transformer_forward.25} parent=31 // pred_region
        %v637 = vld [vmem:[#allocation3] sm:$0xff]
        %v638 = vrcp.pop %v637
        %v639 = vld [vmem:[#allocation4] sm:$0xff]
        %641 = vset.pattern.permute.xlu0 0
        %642 = vperm.xlu0 %641, %v638
        %v643 = vpop.permute.xlu0 %642
        %v645 = vmul.f32 %v639, %v643
        %646 = vst.msk [vmem:[%s259] sm:$0xff] %vm285, %v645
        %v647 = vld [vmem:[%s409] sm:$0xff]
        %v648 = vrcp.pop %v647
        %v649 = vld [vmem:[%s441] sm:$0xff]
        %651 = vset.pattern.permute.xlu0 0
        %652 = vperm.xlu0 %651, %v648
        %v653 = vpop.permute.xlu0 %652
        %v655 = vmul.f32 %v649, %v653
        %657 = vrot.lane.b32.xlu0 %v655, 8
        %v658 = vpop.permute.xlu0 %657
        %vm660 = vcmask 130112
        %661 = vst.msk [vmem:[%s259] sm:$0xff] %vm660, %v658
        %v662 = vld [vmem:[%s500] sm:$0xff]
        %v663 = vrcp.pop %v662
        %v664 = vld [vmem:[%s532] sm:$0xff]
        %666 = vset.pattern.permute.xlu0 0
        %667 = vperm.xlu0 %666, %v663
        %v668 = vpop.permute.xlu0 %667
        %v670 = vmul.f32 %v664, %v668
        %672 = vrot.lane.b32.xlu0 %v670, 16
        %v673 = vpop.permute.xlu0 %672
        %vm675 = vcmask 195712
        %676 = vst.msk [vmem:[%s259] sm:$0xff] %vm675, %v673
        %v677 = vld [vmem:[%s591] sm:$0xff]
        %v678 = vrcp.pop %v677
        %v679 = vld [vmem:[%s623] sm:$0xff]
        %681 = vset.pattern.permute.xlu0 0
        %682 = vperm.xlu0 %681, %v678
        %v683 = vpop.permute.xlu0 %682
        %v685 = vmul.f32 %v679, %v683
        %687 = vrot.lane.b32.xlu0 %v685, 24
        %v688 = vpop.permute.xlu0 %687
        %vm690 = vcmask 261312
        %691 = vst.msk [vmem:[%s259] sm:$0xff] %vm690, %v688
      $region40: #{transformer_forward.25} parent=31 // pred_fallthru
        _
      %p692 = scmp.lt.s32.totalorder %s19, 1
      %s693 = scalar_select %p692, %s19, 1
      %p694 = scmp.lt.s32.totalorder %s20, 0
      %s695 = scalar_select %p694, %s20, 0
      %s696 = sadd.s32 %s695, %s693
      %s697 = smul.addr %s696, 8
      %s698 = scalar_lea.vmem %s3, %s697
      // Predicated region
      $region41: #{transformer_forward.25} parent=31 // pred_check
        %p699 = pneg %p137
      $region42: #{transformer_forward.25} parent=31 // pred_check_branch
        %701 = sbr.rel (%p699) target = $region44
      $region43: #{transformer_forward.25} parent=31 // pred_region
        _
      $region44: #{transformer_forward.25} parent=31 // pred_fallthru
        _
    $region32: #{transformer_forward.25} parent=5 // pred_fallthru
      _
    %p702 = scmp.le.s32.totalorder 2, %s9
    // Predicated region
    $region45: #{transformer_forward.25} parent=5 // pred_check
      %p703 = pneg %p702
    $region46: #{transformer_forward.25} parent=5 // pred_check_branch
      %705 = sbr.rel (%p703) target = $region48
    $region47: #{transformer_forward.25} parent=5 // pred_region
      %s706 = ssub.s32 %s9, 2
      // Predicated region
      $region49: #{transformer_forward.25} parent=47 // pred_check
        %p707 = pneg %p143
      $region50: #{transformer_forward.25} parent=47 // pred_check_branch
        %709 = sbr.rel (%p707) target = $region52
      $region51: #{transformer_forward.25} parent=47 // pred_region
        %p710 = scmp.lt.s32.totalorder %s22, 1
        %s711 = scalar_select %p710, %s22, 1
        %p712 = scmp.lt.s32.totalorder %s23, 0
        %s713 = scalar_select %p712, %s23, 0
        %s714 = sadd.s32 %s713, %s711
        %s715 = smul.addr %s714, 8
        %s716 = scalar_lea.vmem %s3, %s715
      $region52: #{transformer_forward.25} parent=47 // pred_fallthru
        _
    $region48: #{transformer_forward.25} parent=5 // pred_fallthru
      _
  $region6: #{transformer_forward.25} parent=0 // loop_footer
    %s13 = sadd.s32 1, %s9
  $region7: #{transformer_forward.25} parent=0 // loop_footer_branch
    %8 = sbr.rel target = $region3
  $region8: #{transformer_forward.25} parent=0 // loop_exit
    _

// kernel: transformer_forward.47
$region0: #{transformer_forward.47}
  #allocation0 [shape = 'u32[]', space=smem, size = 0x4, offset = 0x4, fixed_abs, tag = 'smem constant byte address 0x4 - core index']
  #allocation1 [shape = 'u32[72,128]{1,0:T(1,128)}', space=vmem, size = 0x9000, scoped, tag = 'internal scratch']
  #allocation2 [shape = 'f32[16,32]{1,0:T(8,128)}', space=vmem, size = 0x2000, scoped, tag = 'scratch operand']
  %s0 = inlined_call_operand.vmem [shape: f32[16,32], index: 0, kind: input, shape index: {}]
  %s1 = inlined_call_operand.vmem [shape: bf16[32,64], index: 1, kind: input, shape index: {}]
  %s2 = inlined_call_operand.vmem [shape: f32[1,64], index: 2, kind: input, shape index: {}]
  %s3 = inlined_call_operand.vmem [shape: bf16[64,32], index: 3, kind: input, shape index: {}]
  %s4 = inlined_call_operand.vmem [shape: f32[1,32], index: 4, kind: input, shape index: {}]
  %s5 = inlined_call_operand.vmem [shape: f32[1,32], index: 5, kind: input, shape index: {}]
  %s6 = inlined_call_operand.vmem [shape: f32[1,32], index: 6, kind: input, shape index: {}]
  %s7 = inlined_call_operand.hbm [shape: f32[16,32], index: 7, kind: output, shape index: {}]
  %s8 = sld [smem:[#allocation0]]
  $region46: #{transformer_forward.47} parent=0
    _
  %s10 = ssub.s32 1, %s8
  %s11 = scalar_select 0, %s10, %s8
  $region1: #{transformer_forward.47} parent=0
    #allocation3 [shape = 'u8[8192]{0}', space=vmem, size = 0x2000, scoped, tag = 'output window, operand 0, single buffered']
    #allocation4 [shape = 's32[1]{0}', space=sflag, size = 0x4, scoped, tag = 'scoped memory for transformer_forward.47']
    %12 = vsyncpa [#allocation4], 0
    // Predicated region
    $region2: #{transformer_forward.47} parent=1 // pred_check
      _
    $region3: #{transformer_forward.47} parent=1 // pred_check_branch
      %14 = sbr.rel (0) target = $region5
    $region4: #{transformer_forward.47} parent=1 // pred_region
      _
    $region5: #{transformer_forward.47} parent=1 // pred_fallthru
      _
    // Predicated region
    $region6: #{transformer_forward.47} parent=1 // pred_check
      _
    $region7: #{transformer_forward.47} parent=1 // pred_check_branch
      %16 = sbr.rel (0) target = $region9
    $region8: #{transformer_forward.47} parent=1 // pred_region
      _
    $region9: #{transformer_forward.47} parent=1 // pred_fallthru
      _
    // Predicated region
    $region10: #{transformer_forward.47} parent=1 // pred_check
      _
    $region11: #{transformer_forward.47} parent=1 // pred_check_branch
      %18 = sbr.rel (0) target = $region13
    $region12: #{transformer_forward.47} parent=1 // pred_region
      _
    $region13: #{transformer_forward.47} parent=1 // pred_fallthru
      _
    // Predicated region
    $region14: #{transformer_forward.47} parent=1 // pred_check
      _
    $region15: #{transformer_forward.47} parent=1 // pred_check_branch
      %20 = sbr.rel (0) target = $region17
    $region16: #{transformer_forward.47} parent=1 // pred_region
      _
    $region17: #{transformer_forward.47} parent=1 // pred_fallthru
      _
    // Predicated region
    $region18: #{transformer_forward.47} parent=1 // pred_check
      _
    $region19: #{transformer_forward.47} parent=1 // pred_check_branch
      %22 = sbr.rel (0) target = $region21
    $region20: #{transformer_forward.47} parent=1 // pred_region
      _
    $region21: #{transformer_forward.47} parent=1 // pred_fallthru
      _
    // Predicated region
    $region22: #{transformer_forward.47} parent=1 // pred_check
      _
    $region23: #{transformer_forward.47} parent=1 // pred_check_branch
      %24 = sbr.rel (0) target = $region25
    $region24: #{transformer_forward.47} parent=1 // pred_region
      _
    $region25: #{transformer_forward.47} parent=1 // pred_fallthru
      _
    // Predicated region
    $region26: #{transformer_forward.47} parent=1 // pred_check
      _
    $region27: #{transformer_forward.47} parent=1 // pred_check_branch
      %26 = sbr.rel (0) target = $region29
    $region28: #{transformer_forward.47} parent=1 // pred_region
      _
    $region29: #{transformer_forward.47} parent=1 // pred_fallthru
      _
    %p28 = scmp.eq.s32.totalorder 0, 0
    // Predicated region
    $region30: #{transformer_forward.47} parent=1 // pred_check
      %p29 = pneg %p28
    $region31: #{transformer_forward.47} parent=1 // pred_check_branch
      %31 = sbr.rel (%p29) target = $region33
    $region32: #{transformer_forward.47} parent=1 // pred_region
      %vm32 = vcmask 261120
      %33 = vst.msk [vmem:[#allocation2] sm:$0xff] %vm32, 0.0
      %34 = vst.msk [vmem:[#allocation2 + $0x8] sm:$0xff] %vm32, 0.0
    $region33: #{transformer_forward.47} parent=1 // pred_fallthru
      _
    %v35 = vld [vmem:[%s0] sm:$0xff]
    %v36 = vld [vmem:[%s0 + $0x8] sm:$0xff]
    %v37 = vpack.c.bf16 %v36, %v35
    %v38 = vld [vmem:[%s1] sm:$0xf]
    %v39 = vld [vmem:[%s1 + $0x4] sm:$0xf]
    %v40 = vld [vmem:[%s1 + $0x8] sm:$0xf]
    %v41 = vld [vmem:[%s1 + $0xc] sm:$0xf]
    %v42 = vld [vmem:[%s2] sm:$0x1]
    %v44 = vperm.slane %v42, 0
    %v50 = vunpack.c.l.b16 %v38
    %v51 = vunpack.c.l.b16 %v39
    %v52 = vunpack.c.l.b16 %v40
    %v53 = vunpack.c.l.b16 %v41
    %v54 = vpack.c.b16 %v51, %v50
    %v55 = vpack.c.b16 %v53, %v52
    %vm58 = vcmask 261120
    %v60 = vsel %vm58, %v37, 0
    %62 = vmatpush.bf16.msra.mxu0 0
    %63 = vmatpush.bf16.msra.mxu0 0
    %64 = vmatpush.bf16.msra.mxu0 0
    %65 = vmatpush.bf16.msra.mxu0 0
    %66 = vmatpush.bf16.msra.mxu0 0
    %67 = vmatpush.bf16.msra.mxu0 0
    %68 = vmatpush.bf16.msra.mxu0 %v55
    %69 = vmatpush.bf16.msra.mxu0 %v54
    %70 = vmatmul.bf16.gmra.mxu0 %v60
    %v71 = vpop.f32.mrf.mxu0
    %v72 = vadd.f32 %v44, %v71
    %v73 = vpop.f32.mrf.mxu0
    %v74 = vadd.f32 %v44, %v73
    %75 = vdwg.mxu0
    %v76 = vmax.f32 %v72, 0.0
    %v77 = vmax.f32 %v74, 0.0
    %v78 = vld [vmem:[#allocation2] sm:$0xff]
    %v79 = vld [vmem:[#allocation2 + $0x8] sm:$0xff]
    %v80 = vpack.c.bf16 %v77, %v76
    %v81 = vld [vmem:[%s3] sm:$0xf]
    %v82 = vld [vmem:[%s3 + $0x4] sm:$0xf]
    %v83 = vld [vmem:[%s3 + $0x8] sm:$0xf]
    %v84 = vld [vmem:[%s3 + $0xc] sm:$0xf]
    %v85 = vld [vmem:[%s3 + $0x10] sm:$0xf]
    %v86 = vld [vmem:[%s3 + $0x14] sm:$0xf]
    %v87 = vld [vmem:[%s3 + $0x18] sm:$0xf]
    %v88 = vld [vmem:[%s3 + $0x1c] sm:$0xf]
    %v97 = vunpack.c.l.b16 %v81
    %v98 = vunpack.c.l.b16 %v82
    %v99 = vunpack.c.l.b16 %v83
    %v100 = vunpack.c.l.b16 %v84
    %v101 = vunpack.c.l.b16 %v85
    %v102 = vunpack.c.l.b16 %v86
    %v103 = vunpack.c.l.b16 %v87
    %v104 = vunpack.c.l.b16 %v88
    %v105 = vpack.c.b16 %v98, %v97
    %v106 = vpack.c.b16 %v100, %v99
    %v107 = vpack.c.b16 %v102, %v101
    %v108 = vpack.c.b16 %v104, %v103
    %vm113 = vcmask 523264
    %v115 = vsel %vm113, %v80, 0
    %117 = vmatpush.bf16.msra.mxu0 0
    %118 = vmatpush.bf16.msra.mxu0 0
    %119 = vmatpush.bf16.msra.mxu0 0
    %120 = vmatpush.bf16.msra.mxu0 0
    %121 = vmatpush.bf16.msra.mxu0 %v108
    %122 = vmatpush.bf16.msra.mxu0 %v107
    %123 = vmatpush.bf16.msra.mxu0 %v106
    %124 = vmatpush.bf16.msra.mxu0 %v105
    %125 = vmatmul.bf16.gmra.mxu0 %v115
    %v126 = vpop.f32.mrf.mxu0
    %v127 = vadd.f32 0.0, %v126
    %v128 = vpop.f32.mrf.mxu0
    %v129 = vadd.f32 0.0, %v128
    %130 = vdwg.mxu0
    %v131 = vadd.f32 %v78, %v127
    %v132 = vadd.f32 %v79, %v129
    %133 = vst.msk [vmem:[#allocation2] sm:$0xff] %vm58, %v131
    %134 = vst.msk [vmem:[#allocation2 + $0x8] sm:$0xff] %vm58, %v132
    // Predicated region
    $region34: #{transformer_forward.47} parent=1 // pred_check
      %p135 = pneg %p28
    $region35: #{transformer_forward.47} parent=1 // pred_check_branch
      %137 = sbr.rel (%p135) target = $region37
    $region36: #{transformer_forward.47} parent=1 // pred_region
      %v138 = vld [vmem:[#allocation2] sm:$0xff]
      %v139 = vld [vmem:[#allocation2 + $0x8] sm:$0xff]
      %v140 = vld [vmem:[%s4] sm:$0x1]
      %v142 = vperm.slane %v140, 0
      %v144 = vadd.f32 %v138, %v142
      %v145 = vadd.f32 %v139, %v142
      %v146 = vld [vmem:[%s0] sm:$0xff]
      %v147 = vld [vmem:[%s0 + $0x8] sm:$0xff]
      %v148 = vadd.f32 %v144, %v146
      %v149 = vadd.f32 %v145, %v147
      %v150 = vsel %vm58, %v148, 0.0
      %151 = vadd.xlane.f32.xlu0 %v150
      %v152 = vpop.xlane.xlu0 %151
      %v153 = vsel %vm58, %v149, 0.0
      %154 = vadd.xlane.f32.xlu0 %v153
      %v155 = vpop.xlane.xlu0 %154
      %v156 = vrcp.pop 32.0
      %v157 = vmul.f32 32.0, %v156
      %v158 = vsub.f32 1.0, %v157
      %v159 = vmul.f32 %v156, %v158
      %v160 = vadd.f32 %v156, %v159
      %vm161 = vweird.f32 %v156
      %v162 = vsel %vm161, %v156, %v160
      %v163 = vmul.f32 %v152, %v162
      %v164 = vmul.f32 %v155, %v162
      %v165 = vsub.f32 %v148, %v163
      %v166 = vsub.f32 %v149, %v164
      %v167 = vmul.f32 %v165, %v165
      %v168 = vmul.f32 %v166, %v166
      %v169 = vsel %vm58, %v167, 0.0
      %170 = vadd.xlane.f32.xlu0 %v169
      %v171 = vpop.xlane.xlu0 %170
      %v172 = vsel %vm58, %v168, 0.0
      %173 = vadd.xlane.f32.xlu0 %v172
      %v174 = vpop.xlane.xlu0 %173
      %v175 = vmul.f32 %v171, %v162
      %v176 = vmul.f32 %v174, %v162
      %v177 = vadd.f32 %v175, 1e-05
      %v178 = vadd.f32 %v176, 1e-05
      %v179 = vrsqrt.pop %v177
      %v180 = vmul.f32 %v179, %v177
      %v181 = vmul.f32 %v180, %v179
      %v182 = vmul.f32 0.5, %v181
      %v183 = vsub.f32 1.5, %v182
      %v184 = vmul.f32 %v179, %v183
      %vm185 = vweird.f32 %v177
      %vm186 = vweird.f32 %v179
      %vm187 = vmor %vm185, %vm186
      %v188 = vsel %vm187, %v179, %v184
      %v189 = vrsqrt.pop %v178
      %v190 = vmul.f32 %v189, %v178
      %v191 = vmul.f32 %v190, %v189
      %v192 = vmul.f32 0.5, %v191
      %v193 = vsub.f32 1.5, %v192
      %v194 = vmul.f32 %v189, %v193
      %vm195 = vweird.f32 %v178
      %vm196 = vweird.f32 %v189
      %vm197 = vmor %vm195, %vm196
      %v198 = vsel %vm197, %v189, %v194
      %v199 = vmul.f32 %v165, %v188
      %v200 = vmul.f32 %v166, %v198
      %v201 = vld [vmem:[%s5] sm:$0x1]
      %v203 = vperm.slane %v201, 0
      %v205 = vmul.f32 %v199, %v203
      %v206 = vmul.f32 %v200, %v203
      %v207 = vld [vmem:[%s6] sm:$0x1]
      %v209 = vperm.slane %v207, 0
      %v211 = vadd.f32 %v205, %v209
      %v212 = vadd.f32 %v206, %v209
      %213 = vst.msk [vmem:[#allocation3] sm:$0xff] %vm58, %v211
      %214 = vst.msk [vmem:[#allocation3 + $0x8] sm:$0xff] %vm58, %v212
    $region37: #{transformer_forward.47} parent=1 // pred_fallthru
      _
    // Predicated region
    $region38: #{transformer_forward.47} parent=1 // pred_check
      _
    $region39: #{transformer_forward.47} parent=1 // pred_check_branch
      %216 = sbr.rel (0) target = $region41
    $region40: #{transformer_forward.47} parent=1 // pred_region
      %218 = vsyncadd [#allocation4], 0
      %s219 = sshll.u32 [#allocation3], 4
      %s220 = int_to_ptr.vmem [resolvable:$true] %s219
      %s221 = sshll.u32 %s7, 4
      %s222 = int_to_ptr.hbm [resolvable:$true] %s221
      %227 = dma.vmem_to_hbm [thread:$0]  %s220, 256, %s222, [#allocation4], 128, 128, 8
    $region41: #{transformer_forward.47} parent=1 // pred_fallthru
      _
    // Predicated region
    $region42: #{transformer_forward.47} parent=1 // pred_check
      _
    $region43: #{transformer_forward.47} parent=1 // pred_check_branch
      %229 = sbr.rel (0) target = $region45
    $region44: #{transformer_forward.47} parent=1 // pred_region
      %231 = dma.done [#allocation4], 256
    $region45: #{transformer_forward.47} parent=1 // pred_fallthru
      _
    %232 = vsyncpa [#allocation4], 1

</llo_original>
